<compile_context>
chip_gen: v7x
topology: tpu7x:2x2x1
jax: 0.10.0
libtpu: 0.0.40
codegen_flags: <defaults>
</compile_context>

<pallas_src>
import functools

import jax
import jax.numpy as jnp
from jax.experimental import pallas as pl
from jax.experimental.pallas import tpu as pltpu


# ---------------------------------------------------------------------------
# Pallas kernels: W(Cout,K) @ P(K,TM) + bias, optional ReLU / residual add
# ---------------------------------------------------------------------------
def _mm_kernel(w_ref, x_ref, b_ref, o_ref, *, relu):
    acc = jnp.dot(w_ref[...], x_ref[...], preferred_element_type=jnp.float32)
    acc = acc + b_ref[...]                 # (Cout_p, 1) broadcasts over lanes
    if relu:
        acc = jnp.maximum(acc, 0.0)
    o_ref[...] = acc.astype(o_ref.dtype)


def _mm_res_kernel(w_ref, x_ref, b_ref, r_ref, o_ref):
    acc = jnp.dot(w_ref[...], x_ref[...], preferred_element_type=jnp.float32)
    acc = acc + b_ref[...] + r_ref[...]
    o_ref[...] = acc.astype(o_ref.dtype)


def _round_up(x, m):
    return pl.cdiv(x, m) * m


def _pick_tm(mp):
    """mp is a multiple of 128.  Prefer few, wide tiles but keep >=2 grid
    steps when possible so a v7x megacore can shard the 'parallel' axis."""
    for tm in (512, 256, 128):
        if mp % tm == 0 and mp // tm >= 2:
            return tm
    return min(mp, 512)


def pallas_matmul_bias(w, x, b, *, relu=False, residual=None):
    """w: (Co, K), x: (K, M), b: (Co,), residual: (Co, M) | None -> (Co, M).

    Output is lane-dense: M (large) on the 128-lane axis, Co on sublanes.
    """
    Co, K = w.shape
    K2, M = x.shape
    assert K == K2
    Cop = _round_up(Co, 8)
    Kp = _round_up(K, 8)
    Mp = _round_up(M, 128)
    tm = _pick_tm(Mp)
    Mp = _round_up(Mp, tm)

    w_p = jnp.pad(w, ((0, Cop - Co), (0, Kp - K)))
    x_p = jnp.pad(x, ((0, Kp - K), (0, Mp - M)))
    b_p = jnp.pad(b, (0, Cop - Co)).reshape(Cop, 1)

    args = [w_p, x_p, b_p]
    in_specs = [
        pl.BlockSpec((Cop, Kp), lambda i: (0, 0)),   # weight, VMEM-resident
        pl.BlockSpec((Kp, tm), lambda i: (0, i)),    # patch-matrix tile
        pl.BlockSpec((Cop, 1), lambda i: (0, 0)),    # bias column
    ]
    if residual is not None:
        r_p = jnp.pad(residual, ((0, Cop - Co), (0, Mp - M)))
        args.append(r_p)
        in_specs.append(pl.BlockSpec((Cop, tm), lambda i: (0, i)))
        kernel = _mm_res_kernel
    else:
        kernel = functools.partial(_mm_kernel, relu=relu)

    out = pl.pallas_call(
        kernel,
        out_shape=jax.ShapeDtypeStruct((Cop, Mp), jnp.float32),
        grid=(Mp // tm,),
        in_specs=in_specs,
        out_specs=pl.BlockSpec((Cop, tm), lambda i: (0, i)),
        compiler_params=pltpu.CompilerParams(
            dimension_semantics=("parallel",)),
    )(*args)
    return out[:Co, :M]


# ---------------------------------------------------------------------------
# Conv glue in CNHW layout (slice/stack/reshape only; matmul in Pallas)
# ---------------------------------------------------------------------------
def _im2col_cnhw(x, kH, kW, stride, pad_lo, pad_hi):
    """x: (C, N, H, W) -> (C*kH*kW, N*Ho*Wo), K ordered (c, ki, kj)."""
    C, N, H, W = x.shape
    if pad_lo or pad_hi:
        x = jnp.pad(x, ((0, 0), (0, 0), (pad_lo, pad_hi), (pad_lo, pad_hi)))
    Hp, Wp = x.shape[2], x.shape[3]
    Ho = (Hp - kH) // stride + 1
    Wo = (Wp - kW) // stride + 1
    cols = []
    for di in range(kH):
        for dj in range(kW):
            cols.append(x[:, :,
                          di:di + stride * (Ho - 1) + 1:stride,
                          dj:dj + stride * (Wo - 1) + 1:stride])
    pat = jnp.stack(cols, axis=1)                 # (C, kH*kW, N, Ho, Wo)
    return pat.reshape(C * kH * kW, N * Ho * Wo), Ho, Wo


def conv2d_cnhw(x, w, b, *, stride=1, padding=0, relu=False, residual=None):
    """x: (Cin, N, H, W), w: [Cout, Cin, kH, kW] (torch), b: [Cout]."""
    N = x.shape[1]
    Cout, Cin, kH, kW = w.shape
    P, Ho, Wo = _im2col_cnhw(x, kH, kW, stride, padding, padding)
    Wm = w.reshape(Cout, Cin * kH * kW)           # rows Cout, cols (c, ki, kj)
    res = None
    if residual is not None:
        res = residual.reshape(Cout, N * Ho * Wo)
    Y = pallas_matmul_bias(Wm, P, b, relu=relu, residual=res)
    return Y.reshape(Cout, N, Ho, Wo)


def conv_transpose2d_up_cnhw(x, w, b):
    """PyTorch ConvTranspose2d(k=3, s=2, p=1, op=1) via 2x2 sub-pixel
    decomposition folded into one lane-dense matmul.
    x: (Cin, N, H, W), w: [Cin, Cout, 3, 3], b: [Cout] -> (Cout, N, 2H, 2W).

    y[o, 2i+a, 2j+b] = bias[o]
        + sum_{c, di<=a, dj<=b} x[c, i+di, j+dj] * w[c, o, 1+a-2di, 1+b-2dj]
    """
    Cin, N, H, W = x.shape
    Cout = w.shape[1]
    # 2x2 patches of x padded by 1 on the high side of H and W.
    P, Ho, Wo = _im2col_cnhw(x, 2, 2, 1, 0, 1)    # Ho=H, Wo=W
    # Combined weight: row (a*2+b)*Cout + o, col c*4 + di*2 + dj.
    Wc = jnp.zeros((4 * Cout, 4 * Cin), w.dtype)
    for a in range(2):
        for bb in range(2):
            r0 = (a * 2 + bb) * Cout
            for di in range(a + 1):
                for dj in range(bb + 1):
                    ki, kj = 1 + a - 2 * di, 1 + bb - 2 * dj
                    Wc = Wc.at[r0:r0 + Cout, di * 2 + dj::4].set(
                        w[:, :, ki, kj].T)
    bc = jnp.tile(b, 4)
    Y = pallas_matmul_bias(Wc, P, bc)             # (4*Cout, N*H*W)
    Y = Y.reshape(2, 2, Cout, N, H, W)            # (a, b, o, n, i, j)
    Y = Y.transpose(2, 3, 4, 0, 5, 1)             # (o, n, i, a, j, b)
    return Y.reshape(Cout, N, 2 * H, 2 * W)


# ---------------------------------------------------------------------------
# WideModel block:
#   conv1x1(2->F) -> conv5x5(F->2F, s=2) -> RDB(2F, F, 3)
#   -> ConvTranspose2d(2F->F, k=3, s=2, p=1, op=1) -> conv5x5(F->1)
# ---------------------------------------------------------------------------
@jax.jit
def block_forward(p, x_nchw):
    x = jnp.transpose(x_nchw, (1, 0, 2, 3))                        # -> CNHW
    x = conv2d_cnhw(x, p['c1_w'], p['c1_b'])
    x = conv2d_cnhw(x, p['c2_w'], p['c2_b'], stride=2, padding=2)
    # RDB: 3 dense conv3x3+ReLU layers with channel concat, 1x1 fuse, residual.
    r = x
    for j in range(3):
        y = conv2d_cnhw(r, p[f'rdb{j}_w'], p[f'rdb{j}_b'],
                        padding=1, relu=True)
        r = jnp.concatenate([r, y], axis=0)
    x = conv2d_cnhw(r, p['rdb_fuse_w'], p['rdb_fuse_b'], residual=x)
    x = conv_transpose2d_up_cnhw(x, p['up_w'], p['up_b'])
    x = conv2d_cnhw(x, p['c5_w'], p['c5_b'], padding=2)
    return jnp.transpose(x, (1, 0, 2, 3))                          # -> NCHW


def wide_model_forward(params, input_data, deg_map, *, frames, neighbors):
    """input_data: [B, frames, 1, H, W], deg_map: [B, 1, H, W] -> list [B,1,H,W]."""
    B = input_data.shape[0]
    centers = list(range(neighbors, frames - neighbors))
    # Batch the central frames together: one pass instead of len(centers).
    xs = [jnp.concatenate([input_data[:, i], deg_map], axis=1) for i in centers]
    x_all = jnp.concatenate(xs, axis=0)                  # (len*B, 2, H, W)
    y_all = block_forward(params, x_all)                 # (len*B, 1, H, W)
    return [y_all[k * B:(k + 1) * B] for k in range(len(centers))]


# ---------------------------------------------------------------------------
# Pure-JAX (lax) reference of the same forward pass, for self-checking
# ---------------------------------------------------------------------------
def _ref_conv(x, w, b, stride=1, padding=0):
    y = jax.lax.conv_general_dilated(
        x, w, (stride, stride), [(padding, padding)] * 2,
        dimension_numbers=('NCHW', 'OIHW', 'NCHW'),
        precision=jax.lax.Precision.HIGHEST)
    return y + b.reshape(1, -1, 1, 1)


def _ref_convT(x, w, b, stride=2, padding=1, output_padding=1):
    k = w.shape[2]
    w_eq = jnp.flip(w, axis=(2, 3)).transpose(1, 0, 2, 3)
    lo = k - 1 - padding
    hi = k - 1 - padding + output_padding
    y = jax.lax.conv_general_dilated(
        x, w_eq, (1, 1), [(lo, hi), (lo, hi)], lhs_dilation=(stride, stride),
        dimension_numbers=('NCHW', 'OIHW', 'NCHW'),
        precision=jax.lax.Precision.HIGHEST)
    return y + b.reshape(1, -1, 1, 1)


def reference_forward(p, input_data, deg_map, frames, neighbors):
    outs = []
    for i in range(neighbors, frames - neighbors):
        x = jnp.concatenate([input_data[:, i], deg_map], axis=1)
        x = _ref_conv(x, p['c1_w'], p['c1_b'])
        x = _ref_conv(x, p['c2_w'], p['c2_b'], stride=2, padding=2)
        r = x
        for j in range(3):
            y = jax.nn.relu(
                _ref_conv(r, p[f'rdb{j}_w'], p[f'rdb{j}_b'], padding=1))
            r = jnp.concatenate([r, y], axis=1)
        x = x + _ref_conv(r, p['rdb_fuse_w'], p['rdb_fuse_b'])
        x = _ref_convT(x, p['up_w'], p['up_b'])
        x = _ref_conv(x, p['c5_w'], p['c5_b'], padding=2)
        outs.append(x)
    return outs


# ---------------------------------------------------------------------------
# Deterministic parameter init (PyTorch-like uniform bounds; synthetic values)
# ---------------------------------------------------------------------------
def _conv_init(key, cout, cin, k):
    wk, bk = jax.random.split(key)
    bound = 1.0 / (cin * k * k) ** 0.5
    w = jax.random.uniform(wk, (cout, cin, k, k), jnp.float32, -bound, bound)
    b = jax.random.uniform(bk, (cout,), jnp.float32, -bound, bound)
    return w, b


def init_params(key, n_feats):
    F = n_feats
    keys = jax.random.split(key, 8)
    p = {}
    p['c1_w'], p['c1_b'] = _conv_init(keys[0], F, 2, 1)
    p['c2_w'], p['c2_b'] = _conv_init(keys[1], 2 * F, F, 5)
    p['rdb0_w'], p['rdb0_b'] = _conv_init(keys[2], F, 2 * F, 3)
    p['rdb1_w'], p['rdb1_b'] = _conv_init(keys[3], F, 3 * F, 3)
    p['rdb2_w'], p['rdb2_b'] = _conv_init(keys[4], F, 4 * F, 3)
    p['rdb_fuse_w'], p['rdb_fuse_b'] = _conv_init(keys[5], 2 * F, 5 * F, 1)
    wk, bk = jax.random.split(keys[6])
    bound = 1.0 / (2 * F * 3 * 3) ** 0.5
    p['up_w'] = jax.random.uniform(wk, (2 * F, F, 3, 3), jnp.float32, -bound, bound)
    p['up_b'] = jax.random.uniform(bk, (F,), jnp.float32, -bound, bound)
    p['c5_w'], p['c5_b'] = _conv_init(keys[7], 1, F, 5)
    return p


if __name__ == "__main__":
    # para: frame_length=5, neighboring_frames=1, n_feats=8
    B, FRAMES, NEIGHBORS, N_FEATS, H, W = 2, 5, 1, 8, 16, 16

    key = jax.random.PRNGKey(0)
    kp, kx, kd = jax.random.split(key, 3)
    params = init_params(kp, N_FEATS)

    input_data = jax.random.normal(kx, (B, FRAMES, 1, H, W), jnp.float32)
    deg_map = jax.random.normal(kd, (B, 1, H, W), jnp.float32)

    outs = wide_model_forward(params, input_data, deg_map,
                              frames=FRAMES, neighbors=NEIGHBORS)
    outs = [jax.block_until_ready(o) for o in outs]

    assert len(outs) == FRAMES - 2 * NEIGHBORS
    refs = reference_forward(params, input_data, deg_map, FRAMES, NEIGHBORS)
    for o, r in zip(outs, refs):
        assert o.shape == (B, 1, H, W), o.shape
        assert jnp.all(jnp.isfinite(o))
        err = float(jnp.max(jnp.abs(o - r)))
        assert jnp.allclose(o, r, atol=2e-3, rtol=2e-3), f"max abs err {err}"
    print("KERNEL_OK")
</pallas_src>

<mosaic_0001>
module attributes {stable_mosaic.version = 11 : i64} {
  func.func @_mm_kernel(%arg0: i32, %arg1: memref<8x8xf32, #tpu.memory_space<vmem>>, %arg2: memref<8x512xf32, #tpu.memory_space<vmem>>, %arg3: memref<8x1xf32, #tpu.memory_space<vmem>>, %arg4: memref<8x512xf32, #tpu.memory_space<vmem>>) attributes {dimension_semantics = [#tpu.dimension_semantics<parallel>], iteration_bounds = array<i64: 3>, scalar_prefetch = 0 : i64, scratch_operands = 0 : i64, tpu.core_type = #tpu.core_type<tc>, window_params = [{pipeline_mode = #tpu.pipeline_mode<synchronous>, transform_indices = @transform_0, window_bounds = array<i64: 8, 8>}, {transform_indices = @transform_1, window_bounds = array<i64: 8, 512>}, {pipeline_mode = #tpu.pipeline_mode<synchronous>, transform_indices = @transform_2, window_bounds = array<i64: 8, 1>}, {transform_indices = @transform_3, window_bounds = array<i64: 8, 512>}]} {
    %c0 = arith.constant 0 : index
    %c0_0 = arith.constant 0 : index
    %0 = vector.load %arg1[%c0, %c0_0] : memref<8x8xf32, #tpu.memory_space<vmem>>, vector<8x8xf32>
    %c0_1 = arith.constant 0 : index
    %c0_2 = arith.constant 0 : index
    %1 = vector.load %arg2[%c0_1, %c0_2] : memref<8x512xf32, #tpu.memory_space<vmem>>, vector<8x512xf32>
    %cst = arith.constant dense<0.000000e+00> : vector<8x512xf32>
    %2 = tpu.matmul %0, %1, %cst {dimension_numbers = #tpu.dot_dimension_numbers<[1], [0], [0], [1], [0, 0, 1, 1], [], []>} : vector<8x8xf32>, vector<8x512xf32>, vector<8x512xf32> -> vector<8x512xf32>
    %c0_3 = arith.constant 0 : index
    %c0_4 = arith.constant 0 : index
    %3 = vector.load %arg3[%c0_3, %c0_4] : memref<8x1xf32, #tpu.memory_space<vmem>>, vector<8x1xf32>
    %4 = vector.broadcast %3 : vector<8x1xf32> to vector<8x512xf32>
    %5 = arith.addf %2, %4 : vector<8x512xf32>
    %c0_5 = arith.constant 0 : index
    %c0_6 = arith.constant 0 : index
    %6 = vector.load %arg4[%c0_5, %c0_6] : memref<8x512xf32, #tpu.memory_space<vmem>>, vector<8x512xf32>
    tpu.vector_store %arg4[%c0_5, %c0_6], %5 {strides = array<i32>} : memref<8x512xf32, #tpu.memory_space<vmem>>, vector<8x512xf32>,
    return
  }
  func.func @transform_0(%arg0: i32) -> (i32, i32) {
    %c0_i32 = arith.constant 0 : i32
    %c0_i32_0 = arith.constant 0 : i32
    %c0_i32_1 = arith.constant 0 : i32
    return %c0_i32, %c0_i32_0 : i32, i32
  }
  func.func @transform_1(%arg0: i32) -> (i32, i32) {
    %c0_i32 = arith.constant 0 : i32
    %c0_i32_0 = arith.constant 0 : i32
    return %c0_i32, %arg0 : i32, i32
  }
  func.func @transform_2(%arg0: i32) -> (i32, i32) {
    %c0_i32 = arith.constant 0 : i32
    %c0_i32_0 = arith.constant 0 : i32
    %c0_i32_1 = arith.constant 0 : i32
    return %c0_i32, %c0_i32_0 : i32, i32
  }
  func.func @transform_3(%arg0: i32) -> (i32, i32) {
    %c0_i32 = arith.constant 0 : i32
    %c0_i32_0 = arith.constant 0 : i32
    return %c0_i32, %arg0 : i32, i32
  }
}

module attributes {stable_mosaic.version = 11 : i64} {
  func.func @_mm_kernel(%arg0: i32, %arg1: memref<16x200xf32, #tpu.memory_space<vmem>>, %arg2: memref<200x128xf32, #tpu.memory_space<vmem>>, %arg3: memref<16x1xf32, #tpu.memory_space<vmem>>, %arg4: memref<16x128xf32, #tpu.memory_space<vmem>>) attributes {dimension_semantics = [#tpu.dimension_semantics<parallel>], iteration_bounds = array<i64: 3>, scalar_prefetch = 0 : i64, scratch_operands = 0 : i64, tpu.core_type = #tpu.core_type<tc>, window_params = [{pipeline_mode = #tpu.pipeline_mode<synchronous>, transform_indices = @transform_0, window_bounds = array<i64: 16, 200>}, {transform_indices = @transform_1, window_bounds = array<i64: 200, 128>}, {pipeline_mode = #tpu.pipeline_mode<synchronous>, transform_indices = @transform_2, window_bounds = array<i64: 16, 1>}, {transform_indices = @transform_3, window_bounds = array<i64: 16, 128>}]} {
    %c0 = arith.constant 0 : index
    %c0_0 = arith.constant 0 : index
    %0 = vector.load %arg1[%c0, %c0_0] : memref<16x200xf32, #tpu.memory_space<vmem>>, vector<16x200xf32>
    %c0_1 = arith.constant 0 : index
    %c0_2 = arith.constant 0 : index
    %1 = vector.load %arg2[%c0_1, %c0_2] : memref<200x128xf32, #tpu.memory_space<vmem>>, vector<200x128xf32>
    %cst = arith.constant dense<0.000000e+00> : vector<16x128xf32>
    %2 = tpu.matmul %0, %1, %cst {dimension_numbers = #tpu.dot_dimension_numbers<[1], [0], [0], [1], [0, 0, 1, 1], [], []>} : vector<16x200xf32>, vector<200x128xf32>, vector<16x128xf32> -> vector<16x128xf32>
    %c0_3 = arith.constant 0 : index
    %c0_4 = arith.constant 0 : index
    %3 = vector.load %arg3[%c0_3, %c0_4] : memref<16x1xf32, #tpu.memory_space<vmem>>, vector<16x1xf32>
    %4 = vector.broadcast %3 : vector<16x1xf32> to vector<16x128xf32>
    %5 = arith.addf %2, %4 : vector<16x128xf32>
    %c0_5 = arith.constant 0 : index
    %c0_6 = arith.constant 0 : index
    %6 = vector.load %arg4[%c0_5, %c0_6] : memref<16x128xf32, #tpu.memory_space<vmem>>, vector<16x128xf32>
    tpu.vector_store %arg4[%c0_5, %c0_6], %5 {strides = array<i32>} : memref<16x128xf32, #tpu.memory_space<vmem>>, vector<16x128xf32>,
    return
  }
  func.func @transform_0(%arg0: i32) -> (i32, i32) {
    %c0_i32 = arith.constant 0 : i32
    %c0_i32_0 = arith.constant 0 : i32
    %c0_i32_1 = arith.constant 0 : i32
    return %c0_i32, %c0_i32_0 : i32, i32
  }
  func.func @transform_1(%arg0: i32) -> (i32, i32) {
    %c0_i32 = arith.constant 0 : i32
    %c0_i32_0 = arith.constant 0 : i32
    return %c0_i32, %arg0 : i32, i32
  }
  func.func @transform_2(%arg0: i32) -> (i32, i32) {
    %c0_i32 = arith.constant 0 : i32
    %c0_i32_0 = arith.constant 0 : i32
    %c0_i32_1 = arith.constant 0 : i32
    return %c0_i32, %c0_i32_0 : i32, i32
  }
  func.func @transform_3(%arg0: i32) -> (i32, i32) {
    %c0_i32 = arith.constant 0 : i32
    %c0_i32_0 = arith.constant 0 : i32
    return %c0_i32, %arg0 : i32, i32
  }
}

module attributes {stable_mosaic.version = 11 : i64} {
  func.func @_mm_kernel(%arg0: i32, %arg1: memref<8x144xf32, #tpu.memory_space<vmem>>, %arg2: memref<144x128xf32, #tpu.memory_space<vmem>>, %arg3: memref<8x1xf32, #tpu.memory_space<vmem>>, %arg4: memref<8x128xf32, #tpu.memory_space<vmem>>) attributes {dimension_semantics = [#tpu.dimension_semantics<parallel>], iteration_bounds = array<i64: 3>, scalar_prefetch = 0 : i64, scratch_operands = 0 : i64, tpu.core_type = #tpu.core_type<tc>, window_params = [{pipeline_mode = #tpu.pipeline_mode<synchronous>, transform_indices = @transform_0, window_bounds = array<i64: 8, 144>}, {transform_indices = @transform_1, window_bounds = array<i64: 144, 128>}, {pipeline_mode = #tpu.pipeline_mode<synchronous>, transform_indices = @transform_2, window_bounds = array<i64: 8, 1>}, {transform_indices = @transform_3, window_bounds = array<i64: 8, 128>}]} {
    %c0 = arith.constant 0 : index
    %c0_0 = arith.constant 0 : index
    %0 = vector.load %arg1[%c0, %c0_0] : memref<8x144xf32, #tpu.memory_space<vmem>>, vector<8x144xf32>
    %c0_1 = arith.constant 0 : index
    %c0_2 = arith.constant 0 : index
    %1 = vector.load %arg2[%c0_1, %c0_2] : memref<144x128xf32, #tpu.memory_space<vmem>>, vector<144x128xf32>
    %cst = arith.constant dense<0.000000e+00> : vector<8x128xf32>
    %2 = tpu.matmul %0, %1, %cst {dimension_numbers = #tpu.dot_dimension_numbers<[1], [0], [0], [1], [0, 0, 1, 1], [], []>} : vector<8x144xf32>, vector<144x128xf32>, vector<8x128xf32> -> vector<8x128xf32>
    %c0_3 = arith.constant 0 : index
    %c0_4 = arith.constant 0 : index
    %3 = vector.load %arg3[%c0_3, %c0_4] : memref<8x1xf32, #tpu.memory_space<vmem>>, vector<8x1xf32>
    %4 = vector.broadcast %3 : vector<8x1xf32> to vector<8x128xf32>
    %5 = arith.addf %2, %4 : vector<8x128xf32>
    %cst_5 = arith.constant 0.000000e+00 : f32
    %6 = vector.broadcast %cst_5 : f32 to vector<8x128xf32>
    %7 = arith.maximumf %5, %6 : vector<8x128xf32>
    %c0_6 = arith.constant 0 : index
    %c0_7 = arith.constant 0 : index
    %8 = vector.load %arg4[%c0_6, %c0_7] : memref<8x128xf32, #tpu.memory_space<vmem>>, vector<8x128xf32>
    tpu.vector_store %arg4[%c0_6, %c0_7], %7 {strides = array<i32>} : memref<8x128xf32, #tpu.memory_space<vmem>>, vector<8x128xf32>,
    return
  }
  func.func @transform_0(%arg0: i32) -> (i32, i32) {
    %c0_i32 = arith.constant 0 : i32
    %c0_i32_0 = arith.constant 0 : i32
    %c0_i32_1 = arith.constant 0 : i32
    return %c0_i32, %c0_i32_0 : i32, i32
  }
  func.func @transform_1(%arg0: i32) -> (i32, i32) {
    %c0_i32 = arith.constant 0 : i32
    %c0_i32_0 = arith.constant 0 : i32
    return %c0_i32, %arg0 : i32, i32
  }
  func.func @transform_2(%arg0: i32) -> (i32, i32) {
    %c0_i32 = arith.constant 0 : i32
    %c0_i32_0 = arith.constant 0 : i32
    %c0_i32_1 = arith.constant 0 : i32
    return %c0_i32, %c0_i32_0 : i32, i32
  }
  func.func @transform_3(%arg0: i32) -> (i32, i32) {
    %c0_i32 = arith.constant 0 : i32
    %c0_i32_0 = arith.constant 0 : i32
    return %c0_i32, %arg0 : i32, i32
  }
}

module attributes {stable_mosaic.version = 11 : i64} {
  func.func @_mm_kernel(%arg0: i32, %arg1: memref<8x216xf32, #tpu.memory_space<vmem>>, %arg2: memref<216x128xf32, #tpu.memory_space<vmem>>, %arg3: memref<8x1xf32, #tpu.memory_space<vmem>>, %arg4: memref<8x128xf32, #tpu.memory_space<vmem>>) attributes {dimension_semantics = [#tpu.dimension_semantics<parallel>], iteration_bounds = array<i64: 3>, scalar_prefetch = 0 : i64, scratch_operands = 0 : i64, tpu.core_type = #tpu.core_type<tc>, window_params = [{pipeline_mode = #tpu.pipeline_mode<synchronous>, transform_indices = @transform_0, window_bounds = array<i64: 8, 216>}, {transform_indices = @transform_1, window_bounds = array<i64: 216, 128>}, {pipeline_mode = #tpu.pipeline_mode<synchronous>, transform_indices = @transform_2, window_bounds = array<i64: 8, 1>}, {transform_indices = @transform_3, window_bounds = array<i64: 8, 128>}]} {
    %c0 = arith.constant 0 : index
    %c0_0 = arith.constant 0 : index
    %0 = vector.load %arg1[%c0, %c0_0] : memref<8x216xf32, #tpu.memory_space<vmem>>, vector<8x216xf32>
    %c0_1 = arith.constant 0 : index
    %c0_2 = arith.constant 0 : index
    %1 = vector.load %arg2[%c0_1, %c0_2] : memref<216x128xf32, #tpu.memory_space<vmem>>, vector<216x128xf32>
    %cst = arith.constant dense<0.000000e+00> : vector<8x128xf32>
    %2 = tpu.matmul %0, %1, %cst {dimension_numbers = #tpu.dot_dimension_numbers<[1], [0], [0], [1], [0, 0, 1, 1], [], []>} : vector<8x216xf32>, vector<216x128xf32>, vector<8x128xf32> -> vector<8x128xf32>
    %c0_3 = arith.constant 0 : index
    %c0_4 = arith.constant 0 : index
    %3 = vector.load %arg3[%c0_3, %c0_4] : memref<8x1xf32, #tpu.memory_space<vmem>>, vector<8x1xf32>
    %4 = vector.broadcast %3 : vector<8x1xf32> to vector<8x128xf32>
    %5 = arith.addf %2, %4 : vector<8x128xf32>
    %cst_5 = arith.constant 0.000000e+00 : f32
    %6 = vector.broadcast %cst_5 : f32 to vector<8x128xf32>
    %7 = arith.maximumf %5, %6 : vector<8x128xf32>
    %c0_6 = arith.constant 0 : index
    %c0_7 = arith.constant 0 : index
    %8 = vector.load %arg4[%c0_6, %c0_7] : memref<8x128xf32, #tpu.memory_space<vmem>>, vector<8x128xf32>
    tpu.vector_store %arg4[%c0_6, %c0_7], %7 {strides = array<i32>} : memref<8x128xf32, #tpu.memory_space<vmem>>, vector<8x128xf32>,
    return
  }
  func.func @transform_0(%arg0: i32) -> (i32, i32) {
    %c0_i32 = arith.constant 0 : i32
    %c0_i32_0 = arith.constant 0 : i32
    %c0_i32_1 = arith.constant 0 : i32
    return %c0_i32, %c0_i32_0 : i32, i32
  }
  func.func @transform_1(%arg0: i32) -> (i32, i32) {
    %c0_i32 = arith.constant 0 : i32
    %c0_i32_0 = arith.constant 0 : i32
    return %c0_i32, %arg0 : i32, i32
  }
  func.func @transform_2(%arg0: i32) -> (i32, i32) {
    %c0_i32 = arith.constant 0 : i32
    %c0_i32_0 = arith.constant 0 : i32
    %c0_i32_1 = arith.constant 0 : i32
    return %c0_i32, %c0_i32_0 : i32, i32
  }
  func.func @transform_3(%arg0: i32) -> (i32, i32) {
    %c0_i32 = arith.constant 0 : i32
    %c0_i32_0 = arith.constant 0 : i32
    return %c0_i32, %arg0 : i32, i32
  }
}

module attributes {stable_mosaic.version = 11 : i64} {
  func.func @_mm_kernel(%arg0: i32, %arg1: memref<8x288xf32, #tpu.memory_space<vmem>>, %arg2: memref<288x128xf32, #tpu.memory_space<vmem>>, %arg3: memref<8x1xf32, #tpu.memory_space<vmem>>, %arg4: memref<8x128xf32, #tpu.memory_space<vmem>>) attributes {dimension_semantics = [#tpu.dimension_semantics<parallel>], iteration_bounds = array<i64: 3>, scalar_prefetch = 0 : i64, scratch_operands = 0 : i64, tpu.core_type = #tpu.core_type<tc>, window_params = [{pipeline_mode = #tpu.pipeline_mode<synchronous>, transform_indices = @transform_0, window_bounds = array<i64: 8, 288>}, {transform_indices = @transform_1, window_bounds = array<i64: 288, 128>}, {pipeline_mode = #tpu.pipeline_mode<synchronous>, transform_indices = @transform_2, window_bounds = array<i64: 8, 1>}, {transform_indices = @transform_3, window_bounds = array<i64: 8, 128>}]} {
    %c0 = arith.constant 0 : index
    %c0_0 = arith.constant 0 : index
    %0 = vector.load %arg1[%c0, %c0_0] : memref<8x288xf32, #tpu.memory_space<vmem>>, vector<8x288xf32>
    %c0_1 = arith.constant 0 : index
    %c0_2 = arith.constant 0 : index
    %1 = vector.load %arg2[%c0_1, %c0_2] : memref<288x128xf32, #tpu.memory_space<vmem>>, vector<288x128xf32>
    %cst = arith.constant dense<0.000000e+00> : vector<8x128xf32>
    %2 = tpu.matmul %0, %1, %cst {dimension_numbers = #tpu.dot_dimension_numbers<[1], [0], [0], [1], [0, 0, 1, 1], [], []>} : vector<8x288xf32>, vector<288x128xf32>, vector<8x128xf32> -> vector<8x128xf32>
    %c0_3 = arith.constant 0 : index
    %c0_4 = arith.constant 0 : index
    %3 = vector.load %arg3[%c0_3, %c0_4] : memref<8x1xf32, #tpu.memory_space<vmem>>, vector<8x1xf32>
    %4 = vector.broadcast %3 : vector<8x1xf32> to vector<8x128xf32>
    %5 = arith.addf %2, %4 : vector<8x128xf32>
    %cst_5 = arith.constant 0.000000e+00 : f32
    %6 = vector.broadcast %cst_5 : f32 to vector<8x128xf32>
    %7 = arith.maximumf %5, %6 : vector<8x128xf32>
    %c0_6 = arith.constant 0 : index
    %c0_7 = arith.constant 0 : index
    %8 = vector.load %arg4[%c0_6, %c0_7] : memref<8x128xf32, #tpu.memory_space<vmem>>, vector<8x128xf32>
    tpu.vector_store %arg4[%c0_6, %c0_7], %7 {strides = array<i32>} : memref<8x128xf32, #tpu.memory_space<vmem>>, vector<8x128xf32>,
    return
  }
  func.func @transform_0(%arg0: i32) -> (i32, i32) {
    %c0_i32 = arith.constant 0 : i32
    %c0_i32_0 = arith.constant 0 : i32
    %c0_i32_1 = arith.constant 0 : i32
    return %c0_i32, %c0_i32_0 : i32, i32
  }
  func.func @transform_1(%arg0: i32) -> (i32, i32) {
    %c0_i32 = arith.constant 0 : i32
    %c0_i32_0 = arith.constant 0 : i32
    return %c0_i32, %arg0 : i32, i32
  }
  func.func @transform_2(%arg0: i32) -> (i32, i32) {
    %c0_i32 = arith.constant 0 : i32
    %c0_i32_0 = arith.constant 0 : i32
    %c0_i32_1 = arith.constant 0 : i32
    return %c0_i32, %c0_i32_0 : i32, i32
  }
  func.func @transform_3(%arg0: i32) -> (i32, i32) {
    %c0_i32 = arith.constant 0 : i32
    %c0_i32_0 = arith.constant 0 : i32
    return %c0_i32, %arg0 : i32, i32
  }
}

module attributes {stable_mosaic.version = 11 : i64} {
  func.func @_mm_res_kernel(%arg0: i32, %arg1: memref<16x40xf32, #tpu.memory_space<vmem>>, %arg2: memref<40x128xf32, #tpu.memory_space<vmem>>, %arg3: memref<16x1xf32, #tpu.memory_space<vmem>>, %arg4: memref<16x128xf32, #tpu.memory_space<vmem>>, %arg5: memref<16x128xf32, #tpu.memory_space<vmem>>) attributes {dimension_semantics = [#tpu.dimension_semantics<parallel>], iteration_bounds = array<i64: 3>, scalar_prefetch = 0 : i64, scratch_operands = 0 : i64, tpu.core_type = #tpu.core_type<tc>, window_params = [{pipeline_mode = #tpu.pipeline_mode<synchronous>, transform_indices = @transform_0, window_bounds = array<i64: 16, 40>}, {transform_indices = @transform_1, window_bounds = array<i64: 40, 128>}, {pipeline_mode = #tpu.pipeline_mode<synchronous>, transform_indices = @transform_2, window_bounds = array<i64: 16, 1>}, {transform_indices = @transform_3, window_bounds = array<i64: 16, 128>}, {transform_indices = @transform_4, window_bounds = array<i64: 16, 128>}]} {
    %c0 = arith.constant 0 : index
    %c0_0 = arith.constant 0 : index
    %0 = vector.load %arg1[%c0, %c0_0] : memref<16x40xf32, #tpu.memory_space<vmem>>, vector<16x40xf32>
    %c0_1 = arith.constant 0 : index
    %c0_2 = arith.constant 0 : index
    %1 = vector.load %arg2[%c0_1, %c0_2] : memref<40x128xf32, #tpu.memory_space<vmem>>, vector<40x128xf32>
    %cst = arith.constant dense<0.000000e+00> : vector<16x128xf32>
    %2 = tpu.matmul %0, %1, %cst {dimension_numbers = #tpu.dot_dimension_numbers<[1], [0], [0], [1], [0, 0, 1, 1], [], []>} : vector<16x40xf32>, vector<40x128xf32>, vector<16x128xf32> -> vector<16x128xf32>
    %c0_3 = arith.constant 0 : index
    %c0_4 = arith.constant 0 : index
    %3 = vector.load %arg3[%c0_3, %c0_4] : memref<16x1xf32, #tpu.memory_space<vmem>>, vector<16x1xf32>
    %4 = vector.broadcast %3 : vector<16x1xf32> to vector<16x128xf32>
    %5 = arith.addf %2, %4 : vector<16x128xf32>
    %c0_5 = arith.constant 0 : index
    %c0_6 = arith.constant 0 : index
    %6 = vector.load %arg4[%c0_5, %c0_6] : memref<16x128xf32, #tpu.memory_space<vmem>>, vector<16x128xf32>
    %7 = arith.addf %5, %6 : vector<16x128xf32>
    %c0_7 = arith.constant 0 : index
    %c0_8 = arith.constant 0 : index
    %8 = vector.load %arg5[%c0_7, %c0_8] : memref<16x128xf32, #tpu.memory_space<vmem>>, vector<16x128xf32>
    tpu.vector_store %arg5[%c0_7, %c0_8], %7 {strides = array<i32>} : memref<16x128xf32, #tpu.memory_space<vmem>>, vector<16x128xf32>,
    return
  }
  func.func @transform_0(%arg0: i32) -> (i32, i32) {
    %c0_i32 = arith.constant 0 : i32
    %c0_i32_0 = arith.constant 0 : i32
    %c0_i32_1 = arith.constant 0 : i32
    return %c0_i32, %c0_i32_0 : i32, i32
  }
  func.func @transform_1(%arg0: i32) -> (i32, i32) {
    %c0_i32 = arith.constant 0 : i32
    %c0_i32_0 = arith.constant 0 : i32
    return %c0_i32, %arg0 : i32, i32
  }
  func.func @transform_2(%arg0: i32) -> (i32, i32) {
    %c0_i32 = arith.constant 0 : i32
    %c0_i32_0 = arith.constant 0 : i32
    %c0_i32_1 = arith.constant 0 : i32
    return %c0_i32, %c0_i32_0 : i32, i32
  }
  func.func @transform_3(%arg0: i32) -> (i32, i32) {
    %c0_i32 = arith.constant 0 : i32
    %c0_i32_0 = arith.constant 0 : i32
    return %c0_i32, %arg0 : i32, i32
  }
  func.func @transform_4(%arg0: i32) -> (i32, i32) {
    %c0_i32 = arith.constant 0 : i32
    %c0_i32_0 = arith.constant 0 : i32
    return %c0_i32, %arg0 : i32, i32
  }
}

module attributes {stable_mosaic.version = 11 : i64} {
  func.func @_mm_kernel(%arg0: i32, %arg1: memref<32x64xf32, #tpu.memory_space<vmem>>, %arg2: memref<64x128xf32, #tpu.memory_space<vmem>>, %arg3: memref<32x1xf32, #tpu.memory_space<vmem>>, %arg4: memref<32x128xf32, #tpu.memory_space<vmem>>) attributes {dimension_semantics = [#tpu.dimension_semantics<parallel>], iteration_bounds = array<i64: 3>, scalar_prefetch = 0 : i64, scratch_operands = 0 : i64, tpu.core_type = #tpu.core_type<tc>, window_params = [{pipeline_mode = #tpu.pipeline_mode<synchronous>, transform_indices = @transform_0, window_bounds = array<i64: 32, 64>}, {transform_indices = @transform_1, window_bounds = array<i64: 64, 128>}, {pipeline_mode = #tpu.pipeline_mode<synchronous>, transform_indices = @transform_2, window_bounds = array<i64: 32, 1>}, {transform_indices = @transform_3, window_bounds = array<i64: 32, 128>}]} {
    %c0 = arith.constant 0 : index
    %c0_0 = arith.constant 0 : index
    %0 = vector.load %arg1[%c0, %c0_0] : memref<32x64xf32, #tpu.memory_space<vmem>>, vector<32x64xf32>
    %c0_1 = arith.constant 0 : index
    %c0_2 = arith.constant 0 : index
    %1 = vector.load %arg2[%c0_1, %c0_2] : memref<64x128xf32, #tpu.memory_space<vmem>>, vector<64x128xf32>
    %cst = arith.constant dense<0.000000e+00> : vector<32x128xf32>
    %2 = tpu.matmul %0, %1, %cst {dimension_numbers = #tpu.dot_dimension_numbers<[1], [0], [0], [1], [0, 0, 1, 1], [], []>} : vector<32x64xf32>, vector<64x128xf32>, vector<32x128xf32> -> vector<32x128xf32>
    %c0_3 = arith.constant 0 : index
    %c0_4 = arith.constant 0 : index
    %3 = vector.load %arg3[%c0_3, %c0_4] : memref<32x1xf32, #tpu.memory_space<vmem>>, vector<32x1xf32>
    %4 = vector.broadcast %3 : vector<32x1xf32> to vector<32x128xf32>
    %5 = arith.addf %2, %4 : vector<32x128xf32>
    %c0_5 = arith.constant 0 : index
    %c0_6 = arith.constant 0 : index
    %6 = vector.load %arg4[%c0_5, %c0_6] : memref<32x128xf32, #tpu.memory_space<vmem>>, vector<32x128xf32>
    tpu.vector_store %arg4[%c0_5, %c0_6], %5 {strides = array<i32>} : memref<32x128xf32, #tpu.memory_space<vmem>>, vector<32x128xf32>,
    return
  }
  func.func @transform_0(%arg0: i32) -> (i32, i32) {
    %c0_i32 = arith.constant 0 : i32
    %c0_i32_0 = arith.constant 0 : i32
    %c0_i32_1 = arith.constant 0 : i32
    return %c0_i32, %c0_i32_0 : i32, i32
  }
  func.func @transform_1(%arg0: i32) -> (i32, i32) {
    %c0_i32 = arith.constant 0 : i32
    %c0_i32_0 = arith.constant 0 : i32
    return %c0_i32, %arg0 : i32, i32
  }
  func.func @transform_2(%arg0: i32) -> (i32, i32) {
    %c0_i32 = arith.constant 0 : i32
    %c0_i32_0 = arith.constant 0 : i32
    %c0_i32_1 = arith.constant 0 : i32
    return %c0_i32, %c0_i32_0 : i32, i32
  }
  func.func @transform_3(%arg0: i32) -> (i32, i32) {
    %c0_i32 = arith.constant 0 : i32
    %c0_i32_0 = arith.constant 0 : i32
    return %c0_i32, %arg0 : i32, i32
  }
}

module attributes {stable_mosaic.version = 11 : i64} {
  func.func @_mm_kernel(%arg0: i32, %arg1: memref<8x200xf32, #tpu.memory_space<vmem>>, %arg2: memref<200x512xf32, #tpu.memory_space<vmem>>, %arg3: memref<8x1xf32, #tpu.memory_space<vmem>>, %arg4: memref<8x512xf32, #tpu.memory_space<vmem>>) attributes {dimension_semantics = [#tpu.dimension_semantics<parallel>], iteration_bounds = array<i64: 3>, scalar_prefetch = 0 : i64, scratch_operands = 0 : i64, tpu.core_type = #tpu.core_type<tc>, window_params = [{pipeline_mode = #tpu.pipeline_mode<synchronous>, transform_indices = @transform_0, window_bounds = array<i64: 8, 200>}, {transform_indices = @transform_1, window_bounds = array<i64: 200, 512>}, {pipeline_mode = #tpu.pipeline_mode<synchronous>, transform_indices = @transform_2, window_bounds = array<i64: 8, 1>}, {transform_indices = @transform_3, window_bounds = array<i64: 8, 512>}]} {
    %c0 = arith.constant 0 : index
    %c0_0 = arith.constant 0 : index
    %0 = vector.load %arg1[%c0, %c0_0] : memref<8x200xf32, #tpu.memory_space<vmem>>, vector<8x200xf32>
    %c0_1 = arith.constant 0 : index
    %c0_2 = arith.constant 0 : index
    %1 = vector.load %arg2[%c0_1, %c0_2] : memref<200x512xf32, #tpu.memory_space<vmem>>, vector<200x512xf32>
    %cst = arith.constant dense<0.000000e+00> : vector<8x512xf32>
    %2 = tpu.matmul %0, %1, %cst {dimension_numbers = #tpu.dot_dimension_numbers<[1], [0], [0], [1], [0, 0, 1, 1], [], []>} : vector<8x200xf32>, vector<200x512xf32>, vector<8x512xf32> -> vector<8x512xf32>
    %c0_3 = arith.constant 0 : index
    %c0_4 = arith.constant 0 : index
    %3 = vector.load %arg3[%c0_3, %c0_4] : memref<8x1xf32, #tpu.memory_space<vmem>>, vector<8x1xf32>
    %4 = vector.broadcast %3 : vector<8x1xf32> to vector<8x512xf32>
    %5 = arith.addf %2, %4 : vector<8x512xf32>
    %c0_5 = arith.constant 0 : index
    %c0_6 = arith.constant 0 : index
    %6 = vector.load %arg4[%c0_5, %c0_6] : memref<8x512xf32, #tpu.memory_space<vmem>>, vector<8x512xf32>
    tpu.vector_store %arg4[%c0_5, %c0_6], %5 {strides = array<i32>} : memref<8x512xf32, #tpu.memory_space<vmem>>, vector<8x512xf32>,
    return
  }
  func.func @transform_0(%arg0: i32) -> (i32, i32) {
    %c0_i32 = arith.constant 0 : i32
    %c0_i32_0 = arith.constant 0 : i32
    %c0_i32_1 = arith.constant 0 : i32
    return %c0_i32, %c0_i32_0 : i32, i32
  }
  func.func @transform_1(%arg0: i32) -> (i32, i32) {
    %c0_i32 = arith.constant 0 : i32
    %c0_i32_0 = arith.constant 0 : i32
    return %c0_i32, %arg0 : i32, i32
  }
  func.func @transform_2(%arg0: i32) -> (i32, i32) {
    %c0_i32 = arith.constant 0 : i32
    %c0_i32_0 = arith.constant 0 : i32
    %c0_i32_1 = arith.constant 0 : i32
    return %c0_i32, %c0_i32_0 : i32, i32
  }
  func.func @transform_3(%arg0: i32) -> (i32, i32) {
    %c0_i32 = arith.constant 0 : i32
    %c0_i32_0 = arith.constant 0 : i32
    return %c0_i32, %arg0 : i32, i32
  }
}

</mosaic_0001>

<llo_original>
// kernel: block_forward.8
$region0: #{block_forward.8}
  #allocation0 [shape = 'u32[]', space=smem, size = 0x4, offset = 0x4, fixed_abs, tag = 'smem constant byte address 0x4 - core index']
  #allocation1 [shape = 'u32[144,128]{1,0:T(1,128)}', space=vmem, size = 0x12000, scoped, tag = 'internal scratch']
  %s0 = inlined_call_operand.vmem [shape: f32[8,8], index: 0, kind: input, shape index: {}]
  %s1 = inlined_call_operand.vmem [shape: f32[8,1536], index: 1, kind: input, shape index: {}]
  %s2 = inlined_call_operand.vmem [shape: f32[8,1], index: 2, kind: input, shape index: {}]
  %s3 = inlined_call_operand.vmem [shape: f32[8,1536], index: 3, kind: output, shape index: {}]
  %s4 = sld [smem:[#allocation0]]
  $region45: #{block_forward.8} parent=0
    _
  %s6 = ssub.s32 1, %s4
  %s7 = scalar_select 0, %s6, %s4
  loop: start=0, step=1, limit=5
  $region2: #{block_forward.8} parent=0 // loop_pre_header
    _
  $region3: #{block_forward.8} parent=0 // loop_header
    %s9 = sphi 0, %s13
    %p10 = scmp.ge.s32.totalorder %s9, 5
    %s17 = sphi 0, %s17
    %s19 = sphi 0, %s17
    %s20 = sphi 0, %s19
    %s34 = sphi 0, %s20
    %s40 = sphi 0, %s42
    %s43 = sphi 0, %s40
    %s44 = sphi 0, %s43
    %s60 = sphi 0, %s44
    %s64 = sphi 0, %s64
    %s66 = sphi 0, %s64
    %s67 = sphi 0, %s66
    %s81 = sphi 0, %s67
    %s87 = sphi 0, %s89
    %s90 = sphi 0, %s87
    %s91 = sphi 0, %s90
    %s107 = sphi 0, %s91
  $region4: #{block_forward.8} parent=0 // loop_header_branch
    %12 = sbr.rel (%p10) target = $region8
  $region5: #{block_forward.8} parent=0 // loop_body
    %s14 = ssub.s32 %s9, 1
    %s15 = ssub.s32 %s9, 2
    %s16 = sadd.s32 %s9, 1
    %s18 = sadd.s32 %s17, 1
    %p21 = scmp.eq.s32.totalorder %s9, 2
    %p22 = scmp.ne.s32.totalorder %s17, %s19
    %p23 = scmp.eq.s32.totalorder %s9, 0
    %p24 = por %p22, %p23
    %p25 = scmp.ne.s32.totalorder %s17, %s19
    %p26 = scmp.eq.s32.totalorder %s14, 2
    %p27 = por %p25, %p26
    %p28 = scmp.ne.s32.totalorder %s19, %s20
    %p29 = scmp.eq.s32.totalorder %s14, 0
    %p30 = por %p28, %p29
    %p31 = scmp.ne.s32.totalorder %s19, %s20
    %p32 = scmp.eq.s32.totalorder %s15, 2
    %p33 = por %p31, %p32
    %p35 = scmp.ne.s32.totalorder %s20, %s34
    %p36 = scmp.eq.s32.totalorder %s15, 0
    %p37 = por %p35, %p36
    %s38 = ssub.s32 %s9, %s16
    %p39 = scmp.eq.s32.totalorder %s38, 0
    %s41 = sadd.s32 %s40, 1
    %s42 = scalar_select %p39, %s40, %s41
    %p45 = pneg %p39
    %p46 = scmp.eq.s32.totalorder %s9, 2
    %p47 = por %p45, %p46
    %p48 = scmp.ne.s32.totalorder %s40, %s43
    %p49 = scmp.eq.s32.totalorder %s9, 0
    %p50 = por %p48, %p49
    %p51 = scmp.ne.s32.totalorder %s40, %s43
    %p52 = scmp.eq.s32.totalorder %s14, 2
    %p53 = por %p51, %p52
    %p54 = scmp.ne.s32.totalorder %s43, %s44
    %p55 = scmp.eq.s32.totalorder %s14, 0
    %p56 = por %p54, %p55
    %p57 = scmp.ne.s32.totalorder %s43, %s44
    %p58 = scmp.eq.s32.totalorder %s15, 2
    %p59 = por %p57, %p58
    %p61 = scmp.ne.s32.totalorder %s44, %s60
    %p62 = scmp.eq.s32.totalorder %s15, 0
    %p63 = por %p61, %p62
    %s65 = sadd.s32 %s64, 1
    %p68 = scmp.eq.s32.totalorder %s9, 2
    %p69 = scmp.ne.s32.totalorder %s64, %s66
    %p70 = scmp.eq.s32.totalorder %s9, 0
    %p71 = por %p69, %p70
    %p72 = scmp.ne.s32.totalorder %s64, %s66
    %p73 = scmp.eq.s32.totalorder %s14, 2
    %p74 = por %p72, %p73
    %p75 = scmp.ne.s32.totalorder %s66, %s67
    %p76 = scmp.eq.s32.totalorder %s14, 0
    %p77 = por %p75, %p76
    %p78 = scmp.ne.s32.totalorder %s66, %s67
    %p79 = scmp.eq.s32.totalorder %s15, 2
    %p80 = por %p78, %p79
    %p82 = scmp.ne.s32.totalorder %s67, %s81
    %p83 = scmp.eq.s32.totalorder %s15, 0
    %p84 = por %p82, %p83
    %s85 = ssub.s32 %s9, %s16
    %p86 = scmp.eq.s32.totalorder %s85, 0
    %s88 = sadd.s32 %s87, 1
    %s89 = scalar_select %p86, %s87, %s88
    %p92 = pneg %p86
    %p93 = scmp.eq.s32.totalorder %s9, 2
    %p94 = por %p92, %p93
    %p95 = scmp.ne.s32.totalorder %s87, %s90
    %p96 = scmp.eq.s32.totalorder %s9, 0
    %p97 = por %p95, %p96
    %p98 = scmp.ne.s32.totalorder %s87, %s90
    %p99 = scmp.eq.s32.totalorder %s14, 2
    %p100 = por %p98, %p99
    %p101 = scmp.ne.s32.totalorder %s90, %s91
    %p102 = scmp.eq.s32.totalorder %s14, 0
    %p103 = por %p101, %p102
    %p104 = scmp.ne.s32.totalorder %s90, %s91
    %p105 = scmp.eq.s32.totalorder %s15, 2
    %p106 = por %p104, %p105
    %p108 = scmp.ne.s32.totalorder %s91, %s107
    %p109 = scmp.eq.s32.totalorder %s15, 0
    %p110 = por %p108, %p109
    %p111 = scmp.le.s32.totalorder 1, %s9
    %p112 = scmp.lt.s32.totalorder %s9, 4
    %p113 = pnand %p111, %p112
    %p114 = pneg %p113
    // Predicated region
    $region9: #{block_forward.8} parent=5 // pred_check
      _
    $region10: #{block_forward.8} parent=5 // pred_check_branch
      %116 = sbr.rel (%p113) target = $region12
    $region11: #{block_forward.8} parent=5 // pred_region
      %s117 = ssub.s32 %s9, 1
      // Predicated region
      $region13: #{block_forward.8} parent=11 // pred_check
        %p118 = pneg %p30
      $region14: #{block_forward.8} parent=11 // pred_check_branch
        %120 = sbr.rel (%p118) target = $region16
      $region15: #{block_forward.8} parent=11 // pred_region
        _
      $region16: #{block_forward.8} parent=11 // pred_fallthru
        _
      // Predicated region
      $region17: #{block_forward.8} parent=11 // pred_check
        %p121 = pneg %p77
      $region18: #{block_forward.8} parent=11 // pred_check_branch
        %123 = sbr.rel (%p121) target = $region20
      $region19: #{block_forward.8} parent=11 // pred_region
        _
      $region20: #{block_forward.8} parent=11 // pred_fallthru
        _
    $region12: #{block_forward.8} parent=5 // pred_fallthru
      _
    %p124 = scmp.lt.s32.totalorder %s9, 3
    // Predicated region
    $region21: #{block_forward.8} parent=5 // pred_check
      %p125 = pneg %p124
    $region22: #{block_forward.8} parent=5 // pred_check_branch
      %127 = sbr.rel (%p125) target = $region24
    $region23: #{block_forward.8} parent=5 // pred_region
      // Predicated region
      $region25: #{block_forward.8} parent=23 // pred_check
        %p128 = pneg %p50
      $region26: #{block_forward.8} parent=23 // pred_check_branch
        %130 = sbr.rel (%p128) target = $region28
      $region27: #{block_forward.8} parent=23 // pred_region
        %s131 = smul.u32 4, %s9
        %p132 = scmp.lt.s32.totalorder %s131, 11
        %s133 = scalar_select %p132, %s131, 11
        %s134 = smul.addr %s133, 8
        %s135 = scalar_lea.vmem %s1, %s134
        %s136 = smul.u32 4, %s9
      $region28: #{block_forward.8} parent=23 // pred_fallthru
        _
    $region24: #{block_forward.8} parent=5 // pred_fallthru
      _
    %p137 = scmp.le.s32.totalorder 1, %s9
    %p138 = scmp.lt.s32.totalorder %s9, 4
    %p139 = pnand %p137, %p138
    %p140 = pneg %p139
    // Predicated region
    $region29: #{block_forward.8} parent=5 // pred_check
      _
    $region30: #{block_forward.8} parent=5 // pred_check_branch
      %142 = sbr.rel (%p139) target = $region32
    $region31: #{block_forward.8} parent=5 // pred_region
      %s143 = ssub.s32 %s9, 1
      %p144 = pneg %p30
      %p145 = pneg %p27
      %s146 = smul.u32 4, %s14
      %p147 = scmp.lt.s32.totalorder %s146, 11
      %s148 = scalar_select %p147, %s146, 11
      %s149 = smul.addr %s148, 8
      %s150 = scalar_lea.vmem %s1, %s149
      %p151 = pneg %p56
      %p152 = pneg %p53
      %p153 = pneg %p77
      %p154 = pneg %p74
      %p155 = pneg %p103
      %p156 = pneg %p100
      %s157 = smul.u32 4, %s14
      %p158 = scmp.lt.s32.totalorder %s157, 11
      %s159 = scalar_select %p158, %s157, 11
      %s160 = smul.addr %s159, 8
      %s161 = scalar_lea.vmem %s3, %s160
      %s162 = smul.u32 4, %s14
      %p163 = scmp.lt.s32.totalorder %s162, 11
      %s164 = scalar_select %p163, %s162, 11
      %s165 = smul.addr %s164, 8
      %s166 = scalar_lea.vmem %s1, %s165
      %s167 = smul.u32 4, %s14
      %s168 = smul.u32 4, %s14
      %p169 = scmp.lt.s32.totalorder %s168, 11
      %s170 = scalar_select %p169, %s168, 11
      %s171 = smul.addr %s170, 8
      %s172 = scalar_lea.vmem %s3, %s171
      %s173 = smul.u32 4, %s14
      %v174 = vld [vmem:[%s0] sm:$0xff]
      %v175 = vld [vmem:[%s166] sm:$0xff]
      %v176 = vld [vmem:[%s166 + $0x8] sm:$0xff]
      %v177 = vld [vmem:[%s166 + $0x10] sm:$0xff]
      %v178 = vld [vmem:[%s166 + $0x18] sm:$0xff]
      %v179 = vld [vmem:[%s2] sm:$0xff]
      %181 = vset.pattern.permute.xlu0 0
      %182 = vperm.xlu0 %181, %v179
      %v183 = vpop.permute.xlu0 %182
      %vm185 = vcmask 64512
      %v187 = vsel %vm185, %v174, 0
      %189 = vmatprep.subr.mxu0 %v176
      %190 = vmatpush1.msra.mxu0 %v175
      %191 = vmatprep.subr.mxu0 0.0
      %192 = vmatpush1.msra.mxu0 0.0
      %193 = vmatprep.subr.mxu0 0.0
      %194 = vmatpush1.msra.mxu0 0.0
      %195 = vmatprep.subr.mxu0 0.0
      %196 = vmatpush1.msra.mxu0 0.0
      %197 = vmatprep.subr.mxu0 0.0
      %198 = vmatpush1.msra.mxu0 0.0
      %199 = vmatprep.subr.mxu0 0.0
      %200 = vmatpush1.msra.mxu0 0.0
      %201 = vmatprep.subr.mxu0 0.0
      %202 = vmatpush1.msra.mxu0 0.0
      %203 = vmatprep.subr.mxu0 0.0
      %204 = vmatpush1.msra.mxu0 0.0
      %205 = vmatprep.subr.mxu0 0.0
      %206 = vmatpush1.msra.mxu0 0.0
      %207 = vmatprep.subr.mxu0 0.0
      %208 = vmatpush1.msra.mxu0 0.0
      %209 = vmatprep.subr.mxu0 0.0
      %210 = vmatpush1.msra.mxu0 0.0
      %211 = vmatprep.subr.mxu0 0.0
      %212 = vmatpush1.msra.mxu0 0.0
      %213 = vmatprep.subr.mxu0 0.0
      %214 = vmatpush1.msra.mxu0 0.0
      %215 = vmatprep.subr.mxu0 0.0
      %216 = vmatpush1.msra.mxu0 0.0
      %217 = vmatprep.subr.mxu0 0.0
      %218 = vmatpush1.msra.mxu0 0.0
      %219 = vmatprep.subr.mxu0 0.0
      %220 = vmatpush1.msra.mxu0 0.0
      %221 = vmatprep.subr.mxu0 0.0
      %222 = vmatpush1.msra.mxu0 0.0
      %223 = vmatprep.subr.mxu0 0.0
      %224 = vmatpush1.msra.mxu0 0.0
      %225 = vmatprep.subr.mxu0 0.0
      %226 = vmatpush1.msra.mxu0 0.0
      %227 = vmatprep.subr.mxu0 0.0
      %228 = vmatpush1.msra.mxu0 0.0
      %229 = vmatprep.subr.mxu0 0.0
      %230 = vmatpush1.msra.mxu0 0.0
      %231 = vmatprep.subr.mxu0 0.0
      %232 = vmatpush1.msra.mxu0 0.0
      %233 = vmatprep.subr.mxu0 0.0
      %234 = vmatpush1.msra.mxu0 0.0
      %235 = vmatprep.subr.mxu0 0.0
      %236 = vmatpush1.msra.mxu0 0.0
      %237 = vmatprep.subr.mxu0 0.0
      %238 = vmatpush1.msra.mxu0 0.0
      %239 = vmatprep.subr.mxu0 0.0
      %240 = vmatpush1.msra.mxu0 0.0
      %241 = vmatprep.subr.mxu0 0.0
      %242 = vmatpush1.msra.mxu0 0.0
      %243 = vmatprep.subr.mxu0 0.0
      %244 = vmatpush1.msra.mxu0 0.0
      %245 = vmatprep.subr.mxu0 0.0
      %246 = vmatpush1.msra.mxu0 0.0
      %247 = vmatprep.subr.mxu0 0.0
      %248 = vmatpush1.msra.mxu0 0.0
      %249 = vmatprep.subr.mxu0 0.0
      %250 = vmatpush1.msra.mxu0 0.0
      %251 = vmatprep.subr.mxu0 0.0
      %252 = vmatpush1.msra.mxu0 0.0
      %253 = vmatprep.mubr.f32.mxu0 0.0
      %254 = vmatmul.mubr.f32.gmra.mrb[0].mxu0 %v187
      %v255 = vpop.f32.mrb[0].mxu0
      %v256 = vadd.f32 %v183, %v255
      %v257 = vpop.f32.mrb[0].mxu0
      %v258 = vadd.f32 %v183, %v257
      %259 = vdwg.mxu0
      %260 = vmatprep.subr.mxu0 %v178
      %261 = vmatpush1.msra.mxu0 %v177
      %262 = vmatprep.subr.mxu0 0.0
      %263 = vmatpush1.msra.mxu0 0.0
      %264 = vmatprep.subr.mxu0 0.0
      %265 = vmatpush1.msra.mxu0 0.0
      %266 = vmatprep.subr.mxu0 0.0
      %267 = vmatpush1.msra.mxu0 0.0
      %268 = vmatprep.subr.mxu0 0.0
      %269 = vmatpush1.msra.mxu0 0.0
      %270 = vmatprep.subr.mxu0 0.0
      %271 = vmatpush1.msra.mxu0 0.0
      %272 = vmatprep.subr.mxu0 0.0
      %273 = vmatpush1.msra.mxu0 0.0
      %274 = vmatprep.subr.mxu0 0.0
      %275 = vmatpush1.msra.mxu0 0.0
      %276 = vmatprep.subr.mxu0 0.0
      %277 = vmatpush1.msra.mxu0 0.0
      %278 = vmatprep.subr.mxu0 0.0
      %279 = vmatpush1.msra.mxu0 0.0
      %280 = vmatprep.subr.mxu0 0.0
      %281 = vmatpush1.msra.mxu0 0.0
      %282 = vmatprep.subr.mxu0 0.0
      %283 = vmatpush1.msra.mxu0 0.0
      %284 = vmatprep.subr.mxu0 0.0
      %285 = vmatpush1.msra.mxu0 0.0
      %286 = vmatprep.subr.mxu0 0.0
      %287 = vmatpush1.msra.mxu0 0.0
      %288 = vmatprep.subr.mxu0 0.0
      %289 = vmatpush1.msra.mxu0 0.0
      %290 = vmatprep.subr.mxu0 0.0
      %291 = vmatpush1.msra.mxu0 0.0
      %292 = vmatprep.subr.mxu0 0.0
      %293 = vmatpush1.msra.mxu0 0.0
      %294 = vmatprep.subr.mxu0 0.0
      %295 = vmatpush1.msra.mxu0 0.0
      %296 = vmatprep.subr.mxu0 0.0
      %297 = vmatpush1.msra.mxu0 0.0
      %298 = vmatprep.subr.mxu0 0.0
      %299 = vmatpush1.msra.mxu0 0.0
      %300 = vmatprep.subr.mxu0 0.0
      %301 = vmatpush1.msra.mxu0 0.0
      %302 = vmatprep.subr.mxu0 0.0
      %303 = vmatpush1.msra.mxu0 0.0
      %304 = vmatprep.subr.mxu0 0.0
      %305 = vmatpush1.msra.mxu0 0.0
      %306 = vmatprep.subr.mxu0 0.0
      %307 = vmatpush1.msra.mxu0 0.0
      %308 = vmatprep.subr.mxu0 0.0
      %309 = vmatpush1.msra.mxu0 0.0
      %310 = vmatprep.subr.mxu0 0.0
      %311 = vmatpush1.msra.mxu0 0.0
      %312 = vmatprep.subr.mxu0 0.0
      %313 = vmatpush1.msra.mxu0 0.0
      %314 = vmatprep.subr.mxu0 0.0
      %315 = vmatpush1.msra.mxu0 0.0
      %316 = vmatprep.subr.mxu0 0.0
      %317 = vmatpush1.msra.mxu0 0.0
      %318 = vmatprep.subr.mxu0 0.0
      %319 = vmatpush1.msra.mxu0 0.0
      %320 = vmatprep.subr.mxu0 0.0
      %321 = vmatpush1.msra.mxu0 0.0
      %322 = vmatprep.subr.mxu0 0.0
      %323 = vmatpush1.msra.mxu0 0.0
      %324 = vmatprep.mubr.f32.mxu0 0.0
      %325 = vmatmul.mubr.f32.gmra.mrb[0].mxu0 %v187
      %v326 = vpop.f32.mrb[0].mxu0
      %v327 = vadd.f32 %v183, %v326
      %v328 = vpop.f32.mrb[0].mxu0
      %v329 = vadd.f32 %v183, %v328
      %330 = vdwg.mxu0
      %331 = vst [vmem:[%s172] sm:$0xff] %v256
      %332 = vst [vmem:[%s172 + $0x8] sm:$0xff] %v258
      %333 = vst [vmem:[%s172 + $0x10] sm:$0xff] %v327
      %334 = vst [vmem:[%s172 + $0x18] sm:$0xff] %v329
      %s335 = smul.u32 4, %s14
      %p336 = scmp.lt.s32.totalorder %s335, 11
      %s337 = scalar_select %p336, %s335, 11
      %s338 = smul.addr %s337, 8
      %s339 = scalar_lea.vmem %s3, %s338
      // Predicated region
      $region33: #{block_forward.8} parent=31 // pred_check
        %p340 = pneg %p100
      $region34: #{block_forward.8} parent=31 // pred_check_branch
        %342 = sbr.rel (%p340) target = $region36
      $region35: #{block_forward.8} parent=31 // pred_region
        %s343 = smul.u32 4, %s14
      $region36: #{block_forward.8} parent=31 // pred_fallthru
        _
    $region32: #{block_forward.8} parent=5 // pred_fallthru
      _
    %p344 = scmp.le.s32.totalorder 2, %s9
    // Predicated region
    $region37: #{block_forward.8} parent=5 // pred_check
      %p345 = pneg %p344
    $region38: #{block_forward.8} parent=5 // pred_check_branch
      %347 = sbr.rel (%p345) target = $region40
    $region39: #{block_forward.8} parent=5 // pred_region
      %s348 = ssub.s32 %s9, 2
      // Predicated region
      $region41: #{block_forward.8} parent=39 // pred_check
        %p349 = pneg %p106
      $region42: #{block_forward.8} parent=39 // pred_check_branch
        %351 = sbr.rel (%p349) target = $region44
      $region43: #{block_forward.8} parent=39 // pred_region
        %s352 = smul.u32 4, %s15
        %p353 = scmp.lt.s32.totalorder %s352, 11
        %s354 = scalar_select %p353, %s352, 11
        %s355 = smul.addr %s354, 8
        %s356 = scalar_lea.vmem %s3, %s355
      $region44: #{block_forward.8} parent=39 // pred_fallthru
        _
    $region40: #{block_forward.8} parent=5 // pred_fallthru
      _
  $region6: #{block_forward.8} parent=0 // loop_footer
    %s13 = sadd.s32 1, %s9
  $region7: #{block_forward.8} parent=0 // loop_footer_branch
    %8 = sbr.rel target = $region3
  $region8: #{block_forward.8} parent=0 // loop_exit
    _

// kernel: block_forward.9
$region0: #{block_forward.9}
  #allocation0 [shape = 'u32[]', space=smem, size = 0x4, offset = 0x4, fixed_abs, tag = 'smem constant byte address 0x4 - core index']
  #allocation1 [shape = 'u32[144,128]{1,0:T(1,128)}', space=vmem, size = 0x12000, scoped, tag = 'internal scratch']
  %s0 = inlined_call_operand.vmem [shape: f32[16,200], index: 0, kind: input, shape index: {}]
  %s1 = inlined_call_operand.vmem [shape: f32[200,384], index: 1, kind: input, shape index: {}]
  %s2 = inlined_call_operand.vmem [shape: f32[16,1], index: 2, kind: input, shape index: {}]
  %s3 = inlined_call_operand.vmem [shape: f32[16,384], index: 3, kind: output, shape index: {}]
  %s4 = sld [smem:[#allocation0]]
  $region117: #{block_forward.9} parent=0
    _
  %s6 = ssub.s32 1, %s4
  %s7 = scalar_select 0, %s6, %s4
  $region1: #{block_forward.9} parent=0
    #allocation2 [shape = 'u8[204800]{0}', space=vmem, size = 0x32000, scoped, tag = 'input window, operand 1']
    #allocation3 [shape = 'u8[16384]{0}', space=vmem, size = 0x4000, scoped, tag = 'output window, operand 0']
    loop: start=0, step=1, limit=5
    $region2: #{block_forward.9} parent=1 // loop_pre_header
      _
    $region3: #{block_forward.9} parent=1 // loop_header
      %s9 = sphi 0, %s13
      %p10 = scmp.ge.s32.totalorder %s9, 5
      %s17 = sphi 0, %s17
      %s19 = sphi 0, %s17
      %s20 = sphi 0, %s19
      %s34 = sphi 0, %s20
      %s40 = sphi 0, %s42
      %s43 = sphi 0, %s40
      %s44 = sphi 0, %s43
      %s60 = sphi 0, %s44
      %s64 = sphi 0, %s64
      %s66 = sphi 0, %s64
      %s67 = sphi 0, %s66
      %s81 = sphi 0, %s67
      %s87 = sphi 0, %s89
      %s90 = sphi 0, %s87
      %s91 = sphi 0, %s90
      %s107 = sphi 0, %s91
    $region4: #{block_forward.9} parent=1 // loop_header_branch
      %12 = sbr.rel (%p10) target = $region8
    $region5: #{block_forward.9} parent=1 // loop_body
      %s14 = ssub.s32 %s9, 1
      %s15 = ssub.s32 %s9, 2
      %s16 = sadd.s32 %s9, 1
      %s18 = sadd.s32 %s17, 1
      %p21 = scmp.eq.s32.totalorder %s9, 2
      %p22 = scmp.ne.s32.totalorder %s17, %s19
      %p23 = scmp.eq.s32.totalorder %s9, 0
      %p24 = por %p22, %p23
      %p25 = scmp.ne.s32.totalorder %s17, %s19
      %p26 = scmp.eq.s32.totalorder %s14, 2
      %p27 = por %p25, %p26
      %p28 = scmp.ne.s32.totalorder %s19, %s20
      %p29 = scmp.eq.s32.totalorder %s14, 0
      %p30 = por %p28, %p29
      %p31 = scmp.ne.s32.totalorder %s19, %s20
      %p32 = scmp.eq.s32.totalorder %s15, 2
      %p33 = por %p31, %p32
      %p35 = scmp.ne.s32.totalorder %s20, %s34
      %p36 = scmp.eq.s32.totalorder %s15, 0
      %p37 = por %p35, %p36
      %s38 = ssub.s32 %s9, %s16
      %p39 = scmp.eq.s32.totalorder %s38, 0
      %s41 = sadd.s32 %s40, 1
      %s42 = scalar_select %p39, %s40, %s41
      %p45 = pneg %p39
      %p46 = scmp.eq.s32.totalorder %s9, 2
      %p47 = por %p45, %p46
      %p48 = scmp.ne.s32.totalorder %s40, %s43
      %p49 = scmp.eq.s32.totalorder %s9, 0
      %p50 = por %p48, %p49
      %p51 = scmp.ne.s32.totalorder %s40, %s43
      %p52 = scmp.eq.s32.totalorder %s14, 2
      %p53 = por %p51, %p52
      %p54 = scmp.ne.s32.totalorder %s43, %s44
      %p55 = scmp.eq.s32.totalorder %s14, 0
      %p56 = por %p54, %p55
      %p57 = scmp.ne.s32.totalorder %s43, %s44
      %p58 = scmp.eq.s32.totalorder %s15, 2
      %p59 = por %p57, %p58
      %p61 = scmp.ne.s32.totalorder %s44, %s60
      %p62 = scmp.eq.s32.totalorder %s15, 0
      %p63 = por %p61, %p62
      %s65 = sadd.s32 %s64, 1
      %p68 = scmp.eq.s32.totalorder %s9, 2
      %p69 = scmp.ne.s32.totalorder %s64, %s66
      %p70 = scmp.eq.s32.totalorder %s9, 0
      %p71 = por %p69, %p70
      %p72 = scmp.ne.s32.totalorder %s64, %s66
      %p73 = scmp.eq.s32.totalorder %s14, 2
      %p74 = por %p72, %p73
      %p75 = scmp.ne.s32.totalorder %s66, %s67
      %p76 = scmp.eq.s32.totalorder %s14, 0
      %p77 = por %p75, %p76
      %p78 = scmp.ne.s32.totalorder %s66, %s67
      %p79 = scmp.eq.s32.totalorder %s15, 2
      %p80 = por %p78, %p79
      %p82 = scmp.ne.s32.totalorder %s67, %s81
      %p83 = scmp.eq.s32.totalorder %s15, 0
      %p84 = por %p82, %p83
      %s85 = ssub.s32 %s9, %s16
      %p86 = scmp.eq.s32.totalorder %s85, 0
      %s88 = sadd.s32 %s87, 1
      %s89 = scalar_select %p86, %s87, %s88
      %p92 = pneg %p86
      %p93 = scmp.eq.s32.totalorder %s9, 2
      %p94 = por %p92, %p93
      %p95 = scmp.ne.s32.totalorder %s87, %s90
      %p96 = scmp.eq.s32.totalorder %s9, 0
      %p97 = por %p95, %p96
      %p98 = scmp.ne.s32.totalorder %s87, %s90
      %p99 = scmp.eq.s32.totalorder %s14, 2
      %p100 = por %p98, %p99
      %p101 = scmp.ne.s32.totalorder %s90, %s91
      %p102 = scmp.eq.s32.totalorder %s14, 0
      %p103 = por %p101, %p102
      %p104 = scmp.ne.s32.totalorder %s90, %s91
      %p105 = scmp.eq.s32.totalorder %s15, 2
      %p106 = por %p104, %p105
      %p108 = scmp.ne.s32.totalorder %s91, %s107
      %p109 = scmp.eq.s32.totalorder %s15, 0
      %p110 = por %p108, %p109
      %p111 = scmp.le.s32.totalorder 1, %s9
      %p112 = scmp.lt.s32.totalorder %s9, 4
      %p113 = pnand %p111, %p112
      %p114 = pneg %p113
      // Predicated region
      $region9: #{block_forward.9} parent=5 // pred_check
        _
      $region10: #{block_forward.9} parent=5 // pred_check_branch
        %116 = sbr.rel (%p113) target = $region12
      $region11: #{block_forward.9} parent=5 // pred_region
        %s117 = ssub.s32 %s9, 1
        // Predicated region
        $region13: #{block_forward.9} parent=11 // pred_check
          %p118 = pneg %p30
        $region14: #{block_forward.9} parent=11 // pred_check_branch
          %120 = sbr.rel (%p118) target = $region16
        $region15: #{block_forward.9} parent=11 // pred_region
          _
        $region16: #{block_forward.9} parent=11 // pred_fallthru
          _
        // Predicated region
        $region17: #{block_forward.9} parent=11 // pred_check
          %p121 = pneg %p77
        $region18: #{block_forward.9} parent=11 // pred_check_branch
          %123 = sbr.rel (%p121) target = $region20
        $region19: #{block_forward.9} parent=11 // pred_region
          _
        $region20: #{block_forward.9} parent=11 // pred_fallthru
          _
      $region12: #{block_forward.9} parent=5 // pred_fallthru
        _
      %p124 = scmp.lt.s32.totalorder %s9, 3
      // Predicated region
      $region21: #{block_forward.9} parent=5 // pred_check
        %p125 = pneg %p124
      $region22: #{block_forward.9} parent=5 // pred_check_branch
        %127 = sbr.rel (%p125) target = $region24
      $region23: #{block_forward.9} parent=5 // pred_region
        // Predicated region
        $region25: #{block_forward.9} parent=23 // pred_check
          %p128 = pneg %p50
        $region26: #{block_forward.9} parent=23 // pred_check_branch
          %130 = sbr.rel (%p128) target = $region28
        $region27: #{block_forward.9} parent=23 // pred_region
          %s131 = sand.u32 %s40, 1
          %s132 = sand.u32 %s40, 1
          %s133 = smul.addr %s132, 200
          %s134 = scalar_lea.vmem [#allocation2], %s133
          %s135 = smul.addr %s9, 8
          %s136 = scalar_lea.vmem %s1, %s135
          // Predicated region
          $region29: #{block_forward.9} parent=27 // pred_check
            _
          $region30: #{block_forward.9} parent=27 // pred_check_branch
            %138 = sbr.rel (0) target = $region32
          $region31: #{block_forward.9} parent=27 // pred_region
            // Predicated region
            $region33: #{block_forward.9} parent=31 // pred_check
              _
            $region34: #{block_forward.9} parent=31 // pred_check_branch
              %140 = sbr.rel (0) target = $region36
            $region35: #{block_forward.9} parent=31 // pred_region
              // Predicated region
              $region48: #{block_forward.9} parent=35 // pred_check
                _
              $region49: #{block_forward.9} parent=35 // pred_check_branch
                %203 = sbr.rel (0) target = $region51
              $region50: #{block_forward.9} parent=35 // pred_region
                loop: start=0, step=1, limit=1
                $region52: #{block_forward.9} parent=50 // loop_pre_header
                  _
                $region53: #{block_forward.9} parent=50 // loop_header
                  %s205 = sphi 0, %s209
                  %p206 = scmp.ge.s32.totalorder %s205, 1
                  %s210 = sphi %s136, %s136
                  %s211 = sphi %s134, %s134
                $region54: #{block_forward.9} parent=50 // loop_header_branch
                  %208 = sbr.rel (%p206) target = $region58
                $region55: #{block_forward.9} parent=50 // loop_body
                  %v212 = vld [vmem:[%s210] sm:$0xff]
                  %213 = vst [vmem:[%s211] sm:$0xff] %v212
                  %v214 = vld [vmem:[%s210 + $0x18] sm:$0xff]
                  %215 = vst [vmem:[%s211 + $0x8] sm:$0xff] %v214
                  %v216 = vld [vmem:[%s210 + $0x30] sm:$0xff]
                  %217 = vst [vmem:[%s211 + $0x10] sm:$0xff] %v216
                  %v218 = vld [vmem:[%s210 + $0x48] sm:$0xff]
                  %219 = vst [vmem:[%s211 + $0x18] sm:$0xff] %v218
                  %v220 = vld [vmem:[%s210 + $0x60] sm:$0xff]
                  %221 = vst [vmem:[%s211 + $0x20] sm:$0xff] %v220
                  %v222 = vld [vmem:[%s210 + $0x78] sm:$0xff]
                  %223 = vst [vmem:[%s211 + $0x28] sm:$0xff] %v222
                  %v224 = vld [vmem:[%s210 + $0x90] sm:$0xff]
                  %225 = vst [vmem:[%s211 + $0x30] sm:$0xff] %v224
                  %v226 = vld [vmem:[%s210 + $0xa8] sm:$0xff]
                  %227 = vst [vmem:[%s211 + $0x38] sm:$0xff] %v226
                  %v228 = vld [vmem:[%s210 + $0xc0] sm:$0xff]
                  %229 = vst [vmem:[%s211 + $0x40] sm:$0xff] %v228
                  %v230 = vld [vmem:[%s210 + $0xd8] sm:$0xff]
                  %231 = vst [vmem:[%s211 + $0x48] sm:$0xff] %v230
                  %v232 = vld [vmem:[%s210 + $0xf0] sm:$0xff]
                  %233 = vst [vmem:[%s211 + $0x50] sm:$0xff] %v232
                  %v234 = vld [vmem:[%s210 + $0x108] sm:$0xff]
                  %235 = vst [vmem:[%s211 + $0x58] sm:$0xff] %v234
                  %v236 = vld [vmem:[%s210 + $0x120] sm:$0xff]
                  %237 = vst [vmem:[%s211 + $0x60] sm:$0xff] %v236
                  %v238 = vld [vmem:[%s210 + $0x138] sm:$0xff]
                  %239 = vst [vmem:[%s211 + $0x68] sm:$0xff] %v238
                  %v240 = vld [vmem:[%s210 + $0x150] sm:$0xff]
                  %241 = vst [vmem:[%s211 + $0x70] sm:$0xff] %v240
                  %v242 = vld [vmem:[%s210 + $0x168] sm:$0xff]
                  %243 = vst [vmem:[%s211 + $0x78] sm:$0xff] %v242
                  %v244 = vld [vmem:[%s210 + $0x180] sm:$0xff]
                  %245 = vst [vmem:[%s211 + $0x80] sm:$0xff] %v244
                  %v246 = vld [vmem:[%s210 + $0x198] sm:$0xff]
                  %247 = vst [vmem:[%s211 + $0x88] sm:$0xff] %v246
                  %v248 = vld [vmem:[%s210 + $0x1b0] sm:$0xff]
                  %249 = vst [vmem:[%s211 + $0x90] sm:$0xff] %v248
                  %v250 = vld [vmem:[%s210 + $0x1c8] sm:$0xff]
                  %251 = vst [vmem:[%s211 + $0x98] sm:$0xff] %v250
                  %v252 = vld [vmem:[%s210 + $0x1e0] sm:$0xff]
                  %253 = vst [vmem:[%s211 + $0xa0] sm:$0xff] %v252
                  %v254 = vld [vmem:[%s210 + $0x1f8] sm:$0xff]
                  %255 = vst [vmem:[%s211 + $0xa8] sm:$0xff] %v254
                  %v256 = vld [vmem:[%s210 + $0x210] sm:$0xff]
                  %257 = vst [vmem:[%s211 + $0xb0] sm:$0xff] %v256
                  %v258 = vld [vmem:[%s210 + $0x228] sm:$0xff]
                  %259 = vst [vmem:[%s211 + $0xb8] sm:$0xff] %v258
                  %v260 = vld [vmem:[%s210 + $0x240] sm:$0xff]
                  %261 = vst [vmem:[%s211 + $0xc0] sm:$0xff] %v260
                $region56: #{block_forward.9} parent=50 // loop_footer
                  %s209 = sadd.s32 1, %s205
                $region57: #{block_forward.9} parent=50 // loop_footer_branch
                  %204 = sbr.rel target = $region53
                $region58: #{block_forward.9} parent=50 // loop_exit
                  _
              $region51: #{block_forward.9} parent=35 // pred_fallthru
                _
              // Predicated region
              $region59: #{block_forward.9} parent=35 // pred_check
                _
              $region60: #{block_forward.9} parent=35 // pred_check_branch
                %263 = sbr.rel target = $region62
              $region61: #{block_forward.9} parent=35 // pred_region
                _
              $region62: #{block_forward.9} parent=35 // pred_fallthru
                _
            $region36: #{block_forward.9} parent=31 // pred_fallthru
              _
            // Predicated region
            $region37: #{block_forward.9} parent=31 // pred_check
              _
            $region38: #{block_forward.9} parent=31 // pred_check_branch
              %142 = sbr.rel target = $region40
            $region39: #{block_forward.9} parent=31 // pred_region
              loop: start=0, step=1, limit=1
              $region41: #{block_forward.9} parent=39 // loop_pre_header
                _
              $region42: #{block_forward.9} parent=39 // loop_header
                %s145 = sphi 0, %s149
                %p146 = scmp.ge.s32.totalorder %s145, 1
                %s150 = sphi %s136, %s136
                %s151 = sphi %s134, %s134
              $region43: #{block_forward.9} parent=39 // loop_header_branch
                %148 = sbr.rel (%p146) target = $region47
              $region44: #{block_forward.9} parent=39 // loop_body
                %v152 = vld [vmem:[%s150] sm:$0xff]
                %153 = vst [vmem:[%s151] sm:$0xff] %v152
                %v154 = vld [vmem:[%s150 + $0x18] sm:$0xff]
                %155 = vst [vmem:[%s151 + $0x8] sm:$0xff] %v154
                %v156 = vld [vmem:[%s150 + $0x30] sm:$0xff]
                %157 = vst [vmem:[%s151 + $0x10] sm:$0xff] %v156
                %v158 = vld [vmem:[%s150 + $0x48] sm:$0xff]
                %159 = vst [vmem:[%s151 + $0x18] sm:$0xff] %v158
                %v160 = vld [vmem:[%s150 + $0x60] sm:$0xff]
                %161 = vst [vmem:[%s151 + $0x20] sm:$0xff] %v160
                %v162 = vld [vmem:[%s150 + $0x78] sm:$0xff]
                %163 = vst [vmem:[%s151 + $0x28] sm:$0xff] %v162
                %v164 = vld [vmem:[%s150 + $0x90] sm:$0xff]
                %165 = vst [vmem:[%s151 + $0x30] sm:$0xff] %v164
                %v166 = vld [vmem:[%s150 + $0xa8] sm:$0xff]
                %167 = vst [vmem:[%s151 + $0x38] sm:$0xff] %v166
                %v168 = vld [vmem:[%s150 + $0xc0] sm:$0xff]
                %169 = vst [vmem:[%s151 + $0x40] sm:$0xff] %v168
                %v170 = vld [vmem:[%s150 + $0xd8] sm:$0xff]
                %171 = vst [vmem:[%s151 + $0x48] sm:$0xff] %v170
                %v172 = vld [vmem:[%s150 + $0xf0] sm:$0xff]
                %173 = vst [vmem:[%s151 + $0x50] sm:$0xff] %v172
                %v174 = vld [vmem:[%s150 + $0x108] sm:$0xff]
                %175 = vst [vmem:[%s151 + $0x58] sm:$0xff] %v174
                %v176 = vld [vmem:[%s150 + $0x120] sm:$0xff]
                %177 = vst [vmem:[%s151 + $0x60] sm:$0xff] %v176
                %v178 = vld [vmem:[%s150 + $0x138] sm:$0xff]
                %179 = vst [vmem:[%s151 + $0x68] sm:$0xff] %v178
                %v180 = vld [vmem:[%s150 + $0x150] sm:$0xff]
                %181 = vst [vmem:[%s151 + $0x70] sm:$0xff] %v180
                %v182 = vld [vmem:[%s150 + $0x168] sm:$0xff]
                %183 = vst [vmem:[%s151 + $0x78] sm:$0xff] %v182
                %v184 = vld [vmem:[%s150 + $0x180] sm:$0xff]
                %185 = vst [vmem:[%s151 + $0x80] sm:$0xff] %v184
                %v186 = vld [vmem:[%s150 + $0x198] sm:$0xff]
                %187 = vst [vmem:[%s151 + $0x88] sm:$0xff] %v186
                %v188 = vld [vmem:[%s150 + $0x1b0] sm:$0xff]
                %189 = vst [vmem:[%s151 + $0x90] sm:$0xff] %v188
                %v190 = vld [vmem:[%s150 + $0x1c8] sm:$0xff]
                %191 = vst [vmem:[%s151 + $0x98] sm:$0xff] %v190
                %v192 = vld [vmem:[%s150 + $0x1e0] sm:$0xff]
                %193 = vst [vmem:[%s151 + $0xa0] sm:$0xff] %v192
                %v194 = vld [vmem:[%s150 + $0x1f8] sm:$0xff]
                %195 = vst [vmem:[%s151 + $0xa8] sm:$0xff] %v194
                %v196 = vld [vmem:[%s150 + $0x210] sm:$0xff]
                %197 = vst [vmem:[%s151 + $0xb0] sm:$0xff] %v196
                %v198 = vld [vmem:[%s150 + $0x228] sm:$0xff]
                %199 = vst [vmem:[%s151 + $0xb8] sm:$0xff] %v198
                %v200 = vld [vmem:[%s150 + $0x240] sm:$0xff]
                %201 = vst [vmem:[%s151 + $0xc0] sm:$0xff] %v200
              $region45: #{block_forward.9} parent=39 // loop_footer
                %s149 = sadd.s32 1, %s145
              $region46: #{block_forward.9} parent=39 // loop_footer_branch
                %144 = sbr.rel target = $region42
              $region47: #{block_forward.9} parent=39 // loop_exit
                _
            $region40: #{block_forward.9} parent=31 // pred_fallthru
              _
          $region32: #{block_forward.9} parent=27 // pred_fallthru
            _
          %264 = vnop
        $region28: #{block_forward.9} parent=23 // pred_fallthru
          _
      $region24: #{block_forward.9} parent=5 // pred_fallthru
        _
      %p265 = scmp.le.s32.totalorder 1, %s9
      %p266 = scmp.lt.s32.totalorder %s9, 4
      %p267 = pnand %p265, %p266
      %p268 = pneg %p267
      // Predicated region
      $region63: #{block_forward.9} parent=5 // pred_check
        _
      $region64: #{block_forward.9} parent=5 // pred_check_branch
        %270 = sbr.rel (%p267) target = $region66
      $region65: #{block_forward.9} parent=5 // pred_region
        %s271 = ssub.s32 %s9, 1
        %s272 = sand.u32 %s43, 1
        %s273 = sand.u32 %s43, 1
        %s274 = smul.addr %s273, 200
        %s275 = scalar_lea.vmem [#allocation2], %s274
        // Predicated region
        $region67: #{block_forward.9} parent=65 // pred_check
          %p276 = pneg %p56
        $region68: #{block_forward.9} parent=65 // pred_check_branch
          %278 = sbr.rel (%p276) target = $region70
        $region69: #{block_forward.9} parent=65 // pred_region
          _
        $region70: #{block_forward.9} parent=65 // pred_fallthru
          _
        %p279 = pneg %p30
        %p280 = pneg %p27
        %s281 = sand.u32 %s43, 1
        %s282 = sand.u32 %s43, 1
        %s283 = smul.addr %s282, 200
        %s284 = scalar_lea.vmem [#allocation2], %s283
        %p285 = pneg %p56
        %p286 = pneg %p53
        %p287 = pneg %p77
        %p288 = pneg %p74
        %p289 = pneg %p103
        %p290 = pneg %p100
        %s291 = sand.u32 %s90, 1
        %s292 = sand.u32 %s90, 1
        %s293 = smul.addr %s292, 16
        %s294 = scalar_lea.vmem [#allocation3], %s293
        %v295 = vld [vmem:[%s0] sm:$0xff]
        %v296 = vld [vmem:[%s0 + $0x8] sm:$0xff]
        %v297 = vld [vmem:[%s0 + $0x10] sm:$0xff]
        %v298 = vld [vmem:[%s0 + $0x18] sm:$0xff]
        %v299 = vld [vmem:[%s275] sm:$0xff]
        %v300 = vld [vmem:[%s275 + $0x8] sm:$0xff]
        %v301 = vld [vmem:[%s275 + $0x10] sm:$0xff]
        %v302 = vld [vmem:[%s275 + $0x18] sm:$0xff]
        %v303 = vld [vmem:[%s275 + $0x20] sm:$0xff]
        %v304 = vld [vmem:[%s275 + $0x28] sm:$0xff]
        %v305 = vld [vmem:[%s275 + $0x30] sm:$0xff]
        %v306 = vld [vmem:[%s275 + $0x38] sm:$0xff]
        %v307 = vld [vmem:[%s275 + $0x40] sm:$0xff]
        %v308 = vld [vmem:[%s275 + $0x48] sm:$0xff]
        %v309 = vld [vmem:[%s275 + $0x50] sm:$0xff]
        %v310 = vld [vmem:[%s275 + $0x58] sm:$0xff]
        %v311 = vld [vmem:[%s275 + $0x60] sm:$0xff]
        %v312 = vld [vmem:[%s275 + $0x68] sm:$0xff]
        %v313 = vld [vmem:[%s275 + $0x70] sm:$0xff]
        %v314 = vld [vmem:[%s275 + $0x78] sm:$0xff]
        %v315 = vld [vmem:[%s275 + $0x80] sm:$0xff]
        %v316 = vld [vmem:[%s275 + $0x88] sm:$0xff]
        %v317 = vld [vmem:[%s275 + $0x90] sm:$0xff]
        %v318 = vld [vmem:[%s275 + $0x98] sm:$0xff]
        %v319 = vld [vmem:[%s275 + $0xa0] sm:$0xff]
        %v320 = vld [vmem:[%s275 + $0xa8] sm:$0xff]
        %v321 = vld [vmem:[%s275 + $0xb0] sm:$0xff]
        %v322 = vld [vmem:[%s275 + $0xb8] sm:$0xff]
        %v323 = vld [vmem:[%s275 + $0xc0] sm:$0xff]
        %v324 = vld [vmem:[%s2] sm:$0xff]
        %v325 = vld [vmem:[%s2 + $0x8] sm:$0xff]
        %327 = vset.pattern.permute.xlu0 0
        %328 = vperm.xlu0 %327, %v324
        %v329 = vpop.permute.xlu0 %328
        %332 = vset.pattern.permute.xlu0 0
        %333 = vperm.xlu0 %332, %v325
        %v334 = vpop.permute.xlu0 %333
        %vm336 = vcmask 588800
        %v338 = vsel %vm336, %v296, 0
        %v341 = vsel %vm336, %v298, 0
        %343 = vmatprep.subr.mxu0 0.0
        %344 = vmatpush1.msra.mxu0 %v299
        %345 = vmatprep.subr.mxu0 0.0
        %346 = vmatpush1.msra.mxu0 %v300
        %347 = vmatprep.subr.mxu0 0.0
        %348 = vmatpush1.msra.mxu0 %v301
        %349 = vmatprep.subr.mxu0 0.0
        %350 = vmatpush1.msra.mxu0 %v302
        %351 = vmatprep.subr.mxu0 0.0
        %352 = vmatpush1.msra.mxu0 %v303
        %353 = vmatprep.subr.mxu0 0.0
        %354 = vmatpush1.msra.mxu0 %v304
        %355 = vmatprep.subr.mxu0 0.0
        %356 = vmatpush1.msra.mxu0 %v305
        %357 = vmatprep.subr.mxu0 0.0
        %358 = vmatpush1.msra.mxu0 %v306
        %359 = vmatprep.subr.mxu0 0.0
        %360 = vmatpush1.msra.mxu0 %v307
        %361 = vmatprep.subr.mxu0 0.0
        %362 = vmatpush1.msra.mxu0 %v308
        %363 = vmatprep.subr.mxu0 0.0
        %364 = vmatpush1.msra.mxu0 %v309
        %365 = vmatprep.subr.mxu0 0.0
        %366 = vmatpush1.msra.mxu0 %v310
        %367 = vmatprep.subr.mxu0 0.0
        %368 = vmatpush1.msra.mxu0 %v311
        %369 = vmatprep.subr.mxu0 0.0
        %370 = vmatpush1.msra.mxu0 %v312
        %371 = vmatprep.subr.mxu0 0.0
        %372 = vmatpush1.msra.mxu0 %v313
        %373 = vmatprep.subr.mxu0 0.0
        %374 = vmatpush1.msra.mxu0 %v314
        %375 = vmatprep.subr.mxu0 0.0
        %376 = vmatpush1.msra.mxu0 %v315
        %377 = vmatprep.subr.mxu0 0.0
        %378 = vmatpush1.msra.mxu0 %v316
        %379 = vmatprep.subr.mxu0 0.0
        %380 = vmatpush1.msra.mxu0 %v317
        %381 = vmatprep.subr.mxu0 0.0
        %382 = vmatpush1.msra.mxu0 %v318
        %383 = vmatprep.subr.mxu0 0.0
        %384 = vmatpush1.msra.mxu0 %v319
        %385 = vmatprep.subr.mxu0 0.0
        %386 = vmatpush1.msra.mxu0 %v320
        %387 = vmatprep.subr.mxu0 0.0
        %388 = vmatpush1.msra.mxu0 %v321
        %389 = vmatprep.subr.mxu0 0.0
        %390 = vmatpush1.msra.mxu0 %v322
        %391 = vmatprep.subr.mxu0 0.0
        %392 = vmatpush1.msra.mxu0 %v323
        %393 = vmatprep.subr.mxu0 0.0
        %394 = vmatpush1.msra.mxu0 0.0
        %395 = vmatprep.subr.mxu0 0.0
        %396 = vmatpush1.msra.mxu0 0.0
        %397 = vmatprep.subr.mxu0 0.0
        %398 = vmatpush1.msra.mxu0 0.0
        %399 = vmatprep.subr.mxu0 0.0
        %400 = vmatpush1.msra.mxu0 0.0
        %401 = vmatprep.subr.mxu0 0.0
        %402 = vmatpush1.msra.mxu0 0.0
        %403 = vmatprep.subr.mxu0 0.0
        %404 = vmatpush1.msra.mxu0 0.0
        %405 = vmatprep.subr.mxu0 0.0
        %406 = vmatpush1.msra.mxu0 0.0
        %407 = vmatprep.mubr.f32.mxu0 %v338
        %408 = vmatmul.mubr.f32.gmra.mrb[0].mxu0 %v295
        %v409 = vpop.f32.mrb[0].mxu0
        %v410 = vadd.f32 %v329, %v409
        %v411 = vpop.f32.mrb[0].mxu0
        %412 = vmatprep.mubr.f32.mxu0 %v341
        %413 = vmatmul.mubr.f32.gmra.mrb[0].mxu0 %v297
        %v414 = vpop.f32.mrb[0].mxu0
        %v415 = vadd.f32 %v334, %v414
        %v416 = vpop.f32.mrb[0].mxu0
        %417 = vdwg.mxu0
        %418 = vst [vmem:[%s294] sm:$0xff] %v410
        %419 = vst [vmem:[%s294 + $0x8] sm:$0xff] %v415
        %s420 = sand.u32 %s90, 1
        %s421 = sand.u32 %s90, 1
        %s422 = smul.addr %s421, 16
        %s423 = scalar_lea.vmem [#allocation3], %s422
        // Predicated region
        $region71: #{block_forward.9} parent=65 // pred_check
          %p424 = pneg %p100
        $region72: #{block_forward.9} parent=65 // pred_check_branch
          %426 = sbr.rel (%p424) target = $region74
        $region73: #{block_forward.9} parent=65 // pred_region
          %s427 = smul.addr %s14, 8
          %s428 = scalar_lea.vmem %s3, %s427
          // Predicated region
          $region75: #{block_forward.9} parent=73 // pred_check
            _
          $region76: #{block_forward.9} parent=73 // pred_check_branch
            %430 = sbr.rel (0) target = $region78
          $region77: #{block_forward.9} parent=73 // pred_region
            // Predicated region
            $region79: #{block_forward.9} parent=77 // pred_check
              _
            $region80: #{block_forward.9} parent=77 // pred_check_branch
              %432 = sbr.rel (0) target = $region82
            $region81: #{block_forward.9} parent=77 // pred_region
              // Predicated region
              $region94: #{block_forward.9} parent=81 // pred_check
                _
              $region95: #{block_forward.9} parent=81 // pred_check_branch
                %449 = sbr.rel (0) target = $region97
              $region96: #{block_forward.9} parent=81 // pred_region
                loop: start=0, step=1, limit=1
                $region98: #{block_forward.9} parent=96 // loop_pre_header
                  _
                $region99: #{block_forward.9} parent=96 // loop_header
                  %s451 = sphi 0, %s455
                  %p452 = scmp.ge.s32.totalorder %s451, 1
                  %s456 = sphi %s423, %s423
                  %s457 = sphi %s428, %s428
                $region100: #{block_forward.9} parent=96 // loop_header_branch
                  %454 = sbr.rel (%p452) target = $region104
                $region101: #{block_forward.9} parent=96 // loop_body
                  %v458 = vld [vmem:[%s456] sm:$0xff]
                  %459 = vst [vmem:[%s457] sm:$0xff] %v458
                  %v460 = vld [vmem:[%s456 + $0x8] sm:$0xff]
                  %461 = vst [vmem:[%s457 + $0x18] sm:$0xff] %v460
                $region102: #{block_forward.9} parent=96 // loop_footer
                  %s455 = sadd.s32 1, %s451
                $region103: #{block_forward.9} parent=96 // loop_footer_branch
                  %450 = sbr.rel target = $region99
                $region104: #{block_forward.9} parent=96 // loop_exit
                  _
              $region97: #{block_forward.9} parent=81 // pred_fallthru
                _
              // Predicated region
              $region105: #{block_forward.9} parent=81 // pred_check
                _
              $region106: #{block_forward.9} parent=81 // pred_check_branch
                %463 = sbr.rel target = $region108
              $region107: #{block_forward.9} parent=81 // pred_region
                _
              $region108: #{block_forward.9} parent=81 // pred_fallthru
                _
            $region82: #{block_forward.9} parent=77 // pred_fallthru
              _
            // Predicated region
            $region83: #{block_forward.9} parent=77 // pred_check
              _
            $region84: #{block_forward.9} parent=77 // pred_check_branch
              %434 = sbr.rel target = $region86
            $region85: #{block_forward.9} parent=77 // pred_region
              loop: start=0, step=1, limit=1
              $region87: #{block_forward.9} parent=85 // loop_pre_header
                _
              $region88: #{block_forward.9} parent=85 // loop_header
                %s437 = sphi 0, %s441
                %p438 = scmp.ge.s32.totalorder %s437, 1
                %s442 = sphi %s423, %s423
                %s443 = sphi %s428, %s428
              $region89: #{block_forward.9} parent=85 // loop_header_branch
                %440 = sbr.rel (%p438) target = $region93
              $region90: #{block_forward.9} parent=85 // loop_body
                %v444 = vld [vmem:[%s442] sm:$0xff]
                %445 = vst [vmem:[%s443] sm:$0xff] %v444
                %v446 = vld [vmem:[%s442 + $0x8] sm:$0xff]
                %447 = vst [vmem:[%s443 + $0x18] sm:$0xff] %v446
              $region91: #{block_forward.9} parent=85 // loop_footer
                %s441 = sadd.s32 1, %s437
              $region92: #{block_forward.9} parent=85 // loop_footer_branch
                %436 = sbr.rel target = $region88
              $region93: #{block_forward.9} parent=85 // loop_exit
                _
            $region86: #{block_forward.9} parent=77 // pred_fallthru
              _
          $region78: #{block_forward.9} parent=73 // pred_fallthru
            _
          %464 = vnop
        $region74: #{block_forward.9} parent=65 // pred_fallthru
          _
      $region66: #{block_forward.9} parent=5 // pred_fallthru
        _
      %p465 = scmp.le.s32.totalorder 2, %s9
      // Predicated region
      $region109: #{block_forward.9} parent=5 // pred_check
        %p466 = pneg %p465
      $region110: #{block_forward.9} parent=5 // pred_check_branch
        %468 = sbr.rel (%p466) target = $region112
      $region111: #{block_forward.9} parent=5 // pred_region
        %s469 = ssub.s32 %s9, 2
        // Predicated region
        $region113: #{block_forward.9} parent=111 // pred_check
          %p470 = pneg %p106
        $region114: #{block_forward.9} parent=111 // pred_check_branch
          %472 = sbr.rel (%p470) target = $region116
        $region115: #{block_forward.9} parent=111 // pred_region
          %s473 = sand.u32 %s91, 1
          %s474 = sand.u32 %s91, 1
          %s475 = smul.addr %s474, 16
          %s476 = scalar_lea.vmem [#allocation3], %s475
        $region116: #{block_forward.9} parent=111 // pred_fallthru
          _
      $region112: #{block_forward.9} parent=5 // pred_fallthru
        _
    $region6: #{block_forward.9} parent=1 // loop_footer
      %s13 = sadd.s32 1, %s9
    $region7: #{block_forward.9} parent=1 // loop_footer_branch
      %8 = sbr.rel target = $region3
    $region8: #{block_forward.9} parent=1 // loop_exit
      _

// kernel: block_forward.10
$region0: #{block_forward.10}
  #allocation0 [shape = 'u32[]', space=smem, size = 0x4, offset = 0x4, fixed_abs, tag = 'smem constant byte address 0x4 - core index']
  #allocation1 [shape = 'u32[144,128]{1,0:T(1,128)}', space=vmem, size = 0x12000, scoped, tag = 'internal scratch']
  %s0 = inlined_call_operand.vmem [shape: f32[8,144], index: 0, kind: input, shape index: {}]
  %s1 = inlined_call_operand.vmem [shape: f32[144,384], index: 1, kind: input, shape index: {}]
  %s2 = inlined_call_operand.vmem [shape: f32[8,1], index: 2, kind: input, shape index: {}]
  %s3 = inlined_call_operand.vmem [shape: f32[8,384], index: 3, kind: output, shape index: {}]
  %s4 = sld [smem:[#allocation0]]
  $region83: #{block_forward.10} parent=0
    _
  %s6 = ssub.s32 1, %s4
  %s7 = scalar_select 0, %s6, %s4
  $region1: #{block_forward.10} parent=0
    #allocation2 [shape = 'u8[147456]{0}', space=vmem, size = 0x24000, scoped, tag = 'input window, operand 1']
    loop: start=0, step=1, limit=5
    $region2: #{block_forward.10} parent=1 // loop_pre_header
      _
    $region3: #{block_forward.10} parent=1 // loop_header
      %s9 = sphi 0, %s13
      %p10 = scmp.ge.s32.totalorder %s9, 5
      %s17 = sphi 0, %s17
      %s19 = sphi 0, %s17
      %s20 = sphi 0, %s19
      %s34 = sphi 0, %s20
      %s40 = sphi 0, %s42
      %s43 = sphi 0, %s40
      %s44 = sphi 0, %s43
      %s60 = sphi 0, %s44
      %s64 = sphi 0, %s64
      %s66 = sphi 0, %s64
      %s67 = sphi 0, %s66
      %s81 = sphi 0, %s67
      %s87 = sphi 0, %s89
      %s90 = sphi 0, %s87
      %s91 = sphi 0, %s90
      %s107 = sphi 0, %s91
    $region4: #{block_forward.10} parent=1 // loop_header_branch
      %12 = sbr.rel (%p10) target = $region8
    $region5: #{block_forward.10} parent=1 // loop_body
      %s14 = ssub.s32 %s9, 1
      %s15 = ssub.s32 %s9, 2
      %s16 = sadd.s32 %s9, 1
      %s18 = sadd.s32 %s17, 1
      %p21 = scmp.eq.s32.totalorder %s9, 2
      %p22 = scmp.ne.s32.totalorder %s17, %s19
      %p23 = scmp.eq.s32.totalorder %s9, 0
      %p24 = por %p22, %p23
      %p25 = scmp.ne.s32.totalorder %s17, %s19
      %p26 = scmp.eq.s32.totalorder %s14, 2
      %p27 = por %p25, %p26
      %p28 = scmp.ne.s32.totalorder %s19, %s20
      %p29 = scmp.eq.s32.totalorder %s14, 0
      %p30 = por %p28, %p29
      %p31 = scmp.ne.s32.totalorder %s19, %s20
      %p32 = scmp.eq.s32.totalorder %s15, 2
      %p33 = por %p31, %p32
      %p35 = scmp.ne.s32.totalorder %s20, %s34
      %p36 = scmp.eq.s32.totalorder %s15, 0
      %p37 = por %p35, %p36
      %s38 = ssub.s32 %s9, %s16
      %p39 = scmp.eq.s32.totalorder %s38, 0
      %s41 = sadd.s32 %s40, 1
      %s42 = scalar_select %p39, %s40, %s41
      %p45 = pneg %p39
      %p46 = scmp.eq.s32.totalorder %s9, 2
      %p47 = por %p45, %p46
      %p48 = scmp.ne.s32.totalorder %s40, %s43
      %p49 = scmp.eq.s32.totalorder %s9, 0
      %p50 = por %p48, %p49
      %p51 = scmp.ne.s32.totalorder %s40, %s43
      %p52 = scmp.eq.s32.totalorder %s14, 2
      %p53 = por %p51, %p52
      %p54 = scmp.ne.s32.totalorder %s43, %s44
      %p55 = scmp.eq.s32.totalorder %s14, 0
      %p56 = por %p54, %p55
      %p57 = scmp.ne.s32.totalorder %s43, %s44
      %p58 = scmp.eq.s32.totalorder %s15, 2
      %p59 = por %p57, %p58
      %p61 = scmp.ne.s32.totalorder %s44, %s60
      %p62 = scmp.eq.s32.totalorder %s15, 0
      %p63 = por %p61, %p62
      %s65 = sadd.s32 %s64, 1
      %p68 = scmp.eq.s32.totalorder %s9, 2
      %p69 = scmp.ne.s32.totalorder %s64, %s66
      %p70 = scmp.eq.s32.totalorder %s9, 0
      %p71 = por %p69, %p70
      %p72 = scmp.ne.s32.totalorder %s64, %s66
      %p73 = scmp.eq.s32.totalorder %s14, 2
      %p74 = por %p72, %p73
      %p75 = scmp.ne.s32.totalorder %s66, %s67
      %p76 = scmp.eq.s32.totalorder %s14, 0
      %p77 = por %p75, %p76
      %p78 = scmp.ne.s32.totalorder %s66, %s67
      %p79 = scmp.eq.s32.totalorder %s15, 2
      %p80 = por %p78, %p79
      %p82 = scmp.ne.s32.totalorder %s67, %s81
      %p83 = scmp.eq.s32.totalorder %s15, 0
      %p84 = por %p82, %p83
      %s85 = ssub.s32 %s9, %s16
      %p86 = scmp.eq.s32.totalorder %s85, 0
      %s88 = sadd.s32 %s87, 1
      %s89 = scalar_select %p86, %s87, %s88
      %p92 = pneg %p86
      %p93 = scmp.eq.s32.totalorder %s9, 2
      %p94 = por %p92, %p93
      %p95 = scmp.ne.s32.totalorder %s87, %s90
      %p96 = scmp.eq.s32.totalorder %s9, 0
      %p97 = por %p95, %p96
      %p98 = scmp.ne.s32.totalorder %s87, %s90
      %p99 = scmp.eq.s32.totalorder %s14, 2
      %p100 = por %p98, %p99
      %p101 = scmp.ne.s32.totalorder %s90, %s91
      %p102 = scmp.eq.s32.totalorder %s14, 0
      %p103 = por %p101, %p102
      %p104 = scmp.ne.s32.totalorder %s90, %s91
      %p105 = scmp.eq.s32.totalorder %s15, 2
      %p106 = por %p104, %p105
      %p108 = scmp.ne.s32.totalorder %s91, %s107
      %p109 = scmp.eq.s32.totalorder %s15, 0
      %p110 = por %p108, %p109
      %p111 = scmp.le.s32.totalorder 1, %s9
      %p112 = scmp.lt.s32.totalorder %s9, 4
      %p113 = pnand %p111, %p112
      %p114 = pneg %p113
      // Predicated region
      $region9: #{block_forward.10} parent=5 // pred_check
        _
      $region10: #{block_forward.10} parent=5 // pred_check_branch
        %116 = sbr.rel (%p113) target = $region12
      $region11: #{block_forward.10} parent=5 // pred_region
        %s117 = ssub.s32 %s9, 1
        // Predicated region
        $region13: #{block_forward.10} parent=11 // pred_check
          %p118 = pneg %p30
        $region14: #{block_forward.10} parent=11 // pred_check_branch
          %120 = sbr.rel (%p118) target = $region16
        $region15: #{block_forward.10} parent=11 // pred_region
          _
        $region16: #{block_forward.10} parent=11 // pred_fallthru
          _
        // Predicated region
        $region17: #{block_forward.10} parent=11 // pred_check
          %p121 = pneg %p77
        $region18: #{block_forward.10} parent=11 // pred_check_branch
          %123 = sbr.rel (%p121) target = $region20
        $region19: #{block_forward.10} parent=11 // pred_region
          _
        $region20: #{block_forward.10} parent=11 // pred_fallthru
          _
      $region12: #{block_forward.10} parent=5 // pred_fallthru
        _
      %p124 = scmp.lt.s32.totalorder %s9, 3
      // Predicated region
      $region21: #{block_forward.10} parent=5 // pred_check
        %p125 = pneg %p124
      $region22: #{block_forward.10} parent=5 // pred_check_branch
        %127 = sbr.rel (%p125) target = $region24
      $region23: #{block_forward.10} parent=5 // pred_region
        // Predicated region
        $region25: #{block_forward.10} parent=23 // pred_check
          %p128 = pneg %p50
        $region26: #{block_forward.10} parent=23 // pred_check_branch
          %130 = sbr.rel (%p128) target = $region28
        $region27: #{block_forward.10} parent=23 // pred_region
          %s131 = sand.u32 %s40, 1
          %s132 = sand.u32 %s40, 1
          %s133 = smul.addr %s132, 144
          %s134 = scalar_lea.vmem [#allocation2], %s133
          %s135 = smul.addr %s9, 8
          %s136 = scalar_lea.vmem %s1, %s135
          // Predicated region
          $region29: #{block_forward.10} parent=27 // pred_check
            _
          $region30: #{block_forward.10} parent=27 // pred_check_branch
            %138 = sbr.rel (0) target = $region32
          $region31: #{block_forward.10} parent=27 // pred_region
            // Predicated region
            $region33: #{block_forward.10} parent=31 // pred_check
              _
            $region34: #{block_forward.10} parent=31 // pred_check_branch
              %140 = sbr.rel (0) target = $region36
            $region35: #{block_forward.10} parent=31 // pred_region
              // Predicated region
              $region48: #{block_forward.10} parent=35 // pred_check
                _
              $region49: #{block_forward.10} parent=35 // pred_check_branch
                %189 = sbr.rel (0) target = $region51
              $region50: #{block_forward.10} parent=35 // pred_region
                loop: start=0, step=1, limit=1
                $region52: #{block_forward.10} parent=50 // loop_pre_header
                  _
                $region53: #{block_forward.10} parent=50 // loop_header
                  %s191 = sphi 0, %s195
                  %p192 = scmp.ge.s32.totalorder %s191, 1
                  %s196 = sphi %s136, %s136
                  %s197 = sphi %s134, %s134
                $region54: #{block_forward.10} parent=50 // loop_header_branch
                  %194 = sbr.rel (%p192) target = $region58
                $region55: #{block_forward.10} parent=50 // loop_body
                  %v198 = vld [vmem:[%s196] sm:$0xff]
                  %199 = vst [vmem:[%s197] sm:$0xff] %v198
                  %v200 = vld [vmem:[%s196 + $0x18] sm:$0xff]
                  %201 = vst [vmem:[%s197 + $0x8] sm:$0xff] %v200
                  %v202 = vld [vmem:[%s196 + $0x30] sm:$0xff]
                  %203 = vst [vmem:[%s197 + $0x10] sm:$0xff] %v202
                  %v204 = vld [vmem:[%s196 + $0x48] sm:$0xff]
                  %205 = vst [vmem:[%s197 + $0x18] sm:$0xff] %v204
                  %v206 = vld [vmem:[%s196 + $0x60] sm:$0xff]
                  %207 = vst [vmem:[%s197 + $0x20] sm:$0xff] %v206
                  %v208 = vld [vmem:[%s196 + $0x78] sm:$0xff]
                  %209 = vst [vmem:[%s197 + $0x28] sm:$0xff] %v208
                  %v210 = vld [vmem:[%s196 + $0x90] sm:$0xff]
                  %211 = vst [vmem:[%s197 + $0x30] sm:$0xff] %v210
                  %v212 = vld [vmem:[%s196 + $0xa8] sm:$0xff]
                  %213 = vst [vmem:[%s197 + $0x38] sm:$0xff] %v212
                  %v214 = vld [vmem:[%s196 + $0xc0] sm:$0xff]
                  %215 = vst [vmem:[%s197 + $0x40] sm:$0xff] %v214
                  %v216 = vld [vmem:[%s196 + $0xd8] sm:$0xff]
                  %217 = vst [vmem:[%s197 + $0x48] sm:$0xff] %v216
                  %v218 = vld [vmem:[%s196 + $0xf0] sm:$0xff]
                  %219 = vst [vmem:[%s197 + $0x50] sm:$0xff] %v218
                  %v220 = vld [vmem:[%s196 + $0x108] sm:$0xff]
                  %221 = vst [vmem:[%s197 + $0x58] sm:$0xff] %v220
                  %v222 = vld [vmem:[%s196 + $0x120] sm:$0xff]
                  %223 = vst [vmem:[%s197 + $0x60] sm:$0xff] %v222
                  %v224 = vld [vmem:[%s196 + $0x138] sm:$0xff]
                  %225 = vst [vmem:[%s197 + $0x68] sm:$0xff] %v224
                  %v226 = vld [vmem:[%s196 + $0x150] sm:$0xff]
                  %227 = vst [vmem:[%s197 + $0x70] sm:$0xff] %v226
                  %v228 = vld [vmem:[%s196 + $0x168] sm:$0xff]
                  %229 = vst [vmem:[%s197 + $0x78] sm:$0xff] %v228
                  %v230 = vld [vmem:[%s196 + $0x180] sm:$0xff]
                  %231 = vst [vmem:[%s197 + $0x80] sm:$0xff] %v230
                  %v232 = vld [vmem:[%s196 + $0x198] sm:$0xff]
                  %233 = vst [vmem:[%s197 + $0x88] sm:$0xff] %v232
                $region56: #{block_forward.10} parent=50 // loop_footer
                  %s195 = sadd.s32 1, %s191
                $region57: #{block_forward.10} parent=50 // loop_footer_branch
                  %190 = sbr.rel target = $region53
                $region58: #{block_forward.10} parent=50 // loop_exit
                  _
              $region51: #{block_forward.10} parent=35 // pred_fallthru
                _
              // Predicated region
              $region59: #{block_forward.10} parent=35 // pred_check
                _
              $region60: #{block_forward.10} parent=35 // pred_check_branch
                %235 = sbr.rel target = $region62
              $region61: #{block_forward.10} parent=35 // pred_region
                _
              $region62: #{block_forward.10} parent=35 // pred_fallthru
                _
            $region36: #{block_forward.10} parent=31 // pred_fallthru
              _
            // Predicated region
            $region37: #{block_forward.10} parent=31 // pred_check
              _
            $region38: #{block_forward.10} parent=31 // pred_check_branch
              %142 = sbr.rel target = $region40
            $region39: #{block_forward.10} parent=31 // pred_region
              loop: start=0, step=1, limit=1
              $region41: #{block_forward.10} parent=39 // loop_pre_header
                _
              $region42: #{block_forward.10} parent=39 // loop_header
                %s145 = sphi 0, %s149
                %p146 = scmp.ge.s32.totalorder %s145, 1
                %s150 = sphi %s136, %s136
                %s151 = sphi %s134, %s134
              $region43: #{block_forward.10} parent=39 // loop_header_branch
                %148 = sbr.rel (%p146) target = $region47
              $region44: #{block_forward.10} parent=39 // loop_body
                %v152 = vld [vmem:[%s150] sm:$0xff]
                %153 = vst [vmem:[%s151] sm:$0xff] %v152
                %v154 = vld [vmem:[%s150 + $0x18] sm:$0xff]
                %155 = vst [vmem:[%s151 + $0x8] sm:$0xff] %v154
                %v156 = vld [vmem:[%s150 + $0x30] sm:$0xff]
                %157 = vst [vmem:[%s151 + $0x10] sm:$0xff] %v156
                %v158 = vld [vmem:[%s150 + $0x48] sm:$0xff]
                %159 = vst [vmem:[%s151 + $0x18] sm:$0xff] %v158
                %v160 = vld [vmem:[%s150 + $0x60] sm:$0xff]
                %161 = vst [vmem:[%s151 + $0x20] sm:$0xff] %v160
                %v162 = vld [vmem:[%s150 + $0x78] sm:$0xff]
                %163 = vst [vmem:[%s151 + $0x28] sm:$0xff] %v162
                %v164 = vld [vmem:[%s150 + $0x90] sm:$0xff]
                %165 = vst [vmem:[%s151 + $0x30] sm:$0xff] %v164
                %v166 = vld [vmem:[%s150 + $0xa8] sm:$0xff]
                %167 = vst [vmem:[%s151 + $0x38] sm:$0xff] %v166
                %v168 = vld [vmem:[%s150 + $0xc0] sm:$0xff]
                %169 = vst [vmem:[%s151 + $0x40] sm:$0xff] %v168
                %v170 = vld [vmem:[%s150 + $0xd8] sm:$0xff]
                %171 = vst [vmem:[%s151 + $0x48] sm:$0xff] %v170
                %v172 = vld [vmem:[%s150 + $0xf0] sm:$0xff]
                %173 = vst [vmem:[%s151 + $0x50] sm:$0xff] %v172
                %v174 = vld [vmem:[%s150 + $0x108] sm:$0xff]
                %175 = vst [vmem:[%s151 + $0x58] sm:$0xff] %v174
                %v176 = vld [vmem:[%s150 + $0x120] sm:$0xff]
                %177 = vst [vmem:[%s151 + $0x60] sm:$0xff] %v176
                %v178 = vld [vmem:[%s150 + $0x138] sm:$0xff]
                %179 = vst [vmem:[%s151 + $0x68] sm:$0xff] %v178
                %v180 = vld [vmem:[%s150 + $0x150] sm:$0xff]
                %181 = vst [vmem:[%s151 + $0x70] sm:$0xff] %v180
                %v182 = vld [vmem:[%s150 + $0x168] sm:$0xff]
                %183 = vst [vmem:[%s151 + $0x78] sm:$0xff] %v182
                %v184 = vld [vmem:[%s150 + $0x180] sm:$0xff]
                %185 = vst [vmem:[%s151 + $0x80] sm:$0xff] %v184
                %v186 = vld [vmem:[%s150 + $0x198] sm:$0xff]
                %187 = vst [vmem:[%s151 + $0x88] sm:$0xff] %v186
              $region45: #{block_forward.10} parent=39 // loop_footer
                %s149 = sadd.s32 1, %s145
              $region46: #{block_forward.10} parent=39 // loop_footer_branch
                %144 = sbr.rel target = $region42
              $region47: #{block_forward.10} parent=39 // loop_exit
                _
            $region40: #{block_forward.10} parent=31 // pred_fallthru
              _
          $region32: #{block_forward.10} parent=27 // pred_fallthru
            _
          %236 = vnop
        $region28: #{block_forward.10} parent=23 // pred_fallthru
          _
      $region24: #{block_forward.10} parent=5 // pred_fallthru
        _
      %p237 = scmp.le.s32.totalorder 1, %s9
      %p238 = scmp.lt.s32.totalorder %s9, 4
      %p239 = pnand %p237, %p238
      %p240 = pneg %p239
      // Predicated region
      $region63: #{block_forward.10} parent=5 // pred_check
        _
      $region64: #{block_forward.10} parent=5 // pred_check_branch
        %242 = sbr.rel (%p239) target = $region66
      $region65: #{block_forward.10} parent=5 // pred_region
        %s243 = ssub.s32 %s9, 1
        %s244 = sand.u32 %s43, 1
        %s245 = sand.u32 %s43, 1
        %s246 = smul.addr %s245, 144
        %s247 = scalar_lea.vmem [#allocation2], %s246
        // Predicated region
        $region67: #{block_forward.10} parent=65 // pred_check
          %p248 = pneg %p56
        $region68: #{block_forward.10} parent=65 // pred_check_branch
          %250 = sbr.rel (%p248) target = $region70
        $region69: #{block_forward.10} parent=65 // pred_region
          _
        $region70: #{block_forward.10} parent=65 // pred_fallthru
          _
        %p251 = pneg %p30
        %p252 = pneg %p27
        %s253 = sand.u32 %s43, 1
        %s254 = sand.u32 %s43, 1
        %s255 = smul.addr %s254, 144
        %s256 = scalar_lea.vmem [#allocation2], %s255
        %p257 = pneg %p56
        %p258 = pneg %p53
        %p259 = pneg %p77
        %p260 = pneg %p74
        %p261 = pneg %p103
        %p262 = pneg %p100
        %p263 = scmp.lt.s32.totalorder %s14, 2
        %s264 = scalar_select %p263, %s14, 2
        %s265 = smul.addr %s264, 8
        %s266 = scalar_lea.vmem %s3, %s265
        %p267 = scmp.lt.s32.totalorder %s14, 2
        %s268 = scalar_select %p267, %s14, 2
        %s269 = smul.addr %s268, 8
        %s270 = scalar_lea.vmem %s3, %s269
        %v271 = vld [vmem:[%s0] sm:$0xff]
        %v272 = vld [vmem:[%s0 + $0x8] sm:$0xff]
        %v273 = vld [vmem:[%s247] sm:$0xff]
        %v274 = vld [vmem:[%s247 + $0x8] sm:$0xff]
        %v275 = vld [vmem:[%s247 + $0x10] sm:$0xff]
        %v276 = vld [vmem:[%s247 + $0x18] sm:$0xff]
        %v277 = vld [vmem:[%s247 + $0x20] sm:$0xff]
        %v278 = vld [vmem:[%s247 + $0x28] sm:$0xff]
        %v279 = vld [vmem:[%s247 + $0x30] sm:$0xff]
        %v280 = vld [vmem:[%s247 + $0x38] sm:$0xff]
        %v281 = vld [vmem:[%s247 + $0x40] sm:$0xff]
        %v282 = vld [vmem:[%s247 + $0x48] sm:$0xff]
        %v283 = vld [vmem:[%s247 + $0x50] sm:$0xff]
        %v284 = vld [vmem:[%s247 + $0x58] sm:$0xff]
        %v285 = vld [vmem:[%s247 + $0x60] sm:$0xff]
        %v286 = vld [vmem:[%s247 + $0x68] sm:$0xff]
        %v287 = vld [vmem:[%s247 + $0x70] sm:$0xff]
        %v288 = vld [vmem:[%s247 + $0x78] sm:$0xff]
        %v289 = vld [vmem:[%s247 + $0x80] sm:$0xff]
        %v290 = vld [vmem:[%s247 + $0x88] sm:$0xff]
        %v291 = vld [vmem:[%s2] sm:$0xff]
        %293 = vset.pattern.permute.xlu0 0
        %294 = vperm.xlu0 %293, %v291
        %v295 = vpop.permute.xlu0 %294
        %vm297 = vcmask 130048
        %v299 = vsel %vm297, %v272, 0
        %301 = vmatprep.subr.mxu0 0.0
        %302 = vmatpush1.msra.mxu0 %v273
        %303 = vmatprep.subr.mxu0 0.0
        %304 = vmatpush1.msra.mxu0 %v274
        %305 = vmatprep.subr.mxu0 0.0
        %306 = vmatpush1.msra.mxu0 %v275
        %307 = vmatprep.subr.mxu0 0.0
        %308 = vmatpush1.msra.mxu0 %v276
        %309 = vmatprep.subr.mxu0 0.0
        %310 = vmatpush1.msra.mxu0 %v277
        %311 = vmatprep.subr.mxu0 0.0
        %312 = vmatpush1.msra.mxu0 %v278
        %313 = vmatprep.subr.mxu0 0.0
        %314 = vmatpush1.msra.mxu0 %v279
        %315 = vmatprep.subr.mxu0 0.0
        %316 = vmatpush1.msra.mxu0 %v280
        %317 = vmatprep.subr.mxu0 0.0
        %318 = vmatpush1.msra.mxu0 %v281
        %319 = vmatprep.subr.mxu0 0.0
        %320 = vmatpush1.msra.mxu0 %v282
        %321 = vmatprep.subr.mxu0 0.0
        %322 = vmatpush1.msra.mxu0 %v283
        %323 = vmatprep.subr.mxu0 0.0
        %324 = vmatpush1.msra.mxu0 %v284
        %325 = vmatprep.subr.mxu0 0.0
        %326 = vmatpush1.msra.mxu0 %v285
        %327 = vmatprep.subr.mxu0 0.0
        %328 = vmatpush1.msra.mxu0 %v286
        %329 = vmatprep.subr.mxu0 0.0
        %330 = vmatpush1.msra.mxu0 %v287
        %331 = vmatprep.subr.mxu0 0.0
        %332 = vmatpush1.msra.mxu0 %v288
        %333 = vmatprep.subr.mxu0 0.0
        %334 = vmatpush1.msra.mxu0 %v289
        %335 = vmatprep.subr.mxu0 0.0
        %336 = vmatpush1.msra.mxu0 %v290
        %337 = vmatprep.subr.mxu0 0.0
        %338 = vmatpush1.msra.mxu0 0.0
        %339 = vmatprep.subr.mxu0 0.0
        %340 = vmatpush1.msra.mxu0 0.0
        %341 = vmatprep.subr.mxu0 0.0
        %342 = vmatpush1.msra.mxu0 0.0
        %343 = vmatprep.subr.mxu0 0.0
        %344 = vmatpush1.msra.mxu0 0.0
        %345 = vmatprep.subr.mxu0 0.0
        %346 = vmatpush1.msra.mxu0 0.0
        %347 = vmatprep.subr.mxu0 0.0
        %348 = vmatpush1.msra.mxu0 0.0
        %349 = vmatprep.subr.mxu0 0.0
        %350 = vmatpush1.msra.mxu0 0.0
        %351 = vmatprep.subr.mxu0 0.0
        %352 = vmatpush1.msra.mxu0 0.0
        %353 = vmatprep.subr.mxu0 0.0
        %354 = vmatpush1.msra.mxu0 0.0
        %355 = vmatprep.subr.mxu0 0.0
        %356 = vmatpush1.msra.mxu0 0.0
        %357 = vmatprep.subr.mxu0 0.0
        %358 = vmatpush1.msra.mxu0 0.0
        %359 = vmatprep.subr.mxu0 0.0
        %360 = vmatpush1.msra.mxu0 0.0
        %361 = vmatprep.subr.mxu0 0.0
        %362 = vmatpush1.msra.mxu0 0.0
        %363 = vmatprep.subr.mxu0 0.0
        %364 = vmatpush1.msra.mxu0 0.0
        %365 = vmatprep.mubr.f32.mxu0 %v299
        %366 = vmatmul.mubr.f32.gmra.mrb[0].mxu0 %v271
        %v367 = vpop.f32.mrb[0].mxu0
        %v368 = vadd.f32 %v295, %v367
        %v369 = vpop.f32.mrb[0].mxu0
        %370 = vdwg.mxu0
        %v371 = vmax.f32 %v368, 0.0
        %372 = vst [vmem:[%s270] sm:$0xff] %v371
        %p373 = scmp.lt.s32.totalorder %s14, 2
        %s374 = scalar_select %p373, %s14, 2
        %s375 = smul.addr %s374, 8
        %s376 = scalar_lea.vmem %s3, %s375
        // Predicated region
        $region71: #{block_forward.10} parent=65 // pred_check
          %p377 = pneg %p100
        $region72: #{block_forward.10} parent=65 // pred_check_branch
          %379 = sbr.rel (%p377) target = $region74
        $region73: #{block_forward.10} parent=65 // pred_region
          _
        $region74: #{block_forward.10} parent=65 // pred_fallthru
          _
      $region66: #{block_forward.10} parent=5 // pred_fallthru
        _
      %p380 = scmp.le.s32.totalorder 2, %s9
      // Predicated region
      $region75: #{block_forward.10} parent=5 // pred_check
        %p381 = pneg %p380
      $region76: #{block_forward.10} parent=5 // pred_check_branch
        %383 = sbr.rel (%p381) target = $region78
      $region77: #{block_forward.10} parent=5 // pred_region
        %s384 = ssub.s32 %s9, 2
        // Predicated region
        $region79: #{block_forward.10} parent=77 // pred_check
          %p385 = pneg %p106
        $region80: #{block_forward.10} parent=77 // pred_check_branch
          %387 = sbr.rel (%p385) target = $region82
        $region81: #{block_forward.10} parent=77 // pred_region
          %p388 = scmp.lt.s32.totalorder %s15, 2
          %s389 = scalar_select %p388, %s15, 2
          %s390 = smul.addr %s389, 8
          %s391 = scalar_lea.vmem %s3, %s390
        $region82: #{block_forward.10} parent=77 // pred_fallthru
          _
      $region78: #{block_forward.10} parent=5 // pred_fallthru
        _
    $region6: #{block_forward.10} parent=1 // loop_footer
      %s13 = sadd.s32 1, %s9
    $region7: #{block_forward.10} parent=1 // loop_footer_branch
      %8 = sbr.rel target = $region3
    $region8: #{block_forward.10} parent=1 // loop_exit
      _

// kernel: block_forward.11
$region0: #{block_forward.11}
  #allocation0 [shape = 'u32[]', space=smem, size = 0x4, offset = 0x4, fixed_abs, tag = 'smem constant byte address 0x4 - core index']
  #allocation1 [shape = 'u32[144,128]{1,0:T(1,128)}', space=vmem, size = 0x12000, scoped, tag = 'internal scratch']
  %s0 = inlined_call_operand.vmem [shape: f32[8,216], index: 0, kind: input, shape index: {}]
  %s1 = inlined_call_operand.vmem [shape: f32[216,384], index: 1, kind: input, shape index: {}]
  %s2 = inlined_call_operand.vmem [shape: f32[8,1], index: 2, kind: input, shape index: {}]
  %s3 = inlined_call_operand.vmem [shape: f32[8,384], index: 3, kind: output, shape index: {}]
  %s4 = sld [smem:[#allocation0]]
  $region83: #{block_forward.11} parent=0
    _
  %s6 = ssub.s32 1, %s4
  %s7 = scalar_select 0, %s6, %s4
  $region1: #{block_forward.11} parent=0
    #allocation2 [shape = 'u8[221184]{0}', space=vmem, size = 0x36000, scoped, tag = 'input window, operand 1']
    loop: start=0, step=1, limit=5
    $region2: #{block_forward.11} parent=1 // loop_pre_header
      _
    $region3: #{block_forward.11} parent=1 // loop_header
      %s9 = sphi 0, %s13
      %p10 = scmp.ge.s32.totalorder %s9, 5
      %s17 = sphi 0, %s17
      %s19 = sphi 0, %s17
      %s20 = sphi 0, %s19
      %s34 = sphi 0, %s20
      %s40 = sphi 0, %s42
      %s43 = sphi 0, %s40
      %s44 = sphi 0, %s43
      %s60 = sphi 0, %s44
      %s64 = sphi 0, %s64
      %s66 = sphi 0, %s64
      %s67 = sphi 0, %s66
      %s81 = sphi 0, %s67
      %s87 = sphi 0, %s89
      %s90 = sphi 0, %s87
      %s91 = sphi 0, %s90
      %s107 = sphi 0, %s91
    $region4: #{block_forward.11} parent=1 // loop_header_branch
      %12 = sbr.rel (%p10) target = $region8
    $region5: #{block_forward.11} parent=1 // loop_body
      %s14 = ssub.s32 %s9, 1
      %s15 = ssub.s32 %s9, 2
      %s16 = sadd.s32 %s9, 1
      %s18 = sadd.s32 %s17, 1
      %p21 = scmp.eq.s32.totalorder %s9, 2
      %p22 = scmp.ne.s32.totalorder %s17, %s19
      %p23 = scmp.eq.s32.totalorder %s9, 0
      %p24 = por %p22, %p23
      %p25 = scmp.ne.s32.totalorder %s17, %s19
      %p26 = scmp.eq.s32.totalorder %s14, 2
      %p27 = por %p25, %p26
      %p28 = scmp.ne.s32.totalorder %s19, %s20
      %p29 = scmp.eq.s32.totalorder %s14, 0
      %p30 = por %p28, %p29
      %p31 = scmp.ne.s32.totalorder %s19, %s20
      %p32 = scmp.eq.s32.totalorder %s15, 2
      %p33 = por %p31, %p32
      %p35 = scmp.ne.s32.totalorder %s20, %s34
      %p36 = scmp.eq.s32.totalorder %s15, 0
      %p37 = por %p35, %p36
      %s38 = ssub.s32 %s9, %s16
      %p39 = scmp.eq.s32.totalorder %s38, 0
      %s41 = sadd.s32 %s40, 1
      %s42 = scalar_select %p39, %s40, %s41
      %p45 = pneg %p39
      %p46 = scmp.eq.s32.totalorder %s9, 2
      %p47 = por %p45, %p46
      %p48 = scmp.ne.s32.totalorder %s40, %s43
      %p49 = scmp.eq.s32.totalorder %s9, 0
      %p50 = por %p48, %p49
      %p51 = scmp.ne.s32.totalorder %s40, %s43
      %p52 = scmp.eq.s32.totalorder %s14, 2
      %p53 = por %p51, %p52
      %p54 = scmp.ne.s32.totalorder %s43, %s44
      %p55 = scmp.eq.s32.totalorder %s14, 0
      %p56 = por %p54, %p55
      %p57 = scmp.ne.s32.totalorder %s43, %s44
      %p58 = scmp.eq.s32.totalorder %s15, 2
      %p59 = por %p57, %p58
      %p61 = scmp.ne.s32.totalorder %s44, %s60
      %p62 = scmp.eq.s32.totalorder %s15, 0
      %p63 = por %p61, %p62
      %s65 = sadd.s32 %s64, 1
      %p68 = scmp.eq.s32.totalorder %s9, 2
      %p69 = scmp.ne.s32.totalorder %s64, %s66
      %p70 = scmp.eq.s32.totalorder %s9, 0
      %p71 = por %p69, %p70
      %p72 = scmp.ne.s32.totalorder %s64, %s66
      %p73 = scmp.eq.s32.totalorder %s14, 2
      %p74 = por %p72, %p73
      %p75 = scmp.ne.s32.totalorder %s66, %s67
      %p76 = scmp.eq.s32.totalorder %s14, 0
      %p77 = por %p75, %p76
      %p78 = scmp.ne.s32.totalorder %s66, %s67
      %p79 = scmp.eq.s32.totalorder %s15, 2
      %p80 = por %p78, %p79
      %p82 = scmp.ne.s32.totalorder %s67, %s81
      %p83 = scmp.eq.s32.totalorder %s15, 0
      %p84 = por %p82, %p83
      %s85 = ssub.s32 %s9, %s16
      %p86 = scmp.eq.s32.totalorder %s85, 0
      %s88 = sadd.s32 %s87, 1
      %s89 = scalar_select %p86, %s87, %s88
      %p92 = pneg %p86
      %p93 = scmp.eq.s32.totalorder %s9, 2
      %p94 = por %p92, %p93
      %p95 = scmp.ne.s32.totalorder %s87, %s90
      %p96 = scmp.eq.s32.totalorder %s9, 0
      %p97 = por %p95, %p96
      %p98 = scmp.ne.s32.totalorder %s87, %s90
      %p99 = scmp.eq.s32.totalorder %s14, 2
      %p100 = por %p98, %p99
      %p101 = scmp.ne.s32.totalorder %s90, %s91
      %p102 = scmp.eq.s32.totalorder %s14, 0
      %p103 = por %p101, %p102
      %p104 = scmp.ne.s32.totalorder %s90, %s91
      %p105 = scmp.eq.s32.totalorder %s15, 2
      %p106 = por %p104, %p105
      %p108 = scmp.ne.s32.totalorder %s91, %s107
      %p109 = scmp.eq.s32.totalorder %s15, 0
      %p110 = por %p108, %p109
      %p111 = scmp.le.s32.totalorder 1, %s9
      %p112 = scmp.lt.s32.totalorder %s9, 4
      %p113 = pnand %p111, %p112
      %p114 = pneg %p113
      // Predicated region
      $region9: #{block_forward.11} parent=5 // pred_check
        _
      $region10: #{block_forward.11} parent=5 // pred_check_branch
        %116 = sbr.rel (%p113) target = $region12
      $region11: #{block_forward.11} parent=5 // pred_region
        %s117 = ssub.s32 %s9, 1
        // Predicated region
        $region13: #{block_forward.11} parent=11 // pred_check
          %p118 = pneg %p30
        $region14: #{block_forward.11} parent=11 // pred_check_branch
          %120 = sbr.rel (%p118) target = $region16
        $region15: #{block_forward.11} parent=11 // pred_region
          _
        $region16: #{block_forward.11} parent=11 // pred_fallthru
          _
        // Predicated region
        $region17: #{block_forward.11} parent=11 // pred_check
          %p121 = pneg %p77
        $region18: #{block_forward.11} parent=11 // pred_check_branch
          %123 = sbr.rel (%p121) target = $region20
        $region19: #{block_forward.11} parent=11 // pred_region
          _
        $region20: #{block_forward.11} parent=11 // pred_fallthru
          _
      $region12: #{block_forward.11} parent=5 // pred_fallthru
        _
      %p124 = scmp.lt.s32.totalorder %s9, 3
      // Predicated region
      $region21: #{block_forward.11} parent=5 // pred_check
        %p125 = pneg %p124
      $region22: #{block_forward.11} parent=5 // pred_check_branch
        %127 = sbr.rel (%p125) target = $region24
      $region23: #{block_forward.11} parent=5 // pred_region
        // Predicated region
        $region25: #{block_forward.11} parent=23 // pred_check
          %p128 = pneg %p50
        $region26: #{block_forward.11} parent=23 // pred_check_branch
          %130 = sbr.rel (%p128) target = $region28
        $region27: #{block_forward.11} parent=23 // pred_region
          %s131 = sand.u32 %s40, 1
          %s132 = sand.u32 %s40, 1
          %s133 = smul.addr %s132, 216
          %s134 = scalar_lea.vmem [#allocation2], %s133
          %s135 = smul.addr %s9, 8
          %s136 = scalar_lea.vmem %s1, %s135
          // Predicated region
          $region29: #{block_forward.11} parent=27 // pred_check
            _
          $region30: #{block_forward.11} parent=27 // pred_check_branch
            %138 = sbr.rel (0) target = $region32
          $region31: #{block_forward.11} parent=27 // pred_region
            // Predicated region
            $region33: #{block_forward.11} parent=31 // pred_check
              _
            $region34: #{block_forward.11} parent=31 // pred_check_branch
              %140 = sbr.rel (0) target = $region36
            $region35: #{block_forward.11} parent=31 // pred_region
              // Predicated region
              $region48: #{block_forward.11} parent=35 // pred_check
                _
              $region49: #{block_forward.11} parent=35 // pred_check_branch
                %207 = sbr.rel (0) target = $region51
              $region50: #{block_forward.11} parent=35 // pred_region
                loop: start=0, step=1, limit=1
                $region52: #{block_forward.11} parent=50 // loop_pre_header
                  _
                $region53: #{block_forward.11} parent=50 // loop_header
                  %s209 = sphi 0, %s213
                  %p210 = scmp.ge.s32.totalorder %s209, 1
                  %s214 = sphi %s136, %s136
                  %s215 = sphi %s134, %s134
                $region54: #{block_forward.11} parent=50 // loop_header_branch
                  %212 = sbr.rel (%p210) target = $region58
                $region55: #{block_forward.11} parent=50 // loop_body
                  %v216 = vld [vmem:[%s214] sm:$0xff]
                  %217 = vst [vmem:[%s215] sm:$0xff] %v216
                  %v218 = vld [vmem:[%s214 + $0x18] sm:$0xff]
                  %219 = vst [vmem:[%s215 + $0x8] sm:$0xff] %v218
                  %v220 = vld [vmem:[%s214 + $0x30] sm:$0xff]
                  %221 = vst [vmem:[%s215 + $0x10] sm:$0xff] %v220
                  %v222 = vld [vmem:[%s214 + $0x48] sm:$0xff]
                  %223 = vst [vmem:[%s215 + $0x18] sm:$0xff] %v222
                  %v224 = vld [vmem:[%s214 + $0x60] sm:$0xff]
                  %225 = vst [vmem:[%s215 + $0x20] sm:$0xff] %v224
                  %v226 = vld [vmem:[%s214 + $0x78] sm:$0xff]
                  %227 = vst [vmem:[%s215 + $0x28] sm:$0xff] %v226
                  %v228 = vld [vmem:[%s214 + $0x90] sm:$0xff]
                  %229 = vst [vmem:[%s215 + $0x30] sm:$0xff] %v228
                  %v230 = vld [vmem:[%s214 + $0xa8] sm:$0xff]
                  %231 = vst [vmem:[%s215 + $0x38] sm:$0xff] %v230
                  %v232 = vld [vmem:[%s214 + $0xc0] sm:$0xff]
                  %233 = vst [vmem:[%s215 + $0x40] sm:$0xff] %v232
                  %v234 = vld [vmem:[%s214 + $0xd8] sm:$0xff]
                  %235 = vst [vmem:[%s215 + $0x48] sm:$0xff] %v234
                  %v236 = vld [vmem:[%s214 + $0xf0] sm:$0xff]
                  %237 = vst [vmem:[%s215 + $0x50] sm:$0xff] %v236
                  %v238 = vld [vmem:[%s214 + $0x108] sm:$0xff]
                  %239 = vst [vmem:[%s215 + $0x58] sm:$0xff] %v238
                  %v240 = vld [vmem:[%s214 + $0x120] sm:$0xff]
                  %241 = vst [vmem:[%s215 + $0x60] sm:$0xff] %v240
                  %v242 = vld [vmem:[%s214 + $0x138] sm:$0xff]
                  %243 = vst [vmem:[%s215 + $0x68] sm:$0xff] %v242
                  %v244 = vld [vmem:[%s214 + $0x150] sm:$0xff]
                  %245 = vst [vmem:[%s215 + $0x70] sm:$0xff] %v244
                  %v246 = vld [vmem:[%s214 + $0x168] sm:$0xff]
                  %247 = vst [vmem:[%s215 + $0x78] sm:$0xff] %v246
                  %v248 = vld [vmem:[%s214 + $0x180] sm:$0xff]
                  %249 = vst [vmem:[%s215 + $0x80] sm:$0xff] %v248
                  %v250 = vld [vmem:[%s214 + $0x198] sm:$0xff]
                  %251 = vst [vmem:[%s215 + $0x88] sm:$0xff] %v250
                  %v252 = vld [vmem:[%s214 + $0x1b0] sm:$0xff]
                  %253 = vst [vmem:[%s215 + $0x90] sm:$0xff] %v252
                  %v254 = vld [vmem:[%s214 + $0x1c8] sm:$0xff]
                  %255 = vst [vmem:[%s215 + $0x98] sm:$0xff] %v254
                  %v256 = vld [vmem:[%s214 + $0x1e0] sm:$0xff]
                  %257 = vst [vmem:[%s215 + $0xa0] sm:$0xff] %v256
                  %v258 = vld [vmem:[%s214 + $0x1f8] sm:$0xff]
                  %259 = vst [vmem:[%s215 + $0xa8] sm:$0xff] %v258
                  %v260 = vld [vmem:[%s214 + $0x210] sm:$0xff]
                  %261 = vst [vmem:[%s215 + $0xb0] sm:$0xff] %v260
                  %v262 = vld [vmem:[%s214 + $0x228] sm:$0xff]
                  %263 = vst [vmem:[%s215 + $0xb8] sm:$0xff] %v262
                  %v264 = vld [vmem:[%s214 + $0x240] sm:$0xff]
                  %265 = vst [vmem:[%s215 + $0xc0] sm:$0xff] %v264
                  %v266 = vld [vmem:[%s214 + $0x258] sm:$0xff]
                  %267 = vst [vmem:[%s215 + $0xc8] sm:$0xff] %v266
                  %v268 = vld [vmem:[%s214 + $0x270] sm:$0xff]
                  %269 = vst [vmem:[%s215 + $0xd0] sm:$0xff] %v268
                $region56: #{block_forward.11} parent=50 // loop_footer
                  %s213 = sadd.s32 1, %s209
                $region57: #{block_forward.11} parent=50 // loop_footer_branch
                  %208 = sbr.rel target = $region53
                $region58: #{block_forward.11} parent=50 // loop_exit
                  _
              $region51: #{block_forward.11} parent=35 // pred_fallthru
                _
              // Predicated region
              $region59: #{block_forward.11} parent=35 // pred_check
                _
              $region60: #{block_forward.11} parent=35 // pred_check_branch
                %271 = sbr.rel target = $region62
              $region61: #{block_forward.11} parent=35 // pred_region
                _
              $region62: #{block_forward.11} parent=35 // pred_fallthru
                _
            $region36: #{block_forward.11} parent=31 // pred_fallthru
              _
            // Predicated region
            $region37: #{block_forward.11} parent=31 // pred_check
              _
            $region38: #{block_forward.11} parent=31 // pred_check_branch
              %142 = sbr.rel target = $region40
            $region39: #{block_forward.11} parent=31 // pred_region
              loop: start=0, step=1, limit=1
              $region41: #{block_forward.11} parent=39 // loop_pre_header
                _
              $region42: #{block_forward.11} parent=39 // loop_header
                %s145 = sphi 0, %s149
                %p146 = scmp.ge.s32.totalorder %s145, 1
                %s150 = sphi %s136, %s136
                %s151 = sphi %s134, %s134
              $region43: #{block_forward.11} parent=39 // loop_header_branch
                %148 = sbr.rel (%p146) target = $region47
              $region44: #{block_forward.11} parent=39 // loop_body
                %v152 = vld [vmem:[%s150] sm:$0xff]
                %153 = vst [vmem:[%s151] sm:$0xff] %v152
                %v154 = vld [vmem:[%s150 + $0x18] sm:$0xff]
                %155 = vst [vmem:[%s151 + $0x8] sm:$0xff] %v154
                %v156 = vld [vmem:[%s150 + $0x30] sm:$0xff]
                %157 = vst [vmem:[%s151 + $0x10] sm:$0xff] %v156
                %v158 = vld [vmem:[%s150 + $0x48] sm:$0xff]
                %159 = vst [vmem:[%s151 + $0x18] sm:$0xff] %v158
                %v160 = vld [vmem:[%s150 + $0x60] sm:$0xff]
                %161 = vst [vmem:[%s151 + $0x20] sm:$0xff] %v160
                %v162 = vld [vmem:[%s150 + $0x78] sm:$0xff]
                %163 = vst [vmem:[%s151 + $0x28] sm:$0xff] %v162
                %v164 = vld [vmem:[%s150 + $0x90] sm:$0xff]
                %165 = vst [vmem:[%s151 + $0x30] sm:$0xff] %v164
                %v166 = vld [vmem:[%s150 + $0xa8] sm:$0xff]
                %167 = vst [vmem:[%s151 + $0x38] sm:$0xff] %v166
                %v168 = vld [vmem:[%s150 + $0xc0] sm:$0xff]
                %169 = vst [vmem:[%s151 + $0x40] sm:$0xff] %v168
                %v170 = vld [vmem:[%s150 + $0xd8] sm:$0xff]
                %171 = vst [vmem:[%s151 + $0x48] sm:$0xff] %v170
                %v172 = vld [vmem:[%s150 + $0xf0] sm:$0xff]
                %173 = vst [vmem:[%s151 + $0x50] sm:$0xff] %v172
                %v174 = vld [vmem:[%s150 + $0x108] sm:$0xff]
                %175 = vst [vmem:[%s151 + $0x58] sm:$0xff] %v174
                %v176 = vld [vmem:[%s150 + $0x120] sm:$0xff]
                %177 = vst [vmem:[%s151 + $0x60] sm:$0xff] %v176
                %v178 = vld [vmem:[%s150 + $0x138] sm:$0xff]
                %179 = vst [vmem:[%s151 + $0x68] sm:$0xff] %v178
                %v180 = vld [vmem:[%s150 + $0x150] sm:$0xff]
                %181 = vst [vmem:[%s151 + $0x70] sm:$0xff] %v180
                %v182 = vld [vmem:[%s150 + $0x168] sm:$0xff]
                %183 = vst [vmem:[%s151 + $0x78] sm:$0xff] %v182
                %v184 = vld [vmem:[%s150 + $0x180] sm:$0xff]
                %185 = vst [vmem:[%s151 + $0x80] sm:$0xff] %v184
                %v186 = vld [vmem:[%s150 + $0x198] sm:$0xff]
                %187 = vst [vmem:[%s151 + $0x88] sm:$0xff] %v186
                %v188 = vld [vmem:[%s150 + $0x1b0] sm:$0xff]
                %189 = vst [vmem:[%s151 + $0x90] sm:$0xff] %v188
                %v190 = vld [vmem:[%s150 + $0x1c8] sm:$0xff]
                %191 = vst [vmem:[%s151 + $0x98] sm:$0xff] %v190
                %v192 = vld [vmem:[%s150 + $0x1e0] sm:$0xff]
                %193 = vst [vmem:[%s151 + $0xa0] sm:$0xff] %v192
                %v194 = vld [vmem:[%s150 + $0x1f8] sm:$0xff]
                %195 = vst [vmem:[%s151 + $0xa8] sm:$0xff] %v194
                %v196 = vld [vmem:[%s150 + $0x210] sm:$0xff]
                %197 = vst [vmem:[%s151 + $0xb0] sm:$0xff] %v196
                %v198 = vld [vmem:[%s150 + $0x228] sm:$0xff]
                %199 = vst [vmem:[%s151 + $0xb8] sm:$0xff] %v198
                %v200 = vld [vmem:[%s150 + $0x240] sm:$0xff]
                %201 = vst [vmem:[%s151 + $0xc0] sm:$0xff] %v200
                %v202 = vld [vmem:[%s150 + $0x258] sm:$0xff]
                %203 = vst [vmem:[%s151 + $0xc8] sm:$0xff] %v202
                %v204 = vld [vmem:[%s150 + $0x270] sm:$0xff]
                %205 = vst [vmem:[%s151 + $0xd0] sm:$0xff] %v204
              $region45: #{block_forward.11} parent=39 // loop_footer
                %s149 = sadd.s32 1, %s145
              $region46: #{block_forward.11} parent=39 // loop_footer_branch
                %144 = sbr.rel target = $region42
              $region47: #{block_forward.11} parent=39 // loop_exit
                _
            $region40: #{block_forward.11} parent=31 // pred_fallthru
              _
          $region32: #{block_forward.11} parent=27 // pred_fallthru
            _
          %272 = vnop
        $region28: #{block_forward.11} parent=23 // pred_fallthru
          _
      $region24: #{block_forward.11} parent=5 // pred_fallthru
        _
      %p273 = scmp.le.s32.totalorder 1, %s9
      %p274 = scmp.lt.s32.totalorder %s9, 4
      %p275 = pnand %p273, %p274
      %p276 = pneg %p275
      // Predicated region
      $region63: #{block_forward.11} parent=5 // pred_check
        _
      $region64: #{block_forward.11} parent=5 // pred_check_branch
        %278 = sbr.rel (%p275) target = $region66
      $region65: #{block_forward.11} parent=5 // pred_region
        %s279 = ssub.s32 %s9, 1
        %s280 = sand.u32 %s43, 1
        %s281 = sand.u32 %s43, 1
        %s282 = smul.addr %s281, 216
        %s283 = scalar_lea.vmem [#allocation2], %s282
        // Predicated region
        $region67: #{block_forward.11} parent=65 // pred_check
          %p284 = pneg %p56
        $region68: #{block_forward.11} parent=65 // pred_check_branch
          %286 = sbr.rel (%p284) target = $region70
        $region69: #{block_forward.11} parent=65 // pred_region
          _
        $region70: #{block_forward.11} parent=65 // pred_fallthru
          _
        %p287 = pneg %p30
        %p288 = pneg %p27
        %s289 = sand.u32 %s43, 1
        %s290 = sand.u32 %s43, 1
        %s291 = smul.addr %s290, 216
        %s292 = scalar_lea.vmem [#allocation2], %s291
        %p293 = pneg %p56
        %p294 = pneg %p53
        %p295 = pneg %p77
        %p296 = pneg %p74
        %p297 = pneg %p103
        %p298 = pneg %p100
        %p299 = scmp.lt.s32.totalorder %s14, 2
        %s300 = scalar_select %p299, %s14, 2
        %s301 = smul.addr %s300, 8
        %s302 = scalar_lea.vmem %s3, %s301
        %p303 = scmp.lt.s32.totalorder %s14, 2
        %s304 = scalar_select %p303, %s14, 2
        %s305 = smul.addr %s304, 8
        %s306 = scalar_lea.vmem %s3, %s305
        %v307 = vld [vmem:[%s0] sm:$0xff]
        %v308 = vld [vmem:[%s0 + $0x8] sm:$0xff]
        %v309 = vld [vmem:[%s283] sm:$0xff]
        %v310 = vld [vmem:[%s283 + $0x8] sm:$0xff]
        %v311 = vld [vmem:[%s283 + $0x10] sm:$0xff]
        %v312 = vld [vmem:[%s283 + $0x18] sm:$0xff]
        %v313 = vld [vmem:[%s283 + $0x20] sm:$0xff]
        %v314 = vld [vmem:[%s283 + $0x28] sm:$0xff]
        %v315 = vld [vmem:[%s283 + $0x30] sm:$0xff]
        %v316 = vld [vmem:[%s283 + $0x38] sm:$0xff]
        %v317 = vld [vmem:[%s283 + $0x40] sm:$0xff]
        %v318 = vld [vmem:[%s283 + $0x48] sm:$0xff]
        %v319 = vld [vmem:[%s283 + $0x50] sm:$0xff]
        %v320 = vld [vmem:[%s283 + $0x58] sm:$0xff]
        %v321 = vld [vmem:[%s283 + $0x60] sm:$0xff]
        %v322 = vld [vmem:[%s283 + $0x68] sm:$0xff]
        %v323 = vld [vmem:[%s283 + $0x70] sm:$0xff]
        %v324 = vld [vmem:[%s283 + $0x78] sm:$0xff]
        %v325 = vld [vmem:[%s283 + $0x80] sm:$0xff]
        %v326 = vld [vmem:[%s283 + $0x88] sm:$0xff]
        %v327 = vld [vmem:[%s283 + $0x90] sm:$0xff]
        %v328 = vld [vmem:[%s283 + $0x98] sm:$0xff]
        %v329 = vld [vmem:[%s283 + $0xa0] sm:$0xff]
        %v330 = vld [vmem:[%s283 + $0xa8] sm:$0xff]
        %v331 = vld [vmem:[%s283 + $0xb0] sm:$0xff]
        %v332 = vld [vmem:[%s283 + $0xb8] sm:$0xff]
        %v333 = vld [vmem:[%s283 + $0xc0] sm:$0xff]
        %v334 = vld [vmem:[%s283 + $0xc8] sm:$0xff]
        %v335 = vld [vmem:[%s283 + $0xd0] sm:$0xff]
        %v336 = vld [vmem:[%s2] sm:$0xff]
        %338 = vset.pattern.permute.xlu0 0
        %339 = vperm.xlu0 %338, %v336
        %v340 = vpop.permute.xlu0 %339
        %vm342 = vcmask 719872
        %v344 = vsel %vm342, %v308, 0
        %346 = vmatprep.subr.mxu0 0.0
        %347 = vmatpush1.msra.mxu0 %v309
        %348 = vmatprep.subr.mxu0 0.0
        %349 = vmatpush1.msra.mxu0 %v310
        %350 = vmatprep.subr.mxu0 0.0
        %351 = vmatpush1.msra.mxu0 %v311
        %352 = vmatprep.subr.mxu0 0.0
        %353 = vmatpush1.msra.mxu0 %v312
        %354 = vmatprep.subr.mxu0 0.0
        %355 = vmatpush1.msra.mxu0 %v313
        %356 = vmatprep.subr.mxu0 0.0
        %357 = vmatpush1.msra.mxu0 %v314
        %358 = vmatprep.subr.mxu0 0.0
        %359 = vmatpush1.msra.mxu0 %v315
        %360 = vmatprep.subr.mxu0 0.0
        %361 = vmatpush1.msra.mxu0 %v316
        %362 = vmatprep.subr.mxu0 0.0
        %363 = vmatpush1.msra.mxu0 %v317
        %364 = vmatprep.subr.mxu0 0.0
        %365 = vmatpush1.msra.mxu0 %v318
        %366 = vmatprep.subr.mxu0 0.0
        %367 = vmatpush1.msra.mxu0 %v319
        %368 = vmatprep.subr.mxu0 0.0
        %369 = vmatpush1.msra.mxu0 %v320
        %370 = vmatprep.subr.mxu0 0.0
        %371 = vmatpush1.msra.mxu0 %v321
        %372 = vmatprep.subr.mxu0 0.0
        %373 = vmatpush1.msra.mxu0 %v322
        %374 = vmatprep.subr.mxu0 0.0
        %375 = vmatpush1.msra.mxu0 %v323
        %376 = vmatprep.subr.mxu0 0.0
        %377 = vmatpush1.msra.mxu0 %v324
        %378 = vmatprep.subr.mxu0 0.0
        %379 = vmatpush1.msra.mxu0 %v325
        %380 = vmatprep.subr.mxu0 0.0
        %381 = vmatpush1.msra.mxu0 %v326
        %382 = vmatprep.subr.mxu0 0.0
        %383 = vmatpush1.msra.mxu0 %v327
        %384 = vmatprep.subr.mxu0 0.0
        %385 = vmatpush1.msra.mxu0 %v328
        %386 = vmatprep.subr.mxu0 0.0
        %387 = vmatpush1.msra.mxu0 %v329
        %388 = vmatprep.subr.mxu0 0.0
        %389 = vmatpush1.msra.mxu0 %v330
        %390 = vmatprep.subr.mxu0 0.0
        %391 = vmatpush1.msra.mxu0 %v331
        %392 = vmatprep.subr.mxu0 0.0
        %393 = vmatpush1.msra.mxu0 %v332
        %394 = vmatprep.subr.mxu0 0.0
        %395 = vmatpush1.msra.mxu0 %v333
        %396 = vmatprep.subr.mxu0 0.0
        %397 = vmatpush1.msra.mxu0 %v334
        %398 = vmatprep.subr.mxu0 0.0
        %399 = vmatpush1.msra.mxu0 %v335
        %400 = vmatprep.subr.mxu0 0.0
        %401 = vmatpush1.msra.mxu0 0.0
        %402 = vmatprep.subr.mxu0 0.0
        %403 = vmatpush1.msra.mxu0 0.0
        %404 = vmatprep.subr.mxu0 0.0
        %405 = vmatpush1.msra.mxu0 0.0
        %406 = vmatprep.subr.mxu0 0.0
        %407 = vmatpush1.msra.mxu0 0.0
        %408 = vmatprep.subr.mxu0 0.0
        %409 = vmatpush1.msra.mxu0 0.0
        %410 = vmatprep.mubr.f32.mxu0 %v344
        %411 = vmatmul.mubr.f32.gmra.mrb[0].mxu0 %v307
        %v412 = vpop.f32.mrb[0].mxu0
        %v413 = vadd.f32 %v340, %v412
        %v414 = vpop.f32.mrb[0].mxu0
        %415 = vdwg.mxu0
        %v416 = vmax.f32 %v413, 0.0
        %417 = vst [vmem:[%s306] sm:$0xff] %v416
        %p418 = scmp.lt.s32.totalorder %s14, 2
        %s419 = scalar_select %p418, %s14, 2
        %s420 = smul.addr %s419, 8
        %s421 = scalar_lea.vmem %s3, %s420
        // Predicated region
        $region71: #{block_forward.11} parent=65 // pred_check
          %p422 = pneg %p100
        $region72: #{block_forward.11} parent=65 // pred_check_branch
          %424 = sbr.rel (%p422) target = $region74
        $region73: #{block_forward.11} parent=65 // pred_region
          _
        $region74: #{block_forward.11} parent=65 // pred_fallthru
          _
      $region66: #{block_forward.11} parent=5 // pred_fallthru
        _
      %p425 = scmp.le.s32.totalorder 2, %s9
      // Predicated region
      $region75: #{block_forward.11} parent=5 // pred_check
        %p426 = pneg %p425
      $region76: #{block_forward.11} parent=5 // pred_check_branch
        %428 = sbr.rel (%p426) target = $region78
      $region77: #{block_forward.11} parent=5 // pred_region
        %s429 = ssub.s32 %s9, 2
        // Predicated region
        $region79: #{block_forward.11} parent=77 // pred_check
          %p430 = pneg %p106
        $region80: #{block_forward.11} parent=77 // pred_check_branch
          %432 = sbr.rel (%p430) target = $region82
        $region81: #{block_forward.11} parent=77 // pred_region
          %p433 = scmp.lt.s32.totalorder %s15, 2
          %s434 = scalar_select %p433, %s15, 2
          %s435 = smul.addr %s434, 8
          %s436 = scalar_lea.vmem %s3, %s435
        $region82: #{block_forward.11} parent=77 // pred_fallthru
          _
      $region78: #{block_forward.11} parent=5 // pred_fallthru
        _
    $region6: #{block_forward.11} parent=1 // loop_footer
      %s13 = sadd.s32 1, %s9
    $region7: #{block_forward.11} parent=1 // loop_footer_branch
      %8 = sbr.rel target = $region3
    $region8: #{block_forward.11} parent=1 // loop_exit
      _

// kernel: block_forward.13
$region0: #{block_forward.13}
  #allocation0 [shape = 'u32[]', space=smem, size = 0x4, offset = 0x4, fixed_abs, tag = 'smem constant byte address 0x4 - core index']
  #allocation1 [shape = 'u32[144,128]{1,0:T(1,128)}', space=vmem, size = 0x12000, scoped, tag = 'internal scratch']
  %s0 = inlined_call_operand.vmem [shape: f32[16,40], index: 0, kind: input, shape index: {}]
  %s1 = inlined_call_operand.vmem [shape: f32[40,384], index: 1, kind: input, shape index: {}]
  %s2 = inlined_call_operand.vmem [shape: f32[16,1], index: 2, kind: input, shape index: {}]
  %s3 = inlined_call_operand.vmem [shape: f32[16,384], index: 3, kind: input, shape index: {}]
  %s4 = inlined_call_operand.vmem [shape: f32[16,384], index: 4, kind: output, shape index: {}]
  %s5 = sld [smem:[#allocation0]]
  $region159: #{block_forward.13} parent=0
    _
  %s7 = ssub.s32 1, %s5
  %s8 = scalar_select 0, %s7, %s5
  $region1: #{block_forward.13} parent=0
    #allocation2 [shape = 'u8[40960]{0}', space=vmem, size = 0xa000, scoped, tag = 'input window, operand 1']
    #allocation3 [shape = 'u8[16384]{0}', space=vmem, size = 0x4000, scoped, tag = 'input window, operand 3']
    #allocation4 [shape = 'u8[16384]{0}', space=vmem, size = 0x4000, scoped, tag = 'output window, operand 0']
    loop: start=0, step=1, limit=5
    $region2: #{block_forward.13} parent=1 // loop_pre_header
      _
    $region3: #{block_forward.13} parent=1 // loop_header
      %s10 = sphi 0, %s14
      %p11 = scmp.ge.s32.totalorder %s10, 5
      %s18 = sphi 0, %s18
      %s20 = sphi 0, %s18
      %s21 = sphi 0, %s20
      %s35 = sphi 0, %s21
      %s41 = sphi 0, %s43
      %s44 = sphi 0, %s41
      %s45 = sphi 0, %s44
      %s61 = sphi 0, %s45
      %s65 = sphi 0, %s65
      %s67 = sphi 0, %s65
      %s68 = sphi 0, %s67
      %s82 = sphi 0, %s68
      %s88 = sphi 0, %s90
      %s91 = sphi 0, %s88
      %s92 = sphi 0, %s91
      %s108 = sphi 0, %s92
      %s114 = sphi 0, %s116
      %s117 = sphi 0, %s114
      %s118 = sphi 0, %s117
      %s134 = sphi 0, %s118
    $region4: #{block_forward.13} parent=1 // loop_header_branch
      %13 = sbr.rel (%p11) target = $region8
    $region5: #{block_forward.13} parent=1 // loop_body
      %s15 = ssub.s32 %s10, 1
      %s16 = ssub.s32 %s10, 2
      %s17 = sadd.s32 %s10, 1
      %s19 = sadd.s32 %s18, 1
      %p22 = scmp.eq.s32.totalorder %s10, 2
      %p23 = scmp.ne.s32.totalorder %s18, %s20
      %p24 = scmp.eq.s32.totalorder %s10, 0
      %p25 = por %p23, %p24
      %p26 = scmp.ne.s32.totalorder %s18, %s20
      %p27 = scmp.eq.s32.totalorder %s15, 2
      %p28 = por %p26, %p27
      %p29 = scmp.ne.s32.totalorder %s20, %s21
      %p30 = scmp.eq.s32.totalorder %s15, 0
      %p31 = por %p29, %p30
      %p32 = scmp.ne.s32.totalorder %s20, %s21
      %p33 = scmp.eq.s32.totalorder %s16, 2
      %p34 = por %p32, %p33
      %p36 = scmp.ne.s32.totalorder %s21, %s35
      %p37 = scmp.eq.s32.totalorder %s16, 0
      %p38 = por %p36, %p37
      %s39 = ssub.s32 %s10, %s17
      %p40 = scmp.eq.s32.totalorder %s39, 0
      %s42 = sadd.s32 %s41, 1
      %s43 = scalar_select %p40, %s41, %s42
      %p46 = pneg %p40
      %p47 = scmp.eq.s32.totalorder %s10, 2
      %p48 = por %p46, %p47
      %p49 = scmp.ne.s32.totalorder %s41, %s44
      %p50 = scmp.eq.s32.totalorder %s10, 0
      %p51 = por %p49, %p50
      %p52 = scmp.ne.s32.totalorder %s41, %s44
      %p53 = scmp.eq.s32.totalorder %s15, 2
      %p54 = por %p52, %p53
      %p55 = scmp.ne.s32.totalorder %s44, %s45
      %p56 = scmp.eq.s32.totalorder %s15, 0
      %p57 = por %p55, %p56
      %p58 = scmp.ne.s32.totalorder %s44, %s45
      %p59 = scmp.eq.s32.totalorder %s16, 2
      %p60 = por %p58, %p59
      %p62 = scmp.ne.s32.totalorder %s45, %s61
      %p63 = scmp.eq.s32.totalorder %s16, 0
      %p64 = por %p62, %p63
      %s66 = sadd.s32 %s65, 1
      %p69 = scmp.eq.s32.totalorder %s10, 2
      %p70 = scmp.ne.s32.totalorder %s65, %s67
      %p71 = scmp.eq.s32.totalorder %s10, 0
      %p72 = por %p70, %p71
      %p73 = scmp.ne.s32.totalorder %s65, %s67
      %p74 = scmp.eq.s32.totalorder %s15, 2
      %p75 = por %p73, %p74
      %p76 = scmp.ne.s32.totalorder %s67, %s68
      %p77 = scmp.eq.s32.totalorder %s15, 0
      %p78 = por %p76, %p77
      %p79 = scmp.ne.s32.totalorder %s67, %s68
      %p80 = scmp.eq.s32.totalorder %s16, 2
      %p81 = por %p79, %p80
      %p83 = scmp.ne.s32.totalorder %s68, %s82
      %p84 = scmp.eq.s32.totalorder %s16, 0
      %p85 = por %p83, %p84
      %s86 = ssub.s32 %s10, %s17
      %p87 = scmp.eq.s32.totalorder %s86, 0
      %s89 = sadd.s32 %s88, 1
      %s90 = scalar_select %p87, %s88, %s89
      %p93 = pneg %p87
      %p94 = scmp.eq.s32.totalorder %s10, 2
      %p95 = por %p93, %p94
      %p96 = scmp.ne.s32.totalorder %s88, %s91
      %p97 = scmp.eq.s32.totalorder %s10, 0
      %p98 = por %p96, %p97
      %p99 = scmp.ne.s32.totalorder %s88, %s91
      %p100 = scmp.eq.s32.totalorder %s15, 2
      %p101 = por %p99, %p100
      %p102 = scmp.ne.s32.totalorder %s91, %s92
      %p103 = scmp.eq.s32.totalorder %s15, 0
      %p104 = por %p102, %p103
      %p105 = scmp.ne.s32.totalorder %s91, %s92
      %p106 = scmp.eq.s32.totalorder %s16, 2
      %p107 = por %p105, %p106
      %p109 = scmp.ne.s32.totalorder %s92, %s108
      %p110 = scmp.eq.s32.totalorder %s16, 0
      %p111 = por %p109, %p110
      %s112 = ssub.s32 %s10, %s17
      %p113 = scmp.eq.s32.totalorder %s112, 0
      %s115 = sadd.s32 %s114, 1
      %s116 = scalar_select %p113, %s114, %s115
      %p119 = pneg %p113
      %p120 = scmp.eq.s32.totalorder %s10, 2
      %p121 = por %p119, %p120
      %p122 = scmp.ne.s32.totalorder %s114, %s117
      %p123 = scmp.eq.s32.totalorder %s10, 0
      %p124 = por %p122, %p123
      %p125 = scmp.ne.s32.totalorder %s114, %s117
      %p126 = scmp.eq.s32.totalorder %s15, 2
      %p127 = por %p125, %p126
      %p128 = scmp.ne.s32.totalorder %s117, %s118
      %p129 = scmp.eq.s32.totalorder %s15, 0
      %p130 = por %p128, %p129
      %p131 = scmp.ne.s32.totalorder %s117, %s118
      %p132 = scmp.eq.s32.totalorder %s16, 2
      %p133 = por %p131, %p132
      %p135 = scmp.ne.s32.totalorder %s118, %s134
      %p136 = scmp.eq.s32.totalorder %s16, 0
      %p137 = por %p135, %p136
      %p138 = scmp.le.s32.totalorder 1, %s10
      %p139 = scmp.lt.s32.totalorder %s10, 4
      %p140 = pnand %p138, %p139
      %p141 = pneg %p140
      // Predicated region
      $region9: #{block_forward.13} parent=5 // pred_check
        _
      $region10: #{block_forward.13} parent=5 // pred_check_branch
        %143 = sbr.rel (%p140) target = $region12
      $region11: #{block_forward.13} parent=5 // pred_region
        %s144 = ssub.s32 %s10, 1
        // Predicated region
        $region13: #{block_forward.13} parent=11 // pred_check
          %p145 = pneg %p31
        $region14: #{block_forward.13} parent=11 // pred_check_branch
          %147 = sbr.rel (%p145) target = $region16
        $region15: #{block_forward.13} parent=11 // pred_region
          _
        $region16: #{block_forward.13} parent=11 // pred_fallthru
          _
        // Predicated region
        $region17: #{block_forward.13} parent=11 // pred_check
          %p148 = pneg %p78
        $region18: #{block_forward.13} parent=11 // pred_check_branch
          %150 = sbr.rel (%p148) target = $region20
        $region19: #{block_forward.13} parent=11 // pred_region
          _
        $region20: #{block_forward.13} parent=11 // pred_fallthru
          _
      $region12: #{block_forward.13} parent=5 // pred_fallthru
        _
      %p151 = scmp.lt.s32.totalorder %s10, 3
      // Predicated region
      $region21: #{block_forward.13} parent=5 // pred_check
        %p152 = pneg %p151
      $region22: #{block_forward.13} parent=5 // pred_check_branch
        %154 = sbr.rel (%p152) target = $region24
      $region23: #{block_forward.13} parent=5 // pred_region
        // Predicated region
        $region25: #{block_forward.13} parent=23 // pred_check
          %p155 = pneg %p51
        $region26: #{block_forward.13} parent=23 // pred_check_branch
          %157 = sbr.rel (%p155) target = $region28
        $region27: #{block_forward.13} parent=23 // pred_region
          %s158 = sand.u32 %s41, 1
          %s159 = sand.u32 %s41, 1
          %s160 = smul.addr %s159, 40
          %s161 = scalar_lea.vmem [#allocation2], %s160
          %s162 = smul.addr %s10, 8
          %s163 = scalar_lea.vmem %s1, %s162
          // Predicated region
          $region29: #{block_forward.13} parent=27 // pred_check
            _
          $region30: #{block_forward.13} parent=27 // pred_check_branch
            %165 = sbr.rel (0) target = $region32
          $region31: #{block_forward.13} parent=27 // pred_region
            // Predicated region
            $region33: #{block_forward.13} parent=31 // pred_check
              _
            $region34: #{block_forward.13} parent=31 // pred_check_branch
              %167 = sbr.rel (0) target = $region36
            $region35: #{block_forward.13} parent=31 // pred_region
              // Predicated region
              $region48: #{block_forward.13} parent=35 // pred_check
                _
              $region49: #{block_forward.13} parent=35 // pred_check_branch
                %190 = sbr.rel (0) target = $region51
              $region50: #{block_forward.13} parent=35 // pred_region
                loop: start=0, step=1, limit=1
                $region52: #{block_forward.13} parent=50 // loop_pre_header
                  _
                $region53: #{block_forward.13} parent=50 // loop_header
                  %s192 = sphi 0, %s196
                  %p193 = scmp.ge.s32.totalorder %s192, 1
                  %s197 = sphi %s163, %s163
                  %s198 = sphi %s161, %s161
                $region54: #{block_forward.13} parent=50 // loop_header_branch
                  %195 = sbr.rel (%p193) target = $region58
                $region55: #{block_forward.13} parent=50 // loop_body
                  %v199 = vld [vmem:[%s197] sm:$0xff]
                  %200 = vst [vmem:[%s198] sm:$0xff] %v199
                  %v201 = vld [vmem:[%s197 + $0x18] sm:$0xff]
                  %202 = vst [vmem:[%s198 + $0x8] sm:$0xff] %v201
                  %v203 = vld [vmem:[%s197 + $0x30] sm:$0xff]
                  %204 = vst [vmem:[%s198 + $0x10] sm:$0xff] %v203
                  %v205 = vld [vmem:[%s197 + $0x48] sm:$0xff]
                  %206 = vst [vmem:[%s198 + $0x18] sm:$0xff] %v205
                  %v207 = vld [vmem:[%s197 + $0x60] sm:$0xff]
                  %208 = vst [vmem:[%s198 + $0x20] sm:$0xff] %v207
                $region56: #{block_forward.13} parent=50 // loop_footer
                  %s196 = sadd.s32 1, %s192
                $region57: #{block_forward.13} parent=50 // loop_footer_branch
                  %191 = sbr.rel target = $region53
                $region58: #{block_forward.13} parent=50 // loop_exit
                  _
              $region51: #{block_forward.13} parent=35 // pred_fallthru
                _
              // Predicated region
              $region59: #{block_forward.13} parent=35 // pred_check
                _
              $region60: #{block_forward.13} parent=35 // pred_check_branch
                %210 = sbr.rel target = $region62
              $region61: #{block_forward.13} parent=35 // pred_region
                _
              $region62: #{block_forward.13} parent=35 // pred_fallthru
                _
            $region36: #{block_forward.13} parent=31 // pred_fallthru
              _
            // Predicated region
            $region37: #{block_forward.13} parent=31 // pred_check
              _
            $region38: #{block_forward.13} parent=31 // pred_check_branch
              %169 = sbr.rel target = $region40
            $region39: #{block_forward.13} parent=31 // pred_region
              loop: start=0, step=1, limit=1
              $region41: #{block_forward.13} parent=39 // loop_pre_header
                _
              $region42: #{block_forward.13} parent=39 // loop_header
                %s172 = sphi 0, %s176
                %p173 = scmp.ge.s32.totalorder %s172, 1
                %s177 = sphi %s163, %s163
                %s178 = sphi %s161, %s161
              $region43: #{block_forward.13} parent=39 // loop_header_branch
                %175 = sbr.rel (%p173) target = $region47
              $region44: #{block_forward.13} parent=39 // loop_body
                %v179 = vld [vmem:[%s177] sm:$0xff]
                %180 = vst [vmem:[%s178] sm:$0xff] %v179
                %v181 = vld [vmem:[%s177 + $0x18] sm:$0xff]
                %182 = vst [vmem:[%s178 + $0x8] sm:$0xff] %v181
                %v183 = vld [vmem:[%s177 + $0x30] sm:$0xff]
                %184 = vst [vmem:[%s178 + $0x10] sm:$0xff] %v183
                %v185 = vld [vmem:[%s177 + $0x48] sm:$0xff]
                %186 = vst [vmem:[%s178 + $0x18] sm:$0xff] %v185
                %v187 = vld [vmem:[%s177 + $0x60] sm:$0xff]
                %188 = vst [vmem:[%s178 + $0x20] sm:$0xff] %v187
              $region45: #{block_forward.13} parent=39 // loop_footer
                %s176 = sadd.s32 1, %s172
              $region46: #{block_forward.13} parent=39 // loop_footer_branch
                %171 = sbr.rel target = $region42
              $region47: #{block_forward.13} parent=39 // loop_exit
                _
            $region40: #{block_forward.13} parent=31 // pred_fallthru
              _
          $region32: #{block_forward.13} parent=27 // pred_fallthru
            _
          %211 = vnop
        $region28: #{block_forward.13} parent=23 // pred_fallthru
          _
        // Predicated region
        $region63: #{block_forward.13} parent=23 // pred_check
          %p212 = pneg %p98
        $region64: #{block_forward.13} parent=23 // pred_check_branch
          %214 = sbr.rel (%p212) target = $region66
        $region65: #{block_forward.13} parent=23 // pred_region
          %s215 = sand.u32 %s88, 1
          %s216 = sand.u32 %s88, 1
          %s217 = smul.addr %s216, 16
          %s218 = scalar_lea.vmem [#allocation3], %s217
          %s219 = smul.addr %s10, 8
          %s220 = scalar_lea.vmem %s3, %s219
          // Predicated region
          $region67: #{block_forward.13} parent=65 // pred_check
            _
          $region68: #{block_forward.13} parent=65 // pred_check_branch
            %222 = sbr.rel (0) target = $region70
          $region69: #{block_forward.13} parent=65 // pred_region
            // Predicated region
            $region71: #{block_forward.13} parent=69 // pred_check
              _
            $region72: #{block_forward.13} parent=69 // pred_check_branch
              %224 = sbr.rel (0) target = $region74
            $region73: #{block_forward.13} parent=69 // pred_region
              // Predicated region
              $region86: #{block_forward.13} parent=73 // pred_check
                _
              $region87: #{block_forward.13} parent=73 // pred_check_branch
                %241 = sbr.rel (0) target = $region89
              $region88: #{block_forward.13} parent=73 // pred_region
                loop: start=0, step=1, limit=1
                $region90: #{block_forward.13} parent=88 // loop_pre_header
                  _
                $region91: #{block_forward.13} parent=88 // loop_header
                  %s243 = sphi 0, %s247
                  %p244 = scmp.ge.s32.totalorder %s243, 1
                  %s248 = sphi %s220, %s220
                  %s249 = sphi %s218, %s218
                $region92: #{block_forward.13} parent=88 // loop_header_branch
                  %246 = sbr.rel (%p244) target = $region96
                $region93: #{block_forward.13} parent=88 // loop_body
                  %v250 = vld [vmem:[%s248] sm:$0xff]
                  %251 = vst [vmem:[%s249] sm:$0xff] %v250
                  %v252 = vld [vmem:[%s248 + $0x18] sm:$0xff]
                  %253 = vst [vmem:[%s249 + $0x8] sm:$0xff] %v252
                $region94: #{block_forward.13} parent=88 // loop_footer
                  %s247 = sadd.s32 1, %s243
                $region95: #{block_forward.13} parent=88 // loop_footer_branch
                  %242 = sbr.rel target = $region91
                $region96: #{block_forward.13} parent=88 // loop_exit
                  _
              $region89: #{block_forward.13} parent=73 // pred_fallthru
                _
              // Predicated region
              $region97: #{block_forward.13} parent=73 // pred_check
                _
              $region98: #{block_forward.13} parent=73 // pred_check_branch
                %255 = sbr.rel target = $region100
              $region99: #{block_forward.13} parent=73 // pred_region
                _
              $region100: #{block_forward.13} parent=73 // pred_fallthru
                _
            $region74: #{block_forward.13} parent=69 // pred_fallthru
              _
            // Predicated region
            $region75: #{block_forward.13} parent=69 // pred_check
              _
            $region76: #{block_forward.13} parent=69 // pred_check_branch
              %226 = sbr.rel target = $region78
            $region77: #{block_forward.13} parent=69 // pred_region
              loop: start=0, step=1, limit=1
              $region79: #{block_forward.13} parent=77 // loop_pre_header
                _
              $region80: #{block_forward.13} parent=77 // loop_header
                %s229 = sphi 0, %s233
                %p230 = scmp.ge.s32.totalorder %s229, 1
                %s234 = sphi %s220, %s220
                %s235 = sphi %s218, %s218
              $region81: #{block_forward.13} parent=77 // loop_header_branch
                %232 = sbr.rel (%p230) target = $region85
              $region82: #{block_forward.13} parent=77 // loop_body
                %v236 = vld [vmem:[%s234] sm:$0xff]
                %237 = vst [vmem:[%s235] sm:$0xff] %v236
                %v238 = vld [vmem:[%s234 + $0x18] sm:$0xff]
                %239 = vst [vmem:[%s235 + $0x8] sm:$0xff] %v238
              $region83: #{block_forward.13} parent=77 // loop_footer
                %s233 = sadd.s32 1, %s229
              $region84: #{block_forward.13} parent=77 // loop_footer_branch
                %228 = sbr.rel target = $region80
              $region85: #{block_forward.13} parent=77 // loop_exit
                _
            $region78: #{block_forward.13} parent=69 // pred_fallthru
              _
          $region70: #{block_forward.13} parent=65 // pred_fallthru
            _
          %256 = vnop
        $region66: #{block_forward.13} parent=23 // pred_fallthru
          _
      $region24: #{block_forward.13} parent=5 // pred_fallthru
        _
      %p257 = scmp.le.s32.totalorder 1, %s10
      %p258 = scmp.lt.s32.totalorder %s10, 4
      %p259 = pnand %p257, %p258
      %p260 = pneg %p259
      // Predicated region
      $region101: #{block_forward.13} parent=5 // pred_check
        _
      $region102: #{block_forward.13} parent=5 // pred_check_branch
        %262 = sbr.rel (%p259) target = $region104
      $region103: #{block_forward.13} parent=5 // pred_region
        %s263 = ssub.s32 %s10, 1
        %s264 = sand.u32 %s44, 1
        %s265 = sand.u32 %s44, 1
        %s266 = smul.addr %s265, 40
        %s267 = scalar_lea.vmem [#allocation2], %s266
        // Predicated region
        $region105: #{block_forward.13} parent=103 // pred_check
          %p268 = pneg %p57
        $region106: #{block_forward.13} parent=103 // pred_check_branch
          %270 = sbr.rel (%p268) target = $region108
        $region107: #{block_forward.13} parent=103 // pred_region
          _
        $region108: #{block_forward.13} parent=103 // pred_fallthru
          _
        %s271 = sand.u32 %s91, 1
        %s272 = sand.u32 %s91, 1
        %s273 = smul.addr %s272, 16
        %s274 = scalar_lea.vmem [#allocation3], %s273
        // Predicated region
        $region109: #{block_forward.13} parent=103 // pred_check
          %p275 = pneg %p104
        $region110: #{block_forward.13} parent=103 // pred_check_branch
          %277 = sbr.rel (%p275) target = $region112
        $region111: #{block_forward.13} parent=103 // pred_region
          _
        $region112: #{block_forward.13} parent=103 // pred_fallthru
          _
        %p278 = pneg %p31
        %p279 = pneg %p28
        %s280 = sand.u32 %s44, 1
        %s281 = sand.u32 %s44, 1
        %s282 = smul.addr %s281, 40
        %s283 = scalar_lea.vmem [#allocation2], %s282
        %p284 = pneg %p57
        %p285 = pneg %p54
        %p286 = pneg %p78
        %p287 = pneg %p75
        %s288 = sand.u32 %s91, 1
        %s289 = sand.u32 %s91, 1
        %s290 = smul.addr %s289, 16
        %s291 = scalar_lea.vmem [#allocation3], %s290
        %p292 = pneg %p104
        %p293 = pneg %p101
        %p294 = pneg %p130
        %p295 = pneg %p127
        %s296 = sand.u32 %s117, 1
        %s297 = sand.u32 %s117, 1
        %s298 = smul.addr %s297, 16
        %s299 = scalar_lea.vmem [#allocation4], %s298
        %v300 = vld [vmem:[%s0] sm:$0xff]
        %v301 = vld [vmem:[%s0 + $0x8] sm:$0xff]
        %v302 = vld [vmem:[%s267] sm:$0xff]
        %v303 = vld [vmem:[%s267 + $0x8] sm:$0xff]
        %v304 = vld [vmem:[%s267 + $0x10] sm:$0xff]
        %v305 = vld [vmem:[%s267 + $0x18] sm:$0xff]
        %v306 = vld [vmem:[%s267 + $0x20] sm:$0xff]
        %v307 = vld [vmem:[%s2] sm:$0xff]
        %v308 = vld [vmem:[%s2 + $0x8] sm:$0xff]
        %310 = vset.pattern.permute.xlu0 0
        %311 = vperm.xlu0 %310, %v307
        %v312 = vpop.permute.xlu0 %311
        %315 = vset.pattern.permute.xlu0 0
        %316 = vperm.xlu0 %315, %v308
        %v317 = vpop.permute.xlu0 %316
        %vm319 = vcmask 326656
        %v321 = vsel %vm319, %v300, 0
        %v324 = vsel %vm319, %v301, 0
        %326 = vmatprep.subr.mxu0 0.0
        %327 = vmatpush1.msra.mxu0 %v302
        %328 = vmatprep.subr.mxu0 0.0
        %329 = vmatpush1.msra.mxu0 %v303
        %330 = vmatprep.subr.mxu0 0.0
        %331 = vmatpush1.msra.mxu0 %v304
        %332 = vmatprep.subr.mxu0 0.0
        %333 = vmatpush1.msra.mxu0 %v305
        %334 = vmatprep.subr.mxu0 0.0
        %335 = vmatpush1.msra.mxu0 %v306
        %336 = vmatprep.subr.mxu0 0.0
        %337 = vmatpush1.msra.mxu0 0.0
        %338 = vmatprep.subr.mxu0 0.0
        %339 = vmatpush1.msra.mxu0 0.0
        %340 = vmatprep.subr.mxu0 0.0
        %341 = vmatpush1.msra.mxu0 0.0
        %342 = vmatprep.subr.mxu0 0.0
        %343 = vmatpush1.msra.mxu0 0.0
        %344 = vmatprep.subr.mxu0 0.0
        %345 = vmatpush1.msra.mxu0 0.0
        %346 = vmatprep.subr.mxu0 0.0
        %347 = vmatpush1.msra.mxu0 0.0
        %348 = vmatprep.subr.mxu0 0.0
        %349 = vmatpush1.msra.mxu0 0.0
        %350 = vmatprep.subr.mxu0 0.0
        %351 = vmatpush1.msra.mxu0 0.0
        %352 = vmatprep.subr.mxu0 0.0
        %353 = vmatpush1.msra.mxu0 0.0
        %354 = vmatprep.subr.mxu0 0.0
        %355 = vmatpush1.msra.mxu0 0.0
        %356 = vmatprep.subr.mxu0 0.0
        %357 = vmatpush1.msra.mxu0 0.0
        %358 = vmatprep.subr.mxu0 0.0
        %359 = vmatpush1.msra.mxu0 0.0
        %360 = vmatprep.subr.mxu0 0.0
        %361 = vmatpush1.msra.mxu0 0.0
        %362 = vmatprep.subr.mxu0 0.0
        %363 = vmatpush1.msra.mxu0 0.0
        %364 = vmatprep.subr.mxu0 0.0
        %365 = vmatpush1.msra.mxu0 0.0
        %366 = vmatprep.subr.mxu0 0.0
        %367 = vmatpush1.msra.mxu0 0.0
        %368 = vmatprep.subr.mxu0 0.0
        %369 = vmatpush1.msra.mxu0 0.0
        %370 = vmatprep.subr.mxu0 0.0
        %371 = vmatpush1.msra.mxu0 0.0
        %372 = vmatprep.subr.mxu0 0.0
        %373 = vmatpush1.msra.mxu0 0.0
        %374 = vmatprep.subr.mxu0 0.0
        %375 = vmatpush1.msra.mxu0 0.0
        %376 = vmatprep.subr.mxu0 0.0
        %377 = vmatpush1.msra.mxu0 0.0
        %378 = vmatprep.subr.mxu0 0.0
        %379 = vmatpush1.msra.mxu0 0.0
        %380 = vmatprep.subr.mxu0 0.0
        %381 = vmatpush1.msra.mxu0 0.0
        %382 = vmatprep.subr.mxu0 0.0
        %383 = vmatpush1.msra.mxu0 0.0
        %384 = vmatprep.subr.mxu0 0.0
        %385 = vmatpush1.msra.mxu0 0.0
        %386 = vmatprep.subr.mxu0 0.0
        %387 = vmatpush1.msra.mxu0 0.0
        %388 = vmatprep.subr.mxu0 0.0
        %389 = vmatpush1.msra.mxu0 0.0
        %390 = vmatprep.mubr.f32.mxu0 0.0
        %391 = vmatmul.mubr.f32.gmra.mrb[0].mxu0 %v321
        %v392 = vpop.f32.mrb[0].mxu0
        %v393 = vadd.f32 %v312, %v392
        %v394 = vpop.f32.mrb[0].mxu0
        %395 = vmatprep.mubr.f32.mxu0 0.0
        %396 = vmatmul.mubr.f32.gmra.mrb[0].mxu0 %v324
        %v397 = vpop.f32.mrb[0].mxu0
        %v398 = vadd.f32 %v317, %v397
        %v399 = vpop.f32.mrb[0].mxu0
        %400 = vdwg.mxu0
        %v401 = vld [vmem:[%s274] sm:$0xff]
        %v402 = vld [vmem:[%s274 + $0x8] sm:$0xff]
        %v403 = vadd.f32 %v393, %v401
        %v404 = vadd.f32 %v398, %v402
        %405 = vst [vmem:[%s299] sm:$0xff] %v403
        %406 = vst [vmem:[%s299 + $0x8] sm:$0xff] %v404
        %s407 = sand.u32 %s117, 1
        %s408 = sand.u32 %s117, 1
        %s409 = smul.addr %s408, 16
        %s410 = scalar_lea.vmem [#allocation4], %s409
        // Predicated region
        $region113: #{block_forward.13} parent=103 // pred_check
          %p411 = pneg %p127
        $region114: #{block_forward.13} parent=103 // pred_check_branch
          %413 = sbr.rel (%p411) target = $region116
        $region115: #{block_forward.13} parent=103 // pred_region
          %s414 = smul.addr %s15, 8
          %s415 = scalar_lea.vmem %s4, %s414
          // Predicated region
          $region117: #{block_forward.13} parent=115 // pred_check
            _
          $region118: #{block_forward.13} parent=115 // pred_check_branch
            %417 = sbr.rel (0) target = $region120
          $region119: #{block_forward.13} parent=115 // pred_region
            // Predicated region
            $region121: #{block_forward.13} parent=119 // pred_check
              _
            $region122: #{block_forward.13} parent=119 // pred_check_branch
              %419 = sbr.rel (0) target = $region124
            $region123: #{block_forward.13} parent=119 // pred_region
              // Predicated region
              $region136: #{block_forward.13} parent=123 // pred_check
                _
              $region137: #{block_forward.13} parent=123 // pred_check_branch
                %436 = sbr.rel (0) target = $region139
              $region138: #{block_forward.13} parent=123 // pred_region
                loop: start=0, step=1, limit=1
                $region140: #{block_forward.13} parent=138 // loop_pre_header
                  _
                $region141: #{block_forward.13} parent=138 // loop_header
                  %s438 = sphi 0, %s442
                  %p439 = scmp.ge.s32.totalorder %s438, 1
                  %s443 = sphi %s410, %s410
                  %s444 = sphi %s415, %s415
                $region142: #{block_forward.13} parent=138 // loop_header_branch
                  %441 = sbr.rel (%p439) target = $region146
                $region143: #{block_forward.13} parent=138 // loop_body
                  %v445 = vld [vmem:[%s443] sm:$0xff]
                  %446 = vst [vmem:[%s444] sm:$0xff] %v445
                  %v447 = vld [vmem:[%s443 + $0x8] sm:$0xff]
                  %448 = vst [vmem:[%s444 + $0x18] sm:$0xff] %v447
                $region144: #{block_forward.13} parent=138 // loop_footer
                  %s442 = sadd.s32 1, %s438
                $region145: #{block_forward.13} parent=138 // loop_footer_branch
                  %437 = sbr.rel target = $region141
                $region146: #{block_forward.13} parent=138 // loop_exit
                  _
              $region139: #{block_forward.13} parent=123 // pred_fallthru
                _
              // Predicated region
              $region147: #{block_forward.13} parent=123 // pred_check
                _
              $region148: #{block_forward.13} parent=123 // pred_check_branch
                %450 = sbr.rel target = $region150
              $region149: #{block_forward.13} parent=123 // pred_region
                _
              $region150: #{block_forward.13} parent=123 // pred_fallthru
                _
            $region124: #{block_forward.13} parent=119 // pred_fallthru
              _
            // Predicated region
            $region125: #{block_forward.13} parent=119 // pred_check
              _
            $region126: #{block_forward.13} parent=119 // pred_check_branch
              %421 = sbr.rel target = $region128
            $region127: #{block_forward.13} parent=119 // pred_region
              loop: start=0, step=1, limit=1
              $region129: #{block_forward.13} parent=127 // loop_pre_header
                _
              $region130: #{block_forward.13} parent=127 // loop_header
                %s424 = sphi 0, %s428
                %p425 = scmp.ge.s32.totalorder %s424, 1
                %s429 = sphi %s410, %s410
                %s430 = sphi %s415, %s415
              $region131: #{block_forward.13} parent=127 // loop_header_branch
                %427 = sbr.rel (%p425) target = $region135
              $region132: #{block_forward.13} parent=127 // loop_body
                %v431 = vld [vmem:[%s429] sm:$0xff]
                %432 = vst [vmem:[%s430] sm:$0xff] %v431
                %v433 = vld [vmem:[%s429 + $0x8] sm:$0xff]
                %434 = vst [vmem:[%s430 + $0x18] sm:$0xff] %v433
              $region133: #{block_forward.13} parent=127 // loop_footer
                %s428 = sadd.s32 1, %s424
              $region134: #{block_forward.13} parent=127 // loop_footer_branch
                %423 = sbr.rel target = $region130
              $region135: #{block_forward.13} parent=127 // loop_exit
                _
            $region128: #{block_forward.13} parent=119 // pred_fallthru
              _
          $region120: #{block_forward.13} parent=115 // pred_fallthru
            _
          %451 = vnop
        $region116: #{block_forward.13} parent=103 // pred_fallthru
          _
      $region104: #{block_forward.13} parent=5 // pred_fallthru
        _
      %p452 = scmp.le.s32.totalorder 2, %s10
      // Predicated region
      $region151: #{block_forward.13} parent=5 // pred_check
        %p453 = pneg %p452
      $region152: #{block_forward.13} parent=5 // pred_check_branch
        %455 = sbr.rel (%p453) target = $region154
      $region153: #{block_forward.13} parent=5 // pred_region
        %s456 = ssub.s32 %s10, 2
        // Predicated region
        $region155: #{block_forward.13} parent=153 // pred_check
          %p457 = pneg %p133
        $region156: #{block_forward.13} parent=153 // pred_check_branch
          %459 = sbr.rel (%p457) target = $region158
        $region157: #{block_forward.13} parent=153 // pred_region
          %s460 = sand.u32 %s118, 1
          %s461 = sand.u32 %s118, 1
          %s462 = smul.addr %s461, 16
          %s463 = scalar_lea.vmem [#allocation4], %s462
        $region158: #{block_forward.13} parent=153 // pred_fallthru
          _
      $region154: #{block_forward.13} parent=5 // pred_fallthru
        _
    $region6: #{block_forward.13} parent=1 // loop_footer
      %s14 = sadd.s32 1, %s10
    $region7: #{block_forward.13} parent=1 // loop_footer_branch
      %9 = sbr.rel target = $region3
    $region8: #{block_forward.13} parent=1 // loop_exit
      _

// kernel: block_forward.12
$region0: #{block_forward.12}
  #allocation0 [shape = 'u32[]', space=smem, size = 0x4, offset = 0x4, fixed_abs, tag = 'smem constant byte address 0x4 - core index']
  #allocation1 [shape = 'u32[144,128]{1,0:T(1,128)}', space=vmem, size = 0x12000, scoped, tag = 'internal scratch']
  %s0 = inlined_call_operand.vmem [shape: f32[8,288], index: 0, kind: input, shape index: {}]
  %s1 = inlined_call_operand.vmem [shape: f32[288,384], index: 1, kind: input, shape index: {}]
  %s2 = inlined_call_operand.vmem [shape: f32[8,1], index: 2, kind: input, shape index: {}]
  %s3 = inlined_call_operand.vmem [shape: f32[8,384], index: 3, kind: output, shape index: {}]
  %s4 = sld [smem:[#allocation0]]
  $region83: #{block_forward.12} parent=0
    _
  %s6 = ssub.s32 1, %s4
  %s7 = scalar_select 0, %s6, %s4
  $region1: #{block_forward.12} parent=0
    #allocation2 [shape = 'u8[294912]{0}', space=vmem, size = 0x48000, scoped, tag = 'input window, operand 1']
    loop: start=0, step=1, limit=5
    $region2: #{block_forward.12} parent=1 // loop_pre_header
      _
    $region3: #{block_forward.12} parent=1 // loop_header
      %s9 = sphi 0, %s13
      %p10 = scmp.ge.s32.totalorder %s9, 5
      %s17 = sphi 0, %s17
      %s19 = sphi 0, %s17
      %s20 = sphi 0, %s19
      %s34 = sphi 0, %s20
      %s40 = sphi 0, %s42
      %s43 = sphi 0, %s40
      %s44 = sphi 0, %s43
      %s60 = sphi 0, %s44
      %s64 = sphi 0, %s64
      %s66 = sphi 0, %s64
      %s67 = sphi 0, %s66
      %s81 = sphi 0, %s67
      %s87 = sphi 0, %s89
      %s90 = sphi 0, %s87
      %s91 = sphi 0, %s90
      %s107 = sphi 0, %s91
    $region4: #{block_forward.12} parent=1 // loop_header_branch
      %12 = sbr.rel (%p10) target = $region8
    $region5: #{block_forward.12} parent=1 // loop_body
      %s14 = ssub.s32 %s9, 1
      %s15 = ssub.s32 %s9, 2
      %s16 = sadd.s32 %s9, 1
      %s18 = sadd.s32 %s17, 1
      %p21 = scmp.eq.s32.totalorder %s9, 2
      %p22 = scmp.ne.s32.totalorder %s17, %s19
      %p23 = scmp.eq.s32.totalorder %s9, 0
      %p24 = por %p22, %p23
      %p25 = scmp.ne.s32.totalorder %s17, %s19
      %p26 = scmp.eq.s32.totalorder %s14, 2
      %p27 = por %p25, %p26
      %p28 = scmp.ne.s32.totalorder %s19, %s20
      %p29 = scmp.eq.s32.totalorder %s14, 0
      %p30 = por %p28, %p29
      %p31 = scmp.ne.s32.totalorder %s19, %s20
      %p32 = scmp.eq.s32.totalorder %s15, 2
      %p33 = por %p31, %p32
      %p35 = scmp.ne.s32.totalorder %s20, %s34
      %p36 = scmp.eq.s32.totalorder %s15, 0
      %p37 = por %p35, %p36
      %s38 = ssub.s32 %s9, %s16
      %p39 = scmp.eq.s32.totalorder %s38, 0
      %s41 = sadd.s32 %s40, 1
      %s42 = scalar_select %p39, %s40, %s41
      %p45 = pneg %p39
      %p46 = scmp.eq.s32.totalorder %s9, 2
      %p47 = por %p45, %p46
      %p48 = scmp.ne.s32.totalorder %s40, %s43
      %p49 = scmp.eq.s32.totalorder %s9, 0
      %p50 = por %p48, %p49
      %p51 = scmp.ne.s32.totalorder %s40, %s43
      %p52 = scmp.eq.s32.totalorder %s14, 2
      %p53 = por %p51, %p52
      %p54 = scmp.ne.s32.totalorder %s43, %s44
      %p55 = scmp.eq.s32.totalorder %s14, 0
      %p56 = por %p54, %p55
      %p57 = scmp.ne.s32.totalorder %s43, %s44
      %p58 = scmp.eq.s32.totalorder %s15, 2
      %p59 = por %p57, %p58
      %p61 = scmp.ne.s32.totalorder %s44, %s60
      %p62 = scmp.eq.s32.totalorder %s15, 0
      %p63 = por %p61, %p62
      %s65 = sadd.s32 %s64, 1
      %p68 = scmp.eq.s32.totalorder %s9, 2
      %p69 = scmp.ne.s32.totalorder %s64, %s66
      %p70 = scmp.eq.s32.totalorder %s9, 0
      %p71 = por %p69, %p70
      %p72 = scmp.ne.s32.totalorder %s64, %s66
      %p73 = scmp.eq.s32.totalorder %s14, 2
      %p74 = por %p72, %p73
      %p75 = scmp.ne.s32.totalorder %s66, %s67
      %p76 = scmp.eq.s32.totalorder %s14, 0
      %p77 = por %p75, %p76
      %p78 = scmp.ne.s32.totalorder %s66, %s67
      %p79 = scmp.eq.s32.totalorder %s15, 2
      %p80 = por %p78, %p79
      %p82 = scmp.ne.s32.totalorder %s67, %s81
      %p83 = scmp.eq.s32.totalorder %s15, 0
      %p84 = por %p82, %p83
      %s85 = ssub.s32 %s9, %s16
      %p86 = scmp.eq.s32.totalorder %s85, 0
      %s88 = sadd.s32 %s87, 1
      %s89 = scalar_select %p86, %s87, %s88
      %p92 = pneg %p86
      %p93 = scmp.eq.s32.totalorder %s9, 2
      %p94 = por %p92, %p93
      %p95 = scmp.ne.s32.totalorder %s87, %s90
      %p96 = scmp.eq.s32.totalorder %s9, 0
      %p97 = por %p95, %p96
      %p98 = scmp.ne.s32.totalorder %s87, %s90
      %p99 = scmp.eq.s32.totalorder %s14, 2
      %p100 = por %p98, %p99
      %p101 = scmp.ne.s32.totalorder %s90, %s91
      %p102 = scmp.eq.s32.totalorder %s14, 0
      %p103 = por %p101, %p102
      %p104 = scmp.ne.s32.totalorder %s90, %s91
      %p105 = scmp.eq.s32.totalorder %s15, 2
      %p106 = por %p104, %p105
      %p108 = scmp.ne.s32.totalorder %s91, %s107
      %p109 = scmp.eq.s32.totalorder %s15, 0
      %p110 = por %p108, %p109
      %p111 = scmp.le.s32.totalorder 1, %s9
      %p112 = scmp.lt.s32.totalorder %s9, 4
      %p113 = pnand %p111, %p112
      %p114 = pneg %p113
      // Predicated region
      $region9: #{block_forward.12} parent=5 // pred_check
        _
      $region10: #{block_forward.12} parent=5 // pred_check_branch
        %116 = sbr.rel (%p113) target = $region12
      $region11: #{block_forward.12} parent=5 // pred_region
        %s117 = ssub.s32 %s9, 1
        // Predicated region
        $region13: #{block_forward.12} parent=11 // pred_check
          %p118 = pneg %p30
        $region14: #{block_forward.12} parent=11 // pred_check_branch
          %120 = sbr.rel (%p118) target = $region16
        $region15: #{block_forward.12} parent=11 // pred_region
          _
        $region16: #{block_forward.12} parent=11 // pred_fallthru
          _
        // Predicated region
        $region17: #{block_forward.12} parent=11 // pred_check
          %p121 = pneg %p77
        $region18: #{block_forward.12} parent=11 // pred_check_branch
          %123 = sbr.rel (%p121) target = $region20
        $region19: #{block_forward.12} parent=11 // pred_region
          _
        $region20: #{block_forward.12} parent=11 // pred_fallthru
          _
      $region12: #{block_forward.12} parent=5 // pred_fallthru
        _
      %p124 = scmp.lt.s32.totalorder %s9, 3
      // Predicated region
      $region21: #{block_forward.12} parent=5 // pred_check
        %p125 = pneg %p124
      $region22: #{block_forward.12} parent=5 // pred_check_branch
        %127 = sbr.rel (%p125) target = $region24
      $region23: #{block_forward.12} parent=5 // pred_region
        // Predicated region
        $region25: #{block_forward.12} parent=23 // pred_check
          %p128 = pneg %p50
        $region26: #{block_forward.12} parent=23 // pred_check_branch
          %130 = sbr.rel (%p128) target = $region28
        $region27: #{block_forward.12} parent=23 // pred_region
          %s131 = sand.u32 %s40, 1
          %s132 = sand.u32 %s40, 1
          %s133 = smul.addr %s132, 288
          %s134 = scalar_lea.vmem [#allocation2], %s133
          %s135 = smul.addr %s9, 8
          %s136 = scalar_lea.vmem %s1, %s135
          // Predicated region
          $region29: #{block_forward.12} parent=27 // pred_check
            _
          $region30: #{block_forward.12} parent=27 // pred_check_branch
            %138 = sbr.rel (0) target = $region32
          $region31: #{block_forward.12} parent=27 // pred_region
            // Predicated region
            $region33: #{block_forward.12} parent=31 // pred_check
              _
            $region34: #{block_forward.12} parent=31 // pred_check_branch
              %140 = sbr.rel (0) target = $region36
            $region35: #{block_forward.12} parent=31 // pred_region
              // Predicated region
              $region48: #{block_forward.12} parent=35 // pred_check
                _
              $region49: #{block_forward.12} parent=35 // pred_check_branch
                %225 = sbr.rel (0) target = $region51
              $region50: #{block_forward.12} parent=35 // pred_region
                loop: start=0, step=1, limit=1
                $region52: #{block_forward.12} parent=50 // loop_pre_header
                  _
                $region53: #{block_forward.12} parent=50 // loop_header
                  %s227 = sphi 0, %s231
                  %p228 = scmp.ge.s32.totalorder %s227, 1
                  %s232 = sphi %s136, %s136
                  %s233 = sphi %s134, %s134
                $region54: #{block_forward.12} parent=50 // loop_header_branch
                  %230 = sbr.rel (%p228) target = $region58
                $region55: #{block_forward.12} parent=50 // loop_body
                  %v234 = vld [vmem:[%s232] sm:$0xff]
                  %235 = vst [vmem:[%s233] sm:$0xff] %v234
                  %v236 = vld [vmem:[%s232 + $0x18] sm:$0xff]
                  %237 = vst [vmem:[%s233 + $0x8] sm:$0xff] %v236
                  %v238 = vld [vmem:[%s232 + $0x30] sm:$0xff]
                  %239 = vst [vmem:[%s233 + $0x10] sm:$0xff] %v238
                  %v240 = vld [vmem:[%s232 + $0x48] sm:$0xff]
                  %241 = vst [vmem:[%s233 + $0x18] sm:$0xff] %v240
                  %v242 = vld [vmem:[%s232 + $0x60] sm:$0xff]
                  %243 = vst [vmem:[%s233 + $0x20] sm:$0xff] %v242
                  %v244 = vld [vmem:[%s232 + $0x78] sm:$0xff]
                  %245 = vst [vmem:[%s233 + $0x28] sm:$0xff] %v244
                  %v246 = vld [vmem:[%s232 + $0x90] sm:$0xff]
                  %247 = vst [vmem:[%s233 + $0x30] sm:$0xff] %v246
                  %v248 = vld [vmem:[%s232 + $0xa8] sm:$0xff]
                  %249 = vst [vmem:[%s233 + $0x38] sm:$0xff] %v248
                  %v250 = vld [vmem:[%s232 + $0xc0] sm:$0xff]
                  %251 = vst [vmem:[%s233 + $0x40] sm:$0xff] %v250
                  %v252 = vld [vmem:[%s232 + $0xd8] sm:$0xff]
                  %253 = vst [vmem:[%s233 + $0x48] sm:$0xff] %v252
                  %v254 = vld [vmem:[%s232 + $0xf0] sm:$0xff]
                  %255 = vst [vmem:[%s233 + $0x50] sm:$0xff] %v254
                  %v256 = vld [vmem:[%s232 + $0x108] sm:$0xff]
                  %257 = vst [vmem:[%s233 + $0x58] sm:$0xff] %v256
                  %v258 = vld [vmem:[%s232 + $0x120] sm:$0xff]
                  %259 = vst [vmem:[%s233 + $0x60] sm:$0xff] %v258
                  %v260 = vld [vmem:[%s232 + $0x138] sm:$0xff]
                  %261 = vst [vmem:[%s233 + $0x68] sm:$0xff] %v260
                  %v262 = vld [vmem:[%s232 + $0x150] sm:$0xff]
                  %263 = vst [vmem:[%s233 + $0x70] sm:$0xff] %v262
                  %v264 = vld [vmem:[%s232 + $0x168] sm:$0xff]
                  %265 = vst [vmem:[%s233 + $0x78] sm:$0xff] %v264
                  %v266 = vld [vmem:[%s232 + $0x180] sm:$0xff]
                  %267 = vst [vmem:[%s233 + $0x80] sm:$0xff] %v266
                  %v268 = vld [vmem:[%s232 + $0x198] sm:$0xff]
                  %269 = vst [vmem:[%s233 + $0x88] sm:$0xff] %v268
                  %v270 = vld [vmem:[%s232 + $0x1b0] sm:$0xff]
                  %271 = vst [vmem:[%s233 + $0x90] sm:$0xff] %v270
                  %v272 = vld [vmem:[%s232 + $0x1c8] sm:$0xff]
                  %273 = vst [vmem:[%s233 + $0x98] sm:$0xff] %v272
                  %v274 = vld [vmem:[%s232 + $0x1e0] sm:$0xff]
                  %275 = vst [vmem:[%s233 + $0xa0] sm:$0xff] %v274
                  %v276 = vld [vmem:[%s232 + $0x1f8] sm:$0xff]
                  %277 = vst [vmem:[%s233 + $0xa8] sm:$0xff] %v276
                  %v278 = vld [vmem:[%s232 + $0x210] sm:$0xff]
                  %279 = vst [vmem:[%s233 + $0xb0] sm:$0xff] %v278
                  %v280 = vld [vmem:[%s232 + $0x228] sm:$0xff]
                  %281 = vst [vmem:[%s233 + $0xb8] sm:$0xff] %v280
                  %v282 = vld [vmem:[%s232 + $0x240] sm:$0xff]
                  %283 = vst [vmem:[%s233 + $0xc0] sm:$0xff] %v282
                  %v284 = vld [vmem:[%s232 + $0x258] sm:$0xff]
                  %285 = vst [vmem:[%s233 + $0xc8] sm:$0xff] %v284
                  %v286 = vld [vmem:[%s232 + $0x270] sm:$0xff]
                  %287 = vst [vmem:[%s233 + $0xd0] sm:$0xff] %v286
                  %v288 = vld [vmem:[%s232 + $0x288] sm:$0xff]
                  %289 = vst [vmem:[%s233 + $0xd8] sm:$0xff] %v288
                  %v290 = vld [vmem:[%s232 + $0x2a0] sm:$0xff]
                  %291 = vst [vmem:[%s233 + $0xe0] sm:$0xff] %v290
                  %v292 = vld [vmem:[%s232 + $0x2b8] sm:$0xff]
                  %293 = vst [vmem:[%s233 + $0xe8] sm:$0xff] %v292
                  %v294 = vld [vmem:[%s232 + $0x2d0] sm:$0xff]
                  %295 = vst [vmem:[%s233 + $0xf0] sm:$0xff] %v294
                  %v296 = vld [vmem:[%s232 + $0x2e8] sm:$0xff]
                  %297 = vst [vmem:[%s233 + $0xf8] sm:$0xff] %v296
                  %v298 = vld [vmem:[%s232 + $0x300] sm:$0xff]
                  %299 = vst [vmem:[%s233 + $0x100] sm:$0xff] %v298
                  %v300 = vld [vmem:[%s232 + $0x318] sm:$0xff]
                  %301 = vst [vmem:[%s233 + $0x108] sm:$0xff] %v300
                  %v302 = vld [vmem:[%s232 + $0x330] sm:$0xff]
                  %303 = vst [vmem:[%s233 + $0x110] sm:$0xff] %v302
                  %v304 = vld [vmem:[%s232 + $0x348] sm:$0xff]
                  %305 = vst [vmem:[%s233 + $0x118] sm:$0xff] %v304
                $region56: #{block_forward.12} parent=50 // loop_footer
                  %s231 = sadd.s32 1, %s227
                $region57: #{block_forward.12} parent=50 // loop_footer_branch
                  %226 = sbr.rel target = $region53
                $region58: #{block_forward.12} parent=50 // loop_exit
                  _
              $region51: #{block_forward.12} parent=35 // pred_fallthru
                _
              // Predicated region
              $region59: #{block_forward.12} parent=35 // pred_check
                _
              $region60: #{block_forward.12} parent=35 // pred_check_branch
                %307 = sbr.rel target = $region62
              $region61: #{block_forward.12} parent=35 // pred_region
                _
              $region62: #{block_forward.12} parent=35 // pred_fallthru
                _
            $region36: #{block_forward.12} parent=31 // pred_fallthru
              _
            // Predicated region
            $region37: #{block_forward.12} parent=31 // pred_check
              _
            $region38: #{block_forward.12} parent=31 // pred_check_branch
              %142 = sbr.rel target = $region40
            $region39: #{block_forward.12} parent=31 // pred_region
              loop: start=0, step=1, limit=1
              $region41: #{block_forward.12} parent=39 // loop_pre_header
                _
              $region42: #{block_forward.12} parent=39 // loop_header
                %s145 = sphi 0, %s149
                %p146 = scmp.ge.s32.totalorder %s145, 1
                %s150 = sphi %s136, %s136
                %s151 = sphi %s134, %s134
              $region43: #{block_forward.12} parent=39 // loop_header_branch
                %148 = sbr.rel (%p146) target = $region47
              $region44: #{block_forward.12} parent=39 // loop_body
                %v152 = vld [vmem:[%s150] sm:$0xff]
                %153 = vst [vmem:[%s151] sm:$0xff] %v152
                %v154 = vld [vmem:[%s150 + $0x18] sm:$0xff]
                %155 = vst [vmem:[%s151 + $0x8] sm:$0xff] %v154
                %v156 = vld [vmem:[%s150 + $0x30] sm:$0xff]
                %157 = vst [vmem:[%s151 + $0x10] sm:$0xff] %v156
                %v158 = vld [vmem:[%s150 + $0x48] sm:$0xff]
                %159 = vst [vmem:[%s151 + $0x18] sm:$0xff] %v158
                %v160 = vld [vmem:[%s150 + $0x60] sm:$0xff]
                %161 = vst [vmem:[%s151 + $0x20] sm:$0xff] %v160
                %v162 = vld [vmem:[%s150 + $0x78] sm:$0xff]
                %163 = vst [vmem:[%s151 + $0x28] sm:$0xff] %v162
                %v164 = vld [vmem:[%s150 + $0x90] sm:$0xff]
                %165 = vst [vmem:[%s151 + $0x30] sm:$0xff] %v164
                %v166 = vld [vmem:[%s150 + $0xa8] sm:$0xff]
                %167 = vst [vmem:[%s151 + $0x38] sm:$0xff] %v166
                %v168 = vld [vmem:[%s150 + $0xc0] sm:$0xff]
                %169 = vst [vmem:[%s151 + $0x40] sm:$0xff] %v168
                %v170 = vld [vmem:[%s150 + $0xd8] sm:$0xff]
                %171 = vst [vmem:[%s151 + $0x48] sm:$0xff] %v170
                %v172 = vld [vmem:[%s150 + $0xf0] sm:$0xff]
                %173 = vst [vmem:[%s151 + $0x50] sm:$0xff] %v172
                %v174 = vld [vmem:[%s150 + $0x108] sm:$0xff]
                %175 = vst [vmem:[%s151 + $0x58] sm:$0xff] %v174
                %v176 = vld [vmem:[%s150 + $0x120] sm:$0xff]
                %177 = vst [vmem:[%s151 + $0x60] sm:$0xff] %v176
                %v178 = vld [vmem:[%s150 + $0x138] sm:$0xff]
                %179 = vst [vmem:[%s151 + $0x68] sm:$0xff] %v178
                %v180 = vld [vmem:[%s150 + $0x150] sm:$0xff]
                %181 = vst [vmem:[%s151 + $0x70] sm:$0xff] %v180
                %v182 = vld [vmem:[%s150 + $0x168] sm:$0xff]
                %183 = vst [vmem:[%s151 + $0x78] sm:$0xff] %v182
                %v184 = vld [vmem:[%s150 + $0x180] sm:$0xff]
                %185 = vst [vmem:[%s151 + $0x80] sm:$0xff] %v184
                %v186 = vld [vmem:[%s150 + $0x198] sm:$0xff]
                %187 = vst [vmem:[%s151 + $0x88] sm:$0xff] %v186
                %v188 = vld [vmem:[%s150 + $0x1b0] sm:$0xff]
                %189 = vst [vmem:[%s151 + $0x90] sm:$0xff] %v188
                %v190 = vld [vmem:[%s150 + $0x1c8] sm:$0xff]
                %191 = vst [vmem:[%s151 + $0x98] sm:$0xff] %v190
                %v192 = vld [vmem:[%s150 + $0x1e0] sm:$0xff]
                %193 = vst [vmem:[%s151 + $0xa0] sm:$0xff] %v192
                %v194 = vld [vmem:[%s150 + $0x1f8] sm:$0xff]
                %195 = vst [vmem:[%s151 + $0xa8] sm:$0xff] %v194
                %v196 = vld [vmem:[%s150 + $0x210] sm:$0xff]
                %197 = vst [vmem:[%s151 + $0xb0] sm:$0xff] %v196
                %v198 = vld [vmem:[%s150 + $0x228] sm:$0xff]
                %199 = vst [vmem:[%s151 + $0xb8] sm:$0xff] %v198
                %v200 = vld [vmem:[%s150 + $0x240] sm:$0xff]
                %201 = vst [vmem:[%s151 + $0xc0] sm:$0xff] %v200
                %v202 = vld [vmem:[%s150 + $0x258] sm:$0xff]
                %203 = vst [vmem:[%s151 + $0xc8] sm:$0xff] %v202
                %v204 = vld [vmem:[%s150 + $0x270] sm:$0xff]
                %205 = vst [vmem:[%s151 + $0xd0] sm:$0xff] %v204
                %v206 = vld [vmem:[%s150 + $0x288] sm:$0xff]
                %207 = vst [vmem:[%s151 + $0xd8] sm:$0xff] %v206
                %v208 = vld [vmem:[%s150 + $0x2a0] sm:$0xff]
                %209 = vst [vmem:[%s151 + $0xe0] sm:$0xff] %v208
                %v210 = vld [vmem:[%s150 + $0x2b8] sm:$0xff]
                %211 = vst [vmem:[%s151 + $0xe8] sm:$0xff] %v210
                %v212 = vld [vmem:[%s150 + $0x2d0] sm:$0xff]
                %213 = vst [vmem:[%s151 + $0xf0] sm:$0xff] %v212
                %v214 = vld [vmem:[%s150 + $0x2e8] sm:$0xff]
                %215 = vst [vmem:[%s151 + $0xf8] sm:$0xff] %v214
                %v216 = vld [vmem:[%s150 + $0x300] sm:$0xff]
                %217 = vst [vmem:[%s151 + $0x100] sm:$0xff] %v216
                %v218 = vld [vmem:[%s150 + $0x318] sm:$0xff]
                %219 = vst [vmem:[%s151 + $0x108] sm:$0xff] %v218
                %v220 = vld [vmem:[%s150 + $0x330] sm:$0xff]
                %221 = vst [vmem:[%s151 + $0x110] sm:$0xff] %v220
                %v222 = vld [vmem:[%s150 + $0x348] sm:$0xff]
                %223 = vst [vmem:[%s151 + $0x118] sm:$0xff] %v222
              $region45: #{block_forward.12} parent=39 // loop_footer
                %s149 = sadd.s32 1, %s145
              $region46: #{block_forward.12} parent=39 // loop_footer_branch
                %144 = sbr.rel target = $region42
              $region47: #{block_forward.12} parent=39 // loop_exit
                _
            $region40: #{block_forward.12} parent=31 // pred_fallthru
              _
          $region32: #{block_forward.12} parent=27 // pred_fallthru
            _
          %308 = vnop
        $region28: #{block_forward.12} parent=23 // pred_fallthru
          _
      $region24: #{block_forward.12} parent=5 // pred_fallthru
        _
      %p309 = scmp.le.s32.totalorder 1, %s9
      %p310 = scmp.lt.s32.totalorder %s9, 4
      %p311 = pnand %p309, %p310
      %p312 = pneg %p311
      // Predicated region
      $region63: #{block_forward.12} parent=5 // pred_check
        _
      $region64: #{block_forward.12} parent=5 // pred_check_branch
        %314 = sbr.rel (%p311) target = $region66
      $region65: #{block_forward.12} parent=5 // pred_region
        %s315 = ssub.s32 %s9, 1
        %s316 = sand.u32 %s43, 1
        %s317 = sand.u32 %s43, 1
        %s318 = smul.addr %s317, 288
        %s319 = scalar_lea.vmem [#allocation2], %s318
        // Predicated region
        $region67: #{block_forward.12} parent=65 // pred_check
          %p320 = pneg %p56
        $region68: #{block_forward.12} parent=65 // pred_check_branch
          %322 = sbr.rel (%p320) target = $region70
        $region69: #{block_forward.12} parent=65 // pred_region
          _
        $region70: #{block_forward.12} parent=65 // pred_fallthru
          _
        %p323 = pneg %p30
        %p324 = pneg %p27
        %s325 = sand.u32 %s43, 1
        %s326 = sand.u32 %s43, 1
        %s327 = smul.addr %s326, 288
        %s328 = scalar_lea.vmem [#allocation2], %s327
        %p329 = pneg %p56
        %p330 = pneg %p53
        %p331 = pneg %p77
        %p332 = pneg %p74
        %p333 = pneg %p103
        %p334 = pneg %p100
        %p335 = scmp.lt.s32.totalorder %s14, 2
        %s336 = scalar_select %p335, %s14, 2
        %s337 = smul.addr %s336, 8
        %s338 = scalar_lea.vmem %s3, %s337
        %p339 = scmp.lt.s32.totalorder %s14, 2
        %s340 = scalar_select %p339, %s14, 2
        %s341 = smul.addr %s340, 8
        %s342 = scalar_lea.vmem %s3, %s341
        %v343 = vld [vmem:[%s0] sm:$0xff]
        %v344 = vld [vmem:[%s0 + $0x8] sm:$0xff]
        %v345 = vld [vmem:[%s0 + $0x10] sm:$0xff]
        %v346 = vld [vmem:[%s319] sm:$0xff]
        %v347 = vld [vmem:[%s319 + $0x8] sm:$0xff]
        %v348 = vld [vmem:[%s319 + $0x10] sm:$0xff]
        %v349 = vld [vmem:[%s319 + $0x18] sm:$0xff]
        %v350 = vld [vmem:[%s319 + $0x20] sm:$0xff]
        %v351 = vld [vmem:[%s319 + $0x28] sm:$0xff]
        %v352 = vld [vmem:[%s319 + $0x30] sm:$0xff]
        %v353 = vld [vmem:[%s319 + $0x38] sm:$0xff]
        %v354 = vld [vmem:[%s319 + $0x40] sm:$0xff]
        %v355 = vld [vmem:[%s319 + $0x48] sm:$0xff]
        %v356 = vld [vmem:[%s319 + $0x50] sm:$0xff]
        %v357 = vld [vmem:[%s319 + $0x58] sm:$0xff]
        %v358 = vld [vmem:[%s319 + $0x60] sm:$0xff]
        %v359 = vld [vmem:[%s319 + $0x68] sm:$0xff]
        %v360 = vld [vmem:[%s319 + $0x70] sm:$0xff]
        %v361 = vld [vmem:[%s319 + $0x78] sm:$0xff]
        %v362 = vld [vmem:[%s319 + $0x80] sm:$0xff]
        %v363 = vld [vmem:[%s319 + $0x88] sm:$0xff]
        %v364 = vld [vmem:[%s319 + $0x90] sm:$0xff]
        %v365 = vld [vmem:[%s319 + $0x98] sm:$0xff]
        %v366 = vld [vmem:[%s319 + $0xa0] sm:$0xff]
        %v367 = vld [vmem:[%s319 + $0xa8] sm:$0xff]
        %v368 = vld [vmem:[%s319 + $0xb0] sm:$0xff]
        %v369 = vld [vmem:[%s319 + $0xb8] sm:$0xff]
        %v370 = vld [vmem:[%s319 + $0xc0] sm:$0xff]
        %v371 = vld [vmem:[%s319 + $0xc8] sm:$0xff]
        %v372 = vld [vmem:[%s319 + $0xd0] sm:$0xff]
        %v373 = vld [vmem:[%s319 + $0xd8] sm:$0xff]
        %v374 = vld [vmem:[%s319 + $0xe0] sm:$0xff]
        %v375 = vld [vmem:[%s319 + $0xe8] sm:$0xff]
        %v376 = vld [vmem:[%s319 + $0xf0] sm:$0xff]
        %v377 = vld [vmem:[%s319 + $0xf8] sm:$0xff]
        %v378 = vld [vmem:[%s319 + $0x100] sm:$0xff]
        %v379 = vld [vmem:[%s319 + $0x108] sm:$0xff]
        %v380 = vld [vmem:[%s319 + $0x110] sm:$0xff]
        %v381 = vld [vmem:[%s319 + $0x118] sm:$0xff]
        %v382 = vld [vmem:[%s2] sm:$0xff]
        %384 = vset.pattern.permute.xlu0 0
        %385 = vperm.xlu0 %384, %v382
        %v386 = vpop.permute.xlu0 %385
        %vm388 = vcmask 261120
        %v390 = vsel %vm388, %v345, 0
        %392 = vmatprep.subr.mxu0 0.0
        %393 = vmatpush1.msra.mxu0 %v346
        %394 = vmatprep.subr.mxu0 0.0
        %395 = vmatpush1.msra.mxu0 %v347
        %396 = vmatprep.subr.mxu0 0.0
        %397 = vmatpush1.msra.mxu0 %v348
        %398 = vmatprep.subr.mxu0 0.0
        %399 = vmatpush1.msra.mxu0 %v349
        %400 = vmatprep.subr.mxu0 0.0
        %401 = vmatpush1.msra.mxu0 %v350
        %402 = vmatprep.subr.mxu0 0.0
        %403 = vmatpush1.msra.mxu0 %v351
        %404 = vmatprep.subr.mxu0 0.0
        %405 = vmatpush1.msra.mxu0 %v352
        %406 = vmatprep.subr.mxu0 0.0
        %407 = vmatpush1.msra.mxu0 %v353
        %408 = vmatprep.subr.mxu0 0.0
        %409 = vmatpush1.msra.mxu0 %v354
        %410 = vmatprep.subr.mxu0 0.0
        %411 = vmatpush1.msra.mxu0 %v355
        %412 = vmatprep.subr.mxu0 0.0
        %413 = vmatpush1.msra.mxu0 %v356
        %414 = vmatprep.subr.mxu0 0.0
        %415 = vmatpush1.msra.mxu0 %v357
        %416 = vmatprep.subr.mxu0 0.0
        %417 = vmatpush1.msra.mxu0 %v358
        %418 = vmatprep.subr.mxu0 0.0
        %419 = vmatpush1.msra.mxu0 %v359
        %420 = vmatprep.subr.mxu0 0.0
        %421 = vmatpush1.msra.mxu0 %v360
        %422 = vmatprep.subr.mxu0 0.0
        %423 = vmatpush1.msra.mxu0 %v361
        %424 = vmatprep.subr.mxu0 0.0
        %425 = vmatpush1.msra.mxu0 %v362
        %426 = vmatprep.subr.mxu0 0.0
        %427 = vmatpush1.msra.mxu0 %v363
        %428 = vmatprep.subr.mxu0 0.0
        %429 = vmatpush1.msra.mxu0 %v364
        %430 = vmatprep.subr.mxu0 0.0
        %431 = vmatpush1.msra.mxu0 %v365
        %432 = vmatprep.subr.mxu0 0.0
        %433 = vmatpush1.msra.mxu0 %v366
        %434 = vmatprep.subr.mxu0 0.0
        %435 = vmatpush1.msra.mxu0 %v367
        %436 = vmatprep.subr.mxu0 0.0
        %437 = vmatpush1.msra.mxu0 %v368
        %438 = vmatprep.subr.mxu0 0.0
        %439 = vmatpush1.msra.mxu0 %v369
        %440 = vmatprep.subr.mxu0 0.0
        %441 = vmatpush1.msra.mxu0 %v370
        %442 = vmatprep.subr.mxu0 0.0
        %443 = vmatpush1.msra.mxu0 %v371
        %444 = vmatprep.subr.mxu0 0.0
        %445 = vmatpush1.msra.mxu0 %v372
        %446 = vmatprep.subr.mxu0 0.0
        %447 = vmatpush1.msra.mxu0 %v373
        %448 = vmatprep.subr.mxu0 0.0
        %449 = vmatpush1.msra.mxu0 %v374
        %450 = vmatprep.subr.mxu0 0.0
        %451 = vmatpush1.msra.mxu0 %v375
        %452 = vmatprep.subr.mxu0 0.0
        %453 = vmatpush1.msra.mxu0 %v376
        %454 = vmatprep.subr.mxu0 0.0
        %455 = vmatpush1.msra.mxu0 %v377
        %456 = vmatprep.mubr.f32.mxu0 %v344
        %457 = vmatmul.mubr.f32.gmra.mrb[0].mxu0 %v343
        %v458 = vpop.f32.mrb[0].mxu0
        %v459 = vadd.f32 %v386, %v458
        %v460 = vpop.f32.mrb[0].mxu0
        %461 = vdwg.mxu0
        %462 = vmatprep.subr.mxu0 0.0
        %463 = vmatpush1.msra.mxu0 %v378
        %464 = vmatprep.subr.mxu0 0.0
        %465 = vmatpush1.msra.mxu0 %v379
        %466 = vmatprep.subr.mxu0 0.0
        %467 = vmatpush1.msra.mxu0 %v380
        %468 = vmatprep.subr.mxu0 0.0
        %469 = vmatpush1.msra.mxu0 %v381
        %470 = vmatprep.subr.mxu0 0.0
        %471 = vmatpush1.msra.mxu0 0.0
        %472 = vmatprep.subr.mxu0 0.0
        %473 = vmatpush1.msra.mxu0 0.0
        %474 = vmatprep.subr.mxu0 0.0
        %475 = vmatpush1.msra.mxu0 0.0
        %476 = vmatprep.subr.mxu0 0.0
        %477 = vmatpush1.msra.mxu0 0.0
        %478 = vmatprep.subr.mxu0 0.0
        %479 = vmatpush1.msra.mxu0 0.0
        %480 = vmatprep.subr.mxu0 0.0
        %481 = vmatpush1.msra.mxu0 0.0
        %482 = vmatprep.subr.mxu0 0.0
        %483 = vmatpush1.msra.mxu0 0.0
        %484 = vmatprep.subr.mxu0 0.0
        %485 = vmatpush1.msra.mxu0 0.0
        %486 = vmatprep.subr.mxu0 0.0
        %487 = vmatpush1.msra.mxu0 0.0
        %488 = vmatprep.subr.mxu0 0.0
        %489 = vmatpush1.msra.mxu0 0.0
        %490 = vmatprep.subr.mxu0 0.0
        %491 = vmatpush1.msra.mxu0 0.0
        %492 = vmatprep.subr.mxu0 0.0
        %493 = vmatpush1.msra.mxu0 0.0
        %494 = vmatprep.subr.mxu0 0.0
        %495 = vmatpush1.msra.mxu0 0.0
        %496 = vmatprep.subr.mxu0 0.0
        %497 = vmatpush1.msra.mxu0 0.0
        %498 = vmatprep.subr.mxu0 0.0
        %499 = vmatpush1.msra.mxu0 0.0
        %500 = vmatprep.subr.mxu0 0.0
        %501 = vmatpush1.msra.mxu0 0.0
        %502 = vmatprep.subr.mxu0 0.0
        %503 = vmatpush1.msra.mxu0 0.0
        %504 = vmatprep.subr.mxu0 0.0
        %505 = vmatpush1.msra.mxu0 0.0
        %506 = vmatprep.subr.mxu0 0.0
        %507 = vmatpush1.msra.mxu0 0.0
        %508 = vmatprep.subr.mxu0 0.0
        %509 = vmatpush1.msra.mxu0 0.0
        %510 = vmatprep.subr.mxu0 0.0
        %511 = vmatpush1.msra.mxu0 0.0
        %512 = vmatprep.subr.mxu0 0.0
        %513 = vmatpush1.msra.mxu0 0.0
        %514 = vmatprep.subr.mxu0 0.0
        %515 = vmatpush1.msra.mxu0 0.0
        %516 = vmatprep.subr.mxu0 0.0
        %517 = vmatpush1.msra.mxu0 0.0
        %518 = vmatprep.subr.mxu0 0.0
        %519 = vmatpush1.msra.mxu0 0.0
        %520 = vmatprep.subr.mxu0 0.0
        %521 = vmatpush1.msra.mxu0 0.0
        %522 = vmatprep.subr.mxu0 0.0
        %523 = vmatpush1.msra.mxu0 0.0
        %524 = vmatprep.subr.mxu0 0.0
        %525 = vmatpush1.msra.mxu0 0.0
        %526 = vmatprep.mubr.f32.mxu0 0.0
        %527 = vmatmul.mubr.f32.gmra.mrb[0].mxu0 %v390
        %v528 = vpop.f32.mrb[0].mxu0
        %v529 = vadd.f32 %v459, %v528
        %v530 = vpop.f32.mrb[0].mxu0
        %531 = vdwg.mxu0
        %v532 = vmax.f32 %v529, 0.0
        %533 = vst [vmem:[%s342] sm:$0xff] %v532
        %p534 = scmp.lt.s32.totalorder %s14, 2
        %s535 = scalar_select %p534, %s14, 2
        %s536 = smul.addr %s535, 8
        %s537 = scalar_lea.vmem %s3, %s536
        // Predicated region
        $region71: #{block_forward.12} parent=65 // pred_check
          %p538 = pneg %p100
        $region72: #{block_forward.12} parent=65 // pred_check_branch
          %540 = sbr.rel (%p538) target = $region74
        $region73: #{block_forward.12} parent=65 // pred_region
          _
        $region74: #{block_forward.12} parent=65 // pred_fallthru
          _
      $region66: #{block_forward.12} parent=5 // pred_fallthru
        _
      %p541 = scmp.le.s32.totalorder 2, %s9
      // Predicated region
      $region75: #{block_forward.12} parent=5 // pred_check
        %p542 = pneg %p541
      $region76: #{block_forward.12} parent=5 // pred_check_branch
        %544 = sbr.rel (%p542) target = $region78
      $region77: #{block_forward.12} parent=5 // pred_region
        %s545 = ssub.s32 %s9, 2
        // Predicated region
        $region79: #{block_forward.12} parent=77 // pred_check
          %p546 = pneg %p106
        $region80: #{block_forward.12} parent=77 // pred_check_branch
          %548 = sbr.rel (%p546) target = $region82
        $region81: #{block_forward.12} parent=77 // pred_region
          %p549 = scmp.lt.s32.totalorder %s15, 2
          %s550 = scalar_select %p549, %s15, 2
          %s551 = smul.addr %s550, 8
          %s552 = scalar_lea.vmem %s3, %s551
        $region82: #{block_forward.12} parent=77 // pred_fallthru
          _
      $region78: #{block_forward.12} parent=5 // pred_fallthru
        _
    $region6: #{block_forward.12} parent=1 // loop_footer
      %s13 = sadd.s32 1, %s9
    $region7: #{block_forward.12} parent=1 // loop_footer_branch
      %8 = sbr.rel target = $region3
    $region8: #{block_forward.12} parent=1 // loop_exit
      _

// kernel: tile.8
$region0: #{tile.8}
  #allocation0 [shape = 's32[1]{0}', space=sflag, size = 0x4, scoped, tag = 'scoped memory for tile.8']
  %s0 = inlined_call_operand.vmem [shape: f32[8], index: 0, kind: input, shape index: {}]
  %s1 = inlined_call_operand.vmem [shape: f32[4,8], index: 1, kind: output, shape index: {}]
  // Predicated region
  $region2: #{tile.8} parent=0 // pred_check
    _
  $region3: #{tile.8} parent=0 // pred_check_branch
    %3 = sbr.rel (0) target = $region5
  $region4: #{tile.8} parent=0 // pred_region
    _
  $region5: #{tile.8} parent=0 // pred_fallthru
    _
  %v4 = vld [vmem:[%s0] ss:$0 sm:$0xff]
  %5 = vst [vmem:[%s1] sm:$0xf] %v4

// kernel: block_forward.14
$region0: #{block_forward.14}
  #allocation0 [shape = 'u32[]', space=smem, size = 0x4, offset = 0x4, fixed_abs, tag = 'smem constant byte address 0x4 - core index']
  #allocation1 [shape = 'u32[144,128]{1,0:T(1,128)}', space=vmem, size = 0x12000, scoped, tag = 'internal scratch']
  %s0 = inlined_call_operand.vmem [shape: f32[32,64], index: 0, kind: input, shape index: {}]
  %s1 = inlined_call_operand.vmem [shape: f32[64,384], index: 1, kind: input, shape index: {}]
  %s2 = inlined_call_operand.vmem [shape: f32[32,1], index: 2, kind: input, shape index: {}]
  %s3 = inlined_call_operand.vmem [shape: f32[32,384], index: 3, kind: output, shape index: {}]
  %s4 = sld [smem:[#allocation0]]
  $region117: #{block_forward.14} parent=0
    _
  %s6 = ssub.s32 1, %s4
  %s7 = scalar_select 0, %s6, %s4
  $region1: #{block_forward.14} parent=0
    #allocation2 [shape = 'u8[65536]{0}', space=vmem, size = 0x10000, scoped, tag = 'input window, operand 1']
    #allocation3 [shape = 'u8[32768]{0}', space=vmem, size = 0x8000, scoped, tag = 'output window, operand 0']
    loop: start=0, step=1, limit=5
    $region2: #{block_forward.14} parent=1 // loop_pre_header
      _
    $region3: #{block_forward.14} parent=1 // loop_header
      %s9 = sphi 0, %s13
      %p10 = scmp.ge.s32.totalorder %s9, 5
      %s17 = sphi 0, %s17
      %s19 = sphi 0, %s17
      %s20 = sphi 0, %s19
      %s34 = sphi 0, %s20
      %s40 = sphi 0, %s42
      %s43 = sphi 0, %s40
      %s44 = sphi 0, %s43
      %s60 = sphi 0, %s44
      %s64 = sphi 0, %s64
      %s66 = sphi 0, %s64
      %s67 = sphi 0, %s66
      %s81 = sphi 0, %s67
      %s87 = sphi 0, %s89
      %s90 = sphi 0, %s87
      %s91 = sphi 0, %s90
      %s107 = sphi 0, %s91
    $region4: #{block_forward.14} parent=1 // loop_header_branch
      %12 = sbr.rel (%p10) target = $region8
    $region5: #{block_forward.14} parent=1 // loop_body
      %s14 = ssub.s32 %s9, 1
      %s15 = ssub.s32 %s9, 2
      %s16 = sadd.s32 %s9, 1
      %s18 = sadd.s32 %s17, 1
      %p21 = scmp.eq.s32.totalorder %s9, 2
      %p22 = scmp.ne.s32.totalorder %s17, %s19
      %p23 = scmp.eq.s32.totalorder %s9, 0
      %p24 = por %p22, %p23
      %p25 = scmp.ne.s32.totalorder %s17, %s19
      %p26 = scmp.eq.s32.totalorder %s14, 2
      %p27 = por %p25, %p26
      %p28 = scmp.ne.s32.totalorder %s19, %s20
      %p29 = scmp.eq.s32.totalorder %s14, 0
      %p30 = por %p28, %p29
      %p31 = scmp.ne.s32.totalorder %s19, %s20
      %p32 = scmp.eq.s32.totalorder %s15, 2
      %p33 = por %p31, %p32
      %p35 = scmp.ne.s32.totalorder %s20, %s34
      %p36 = scmp.eq.s32.totalorder %s15, 0
      %p37 = por %p35, %p36
      %s38 = ssub.s32 %s9, %s16
      %p39 = scmp.eq.s32.totalorder %s38, 0
      %s41 = sadd.s32 %s40, 1
      %s42 = scalar_select %p39, %s40, %s41
      %p45 = pneg %p39
      %p46 = scmp.eq.s32.totalorder %s9, 2
      %p47 = por %p45, %p46
      %p48 = scmp.ne.s32.totalorder %s40, %s43
      %p49 = scmp.eq.s32.totalorder %s9, 0
      %p50 = por %p48, %p49
      %p51 = scmp.ne.s32.totalorder %s40, %s43
      %p52 = scmp.eq.s32.totalorder %s14, 2
      %p53 = por %p51, %p52
      %p54 = scmp.ne.s32.totalorder %s43, %s44
      %p55 = scmp.eq.s32.totalorder %s14, 0
      %p56 = por %p54, %p55
      %p57 = scmp.ne.s32.totalorder %s43, %s44
      %p58 = scmp.eq.s32.totalorder %s15, 2
      %p59 = por %p57, %p58
      %p61 = scmp.ne.s32.totalorder %s44, %s60
      %p62 = scmp.eq.s32.totalorder %s15, 0
      %p63 = por %p61, %p62
      %s65 = sadd.s32 %s64, 1
      %p68 = scmp.eq.s32.totalorder %s9, 2
      %p69 = scmp.ne.s32.totalorder %s64, %s66
      %p70 = scmp.eq.s32.totalorder %s9, 0
      %p71 = por %p69, %p70
      %p72 = scmp.ne.s32.totalorder %s64, %s66
      %p73 = scmp.eq.s32.totalorder %s14, 2
      %p74 = por %p72, %p73
      %p75 = scmp.ne.s32.totalorder %s66, %s67
      %p76 = scmp.eq.s32.totalorder %s14, 0
      %p77 = por %p75, %p76
      %p78 = scmp.ne.s32.totalorder %s66, %s67
      %p79 = scmp.eq.s32.totalorder %s15, 2
      %p80 = por %p78, %p79
      %p82 = scmp.ne.s32.totalorder %s67, %s81
      %p83 = scmp.eq.s32.totalorder %s15, 0
      %p84 = por %p82, %p83
      %s85 = ssub.s32 %s9, %s16
      %p86 = scmp.eq.s32.totalorder %s85, 0
      %s88 = sadd.s32 %s87, 1
      %s89 = scalar_select %p86, %s87, %s88
      %p92 = pneg %p86
      %p93 = scmp.eq.s32.totalorder %s9, 2
      %p94 = por %p92, %p93
      %p95 = scmp.ne.s32.totalorder %s87, %s90
      %p96 = scmp.eq.s32.totalorder %s9, 0
      %p97 = por %p95, %p96
      %p98 = scmp.ne.s32.totalorder %s87, %s90
      %p99 = scmp.eq.s32.totalorder %s14, 2
      %p100 = por %p98, %p99
      %p101 = scmp.ne.s32.totalorder %s90, %s91
      %p102 = scmp.eq.s32.totalorder %s14, 0
      %p103 = por %p101, %p102
      %p104 = scmp.ne.s32.totalorder %s90, %s91
      %p105 = scmp.eq.s32.totalorder %s15, 2
      %p106 = por %p104, %p105
      %p108 = scmp.ne.s32.totalorder %s91, %s107
      %p109 = scmp.eq.s32.totalorder %s15, 0
      %p110 = por %p108, %p109
      %p111 = scmp.le.s32.totalorder 1, %s9
      %p112 = scmp.lt.s32.totalorder %s9, 4
      %p113 = pnand %p111, %p112
      %p114 = pneg %p113
      // Predicated region
      $region9: #{block_forward.14} parent=5 // pred_check
        _
      $region10: #{block_forward.14} parent=5 // pred_check_branch
        %116 = sbr.rel (%p113) target = $region12
      $region11: #{block_forward.14} parent=5 // pred_region
        %s117 = ssub.s32 %s9, 1
        // Predicated region
        $region13: #{block_forward.14} parent=11 // pred_check
          %p118 = pneg %p30
        $region14: #{block_forward.14} parent=11 // pred_check_branch
          %120 = sbr.rel (%p118) target = $region16
        $region15: #{block_forward.14} parent=11 // pred_region
          _
        $region16: #{block_forward.14} parent=11 // pred_fallthru
          _
        // Predicated region
        $region17: #{block_forward.14} parent=11 // pred_check
          %p121 = pneg %p77
        $region18: #{block_forward.14} parent=11 // pred_check_branch
          %123 = sbr.rel (%p121) target = $region20
        $region19: #{block_forward.14} parent=11 // pred_region
          _
        $region20: #{block_forward.14} parent=11 // pred_fallthru
          _
      $region12: #{block_forward.14} parent=5 // pred_fallthru
        _
      %p124 = scmp.lt.s32.totalorder %s9, 3
      // Predicated region
      $region21: #{block_forward.14} parent=5 // pred_check
        %p125 = pneg %p124
      $region22: #{block_forward.14} parent=5 // pred_check_branch
        %127 = sbr.rel (%p125) target = $region24
      $region23: #{block_forward.14} parent=5 // pred_region
        // Predicated region
        $region25: #{block_forward.14} parent=23 // pred_check
          %p128 = pneg %p50
        $region26: #{block_forward.14} parent=23 // pred_check_branch
          %130 = sbr.rel (%p128) target = $region28
        $region27: #{block_forward.14} parent=23 // pred_region
          %s131 = sand.u32 %s40, 1
          %s132 = sand.u32 %s40, 1
          %s133 = smul.addr %s132, 64
          %s134 = scalar_lea.vmem [#allocation2], %s133
          %s135 = smul.addr %s9, 8
          %s136 = scalar_lea.vmem %s1, %s135
          // Predicated region
          $region29: #{block_forward.14} parent=27 // pred_check
            _
          $region30: #{block_forward.14} parent=27 // pred_check_branch
            %138 = sbr.rel (0) target = $region32
          $region31: #{block_forward.14} parent=27 // pred_region
            // Predicated region
            $region33: #{block_forward.14} parent=31 // pred_check
              _
            $region34: #{block_forward.14} parent=31 // pred_check_branch
              %140 = sbr.rel (0) target = $region36
            $region35: #{block_forward.14} parent=31 // pred_region
              // Predicated region
              $region48: #{block_forward.14} parent=35 // pred_check
                _
              $region49: #{block_forward.14} parent=35 // pred_check_branch
                %169 = sbr.rel (0) target = $region51
              $region50: #{block_forward.14} parent=35 // pred_region
                loop: start=0, step=1, limit=1
                $region52: #{block_forward.14} parent=50 // loop_pre_header
                  _
                $region53: #{block_forward.14} parent=50 // loop_header
                  %s171 = sphi 0, %s175
                  %p172 = scmp.ge.s32.totalorder %s171, 1
                  %s176 = sphi %s136, %s136
                  %s177 = sphi %s134, %s134
                $region54: #{block_forward.14} parent=50 // loop_header_branch
                  %174 = sbr.rel (%p172) target = $region58
                $region55: #{block_forward.14} parent=50 // loop_body
                  %v178 = vld [vmem:[%s176] sm:$0xff]
                  %179 = vst [vmem:[%s177] sm:$0xff] %v178
                  %v180 = vld [vmem:[%s176 + $0x18] sm:$0xff]
                  %181 = vst [vmem:[%s177 + $0x8] sm:$0xff] %v180
                  %v182 = vld [vmem:[%s176 + $0x30] sm:$0xff]
                  %183 = vst [vmem:[%s177 + $0x10] sm:$0xff] %v182
                  %v184 = vld [vmem:[%s176 + $0x48] sm:$0xff]
                  %185 = vst [vmem:[%s177 + $0x18] sm:$0xff] %v184
                  %v186 = vld [vmem:[%s176 + $0x60] sm:$0xff]
                  %187 = vst [vmem:[%s177 + $0x20] sm:$0xff] %v186
                  %v188 = vld [vmem:[%s176 + $0x78] sm:$0xff]
                  %189 = vst [vmem:[%s177 + $0x28] sm:$0xff] %v188
                  %v190 = vld [vmem:[%s176 + $0x90] sm:$0xff]
                  %191 = vst [vmem:[%s177 + $0x30] sm:$0xff] %v190
                  %v192 = vld [vmem:[%s176 + $0xa8] sm:$0xff]
                  %193 = vst [vmem:[%s177 + $0x38] sm:$0xff] %v192
                $region56: #{block_forward.14} parent=50 // loop_footer
                  %s175 = sadd.s32 1, %s171
                $region57: #{block_forward.14} parent=50 // loop_footer_branch
                  %170 = sbr.rel target = $region53
                $region58: #{block_forward.14} parent=50 // loop_exit
                  _
              $region51: #{block_forward.14} parent=35 // pred_fallthru
                _
              // Predicated region
              $region59: #{block_forward.14} parent=35 // pred_check
                _
              $region60: #{block_forward.14} parent=35 // pred_check_branch
                %195 = sbr.rel target = $region62
              $region61: #{block_forward.14} parent=35 // pred_region
                _
              $region62: #{block_forward.14} parent=35 // pred_fallthru
                _
            $region36: #{block_forward.14} parent=31 // pred_fallthru
              _
            // Predicated region
            $region37: #{block_forward.14} parent=31 // pred_check
              _
            $region38: #{block_forward.14} parent=31 // pred_check_branch
              %142 = sbr.rel target = $region40
            $region39: #{block_forward.14} parent=31 // pred_region
              loop: start=0, step=1, limit=1
              $region41: #{block_forward.14} parent=39 // loop_pre_header
                _
              $region42: #{block_forward.14} parent=39 // loop_header
                %s145 = sphi 0, %s149
                %p146 = scmp.ge.s32.totalorder %s145, 1
                %s150 = sphi %s136, %s136
                %s151 = sphi %s134, %s134
              $region43: #{block_forward.14} parent=39 // loop_header_branch
                %148 = sbr.rel (%p146) target = $region47
              $region44: #{block_forward.14} parent=39 // loop_body
                %v152 = vld [vmem:[%s150] sm:$0xff]
                %153 = vst [vmem:[%s151] sm:$0xff] %v152
                %v154 = vld [vmem:[%s150 + $0x18] sm:$0xff]
                %155 = vst [vmem:[%s151 + $0x8] sm:$0xff] %v154
                %v156 = vld [vmem:[%s150 + $0x30] sm:$0xff]
                %157 = vst [vmem:[%s151 + $0x10] sm:$0xff] %v156
                %v158 = vld [vmem:[%s150 + $0x48] sm:$0xff]
                %159 = vst [vmem:[%s151 + $0x18] sm:$0xff] %v158
                %v160 = vld [vmem:[%s150 + $0x60] sm:$0xff]
                %161 = vst [vmem:[%s151 + $0x20] sm:$0xff] %v160
                %v162 = vld [vmem:[%s150 + $0x78] sm:$0xff]
                %163 = vst [vmem:[%s151 + $0x28] sm:$0xff] %v162
                %v164 = vld [vmem:[%s150 + $0x90] sm:$0xff]
                %165 = vst [vmem:[%s151 + $0x30] sm:$0xff] %v164
                %v166 = vld [vmem:[%s150 + $0xa8] sm:$0xff]
                %167 = vst [vmem:[%s151 + $0x38] sm:$0xff] %v166
              $region45: #{block_forward.14} parent=39 // loop_footer
                %s149 = sadd.s32 1, %s145
              $region46: #{block_forward.14} parent=39 // loop_footer_branch
                %144 = sbr.rel target = $region42
              $region47: #{block_forward.14} parent=39 // loop_exit
                _
            $region40: #{block_forward.14} parent=31 // pred_fallthru
              _
          $region32: #{block_forward.14} parent=27 // pred_fallthru
            _
          %196 = vnop
        $region28: #{block_forward.14} parent=23 // pred_fallthru
          _
      $region24: #{block_forward.14} parent=5 // pred_fallthru
        _
      %p197 = scmp.le.s32.totalorder 1, %s9
      %p198 = scmp.lt.s32.totalorder %s9, 4
      %p199 = pnand %p197, %p198
      %p200 = pneg %p199
      // Predicated region
      $region63: #{block_forward.14} parent=5 // pred_check
        _
      $region64: #{block_forward.14} parent=5 // pred_check_branch
        %202 = sbr.rel (%p199) target = $region66
      $region65: #{block_forward.14} parent=5 // pred_region
        %s203 = ssub.s32 %s9, 1
        %s204 = sand.u32 %s43, 1
        %s205 = sand.u32 %s43, 1
        %s206 = smul.addr %s205, 64
        %s207 = scalar_lea.vmem [#allocation2], %s206
        // Predicated region
        $region67: #{block_forward.14} parent=65 // pred_check
          %p208 = pneg %p56
        $region68: #{block_forward.14} parent=65 // pred_check_branch
          %210 = sbr.rel (%p208) target = $region70
        $region69: #{block_forward.14} parent=65 // pred_region
          _
        $region70: #{block_forward.14} parent=65 // pred_fallthru
          _
        %p211 = pneg %p30
        %p212 = pneg %p27
        %s213 = sand.u32 %s43, 1
        %s214 = sand.u32 %s43, 1
        %s215 = smul.addr %s214, 64
        %s216 = scalar_lea.vmem [#allocation2], %s215
        %p217 = pneg %p56
        %p218 = pneg %p53
        %p219 = pneg %p77
        %p220 = pneg %p74
        %p221 = pneg %p103
        %p222 = pneg %p100
        %s223 = sand.u32 %s90, 1
        %s224 = sand.u32 %s90, 1
        %s225 = smul.addr %s224, 32
        %s226 = scalar_lea.vmem [#allocation3], %s225
        %v227 = vld [vmem:[%s0] sm:$0xff]
        %v228 = vld [vmem:[%s0 + $0x8] sm:$0xff]
        %v229 = vld [vmem:[%s0 + $0x10] sm:$0xff]
        %v230 = vld [vmem:[%s0 + $0x18] sm:$0xff]
        %v231 = vld [vmem:[%s207] sm:$0xff]
        %v232 = vld [vmem:[%s207 + $0x8] sm:$0xff]
        %v233 = vld [vmem:[%s207 + $0x10] sm:$0xff]
        %v234 = vld [vmem:[%s207 + $0x18] sm:$0xff]
        %v235 = vld [vmem:[%s207 + $0x20] sm:$0xff]
        %v236 = vld [vmem:[%s207 + $0x28] sm:$0xff]
        %v237 = vld [vmem:[%s207 + $0x30] sm:$0xff]
        %v238 = vld [vmem:[%s207 + $0x38] sm:$0xff]
        %v239 = vld [vmem:[%s2] sm:$0xff]
        %v240 = vld [vmem:[%s2 + $0x8] sm:$0xff]
        %v241 = vld [vmem:[%s2 + $0x10] sm:$0xff]
        %v242 = vld [vmem:[%s2 + $0x18] sm:$0xff]
        %244 = vset.pattern.permute.xlu0 0
        %245 = vperm.xlu0 %244, %v239
        %v246 = vpop.permute.xlu0 %245
        %249 = vset.pattern.permute.xlu0 0
        %250 = vperm.xlu0 %249, %v240
        %v251 = vpop.permute.xlu0 %250
        %254 = vset.pattern.permute.xlu0 0
        %255 = vperm.xlu0 %254, %v241
        %v256 = vpop.permute.xlu0 %255
        %259 = vset.pattern.permute.xlu0 0
        %260 = vperm.xlu0 %259, %v242
        %v261 = vpop.permute.xlu0 %260
        %vm263 = vcmask 523264
        %v265 = vsel %vm263, %v227, 0
        %v268 = vsel %vm263, %v228, 0
        %v271 = vsel %vm263, %v229, 0
        %v274 = vsel %vm263, %v230, 0
        %276 = vmatprep.subr.mxu0 0.0
        %277 = vmatpush1.msra.mxu0 %v231
        %278 = vmatprep.subr.mxu0 0.0
        %279 = vmatpush1.msra.mxu0 %v232
        %280 = vmatprep.subr.mxu0 0.0
        %281 = vmatpush1.msra.mxu0 %v233
        %282 = vmatprep.subr.mxu0 0.0
        %283 = vmatpush1.msra.mxu0 %v234
        %284 = vmatprep.subr.mxu0 0.0
        %285 = vmatpush1.msra.mxu0 %v235
        %286 = vmatprep.subr.mxu0 0.0
        %287 = vmatpush1.msra.mxu0 %v236
        %288 = vmatprep.subr.mxu0 0.0
        %289 = vmatpush1.msra.mxu0 %v237
        %290 = vmatprep.subr.mxu0 0.0
        %291 = vmatpush1.msra.mxu0 %v238
        %292 = vmatprep.subr.mxu0 0.0
        %293 = vmatpush1.msra.mxu0 0.0
        %294 = vmatprep.subr.mxu0 0.0
        %295 = vmatpush1.msra.mxu0 0.0
        %296 = vmatprep.subr.mxu0 0.0
        %297 = vmatpush1.msra.mxu0 0.0
        %298 = vmatprep.subr.mxu0 0.0
        %299 = vmatpush1.msra.mxu0 0.0
        %300 = vmatprep.subr.mxu0 0.0
        %301 = vmatpush1.msra.mxu0 0.0
        %302 = vmatprep.subr.mxu0 0.0
        %303 = vmatpush1.msra.mxu0 0.0
        %304 = vmatprep.subr.mxu0 0.0
        %305 = vmatpush1.msra.mxu0 0.0
        %306 = vmatprep.subr.mxu0 0.0
        %307 = vmatpush1.msra.mxu0 0.0
        %308 = vmatprep.subr.mxu0 0.0
        %309 = vmatpush1.msra.mxu0 0.0
        %310 = vmatprep.subr.mxu0 0.0
        %311 = vmatpush1.msra.mxu0 0.0
        %312 = vmatprep.subr.mxu0 0.0
        %313 = vmatpush1.msra.mxu0 0.0
        %314 = vmatprep.subr.mxu0 0.0
        %315 = vmatpush1.msra.mxu0 0.0
        %316 = vmatprep.subr.mxu0 0.0
        %317 = vmatpush1.msra.mxu0 0.0
        %318 = vmatprep.subr.mxu0 0.0
        %319 = vmatpush1.msra.mxu0 0.0
        %320 = vmatprep.subr.mxu0 0.0
        %321 = vmatpush1.msra.mxu0 0.0
        %322 = vmatprep.subr.mxu0 0.0
        %323 = vmatpush1.msra.mxu0 0.0
        %324 = vmatprep.subr.mxu0 0.0
        %325 = vmatpush1.msra.mxu0 0.0
        %326 = vmatprep.subr.mxu0 0.0
        %327 = vmatpush1.msra.mxu0 0.0
        %328 = vmatprep.subr.mxu0 0.0
        %329 = vmatpush1.msra.mxu0 0.0
        %330 = vmatprep.subr.mxu0 0.0
        %331 = vmatpush1.msra.mxu0 0.0
        %332 = vmatprep.subr.mxu0 0.0
        %333 = vmatpush1.msra.mxu0 0.0
        %334 = vmatprep.subr.mxu0 0.0
        %335 = vmatpush1.msra.mxu0 0.0
        %336 = vmatprep.subr.mxu0 0.0
        %337 = vmatpush1.msra.mxu0 0.0
        %338 = vmatprep.subr.mxu0 0.0
        %339 = vmatpush1.msra.mxu0 0.0
        %340 = vmatprep.mubr.f32.mxu0 0.0
        %341 = vmatmul.mubr.f32.gmra.mrb[0].mxu0 %v265
        %v342 = vpop.f32.mrb[0].mxu0
        %v343 = vadd.f32 %v246, %v342
        %v344 = vpop.f32.mrb[0].mxu0
        %345 = vmatprep.mubr.f32.mxu0 0.0
        %346 = vmatmul.mubr.f32.gmra.mrb[0].mxu0 %v268
        %v347 = vpop.f32.mrb[0].mxu0
        %v348 = vadd.f32 %v251, %v347
        %v349 = vpop.f32.mrb[0].mxu0
        %350 = vmatprep.mubr.f32.mxu0 0.0
        %351 = vmatmul.mubr.f32.gmra.mrb[0].mxu0 %v271
        %v352 = vpop.f32.mrb[0].mxu0
        %v353 = vadd.f32 %v256, %v352
        %v354 = vpop.f32.mrb[0].mxu0
        %355 = vmatprep.mubr.f32.mxu0 0.0
        %356 = vmatmul.mubr.f32.gmra.mrb[0].mxu0 %v274
        %v357 = vpop.f32.mrb[0].mxu0
        %v358 = vadd.f32 %v261, %v357
        %v359 = vpop.f32.mrb[0].mxu0
        %360 = vdwg.mxu0
        %361 = vst [vmem:[%s226] sm:$0xff] %v343
        %362 = vst [vmem:[%s226 + $0x8] sm:$0xff] %v348
        %363 = vst [vmem:[%s226 + $0x10] sm:$0xff] %v353
        %364 = vst [vmem:[%s226 + $0x18] sm:$0xff] %v358
        %s365 = sand.u32 %s90, 1
        %s366 = sand.u32 %s90, 1
        %s367 = smul.addr %s366, 32
        %s368 = scalar_lea.vmem [#allocation3], %s367
        // Predicated region
        $region71: #{block_forward.14} parent=65 // pred_check
          %p369 = pneg %p100
        $region72: #{block_forward.14} parent=65 // pred_check_branch
          %371 = sbr.rel (%p369) target = $region74
        $region73: #{block_forward.14} parent=65 // pred_region
          %s372 = smul.addr %s14, 8
          %s373 = scalar_lea.vmem %s3, %s372
          // Predicated region
          $region75: #{block_forward.14} parent=73 // pred_check
            _
          $region76: #{block_forward.14} parent=73 // pred_check_branch
            %375 = sbr.rel (0) target = $region78
          $region77: #{block_forward.14} parent=73 // pred_region
            // Predicated region
            $region79: #{block_forward.14} parent=77 // pred_check
              _
            $region80: #{block_forward.14} parent=77 // pred_check_branch
              %377 = sbr.rel (0) target = $region82
            $region81: #{block_forward.14} parent=77 // pred_region
              // Predicated region
              $region94: #{block_forward.14} parent=81 // pred_check
                _
              $region95: #{block_forward.14} parent=81 // pred_check_branch
                %398 = sbr.rel (0) target = $region97
              $region96: #{block_forward.14} parent=81 // pred_region
                loop: start=0, step=1, limit=1
                $region98: #{block_forward.14} parent=96 // loop_pre_header
                  _
                $region99: #{block_forward.14} parent=96 // loop_header
                  %s400 = sphi 0, %s404
                  %p401 = scmp.ge.s32.totalorder %s400, 1
                  %s405 = sphi %s368, %s368
                  %s406 = sphi %s373, %s373
                $region100: #{block_forward.14} parent=96 // loop_header_branch
                  %403 = sbr.rel (%p401) target = $region104
                $region101: #{block_forward.14} parent=96 // loop_body
                  %v407 = vld [vmem:[%s405] sm:$0xff]
                  %408 = vst [vmem:[%s406] sm:$0xff] %v407
                  %v409 = vld [vmem:[%s405 + $0x8] sm:$0xff]
                  %410 = vst [vmem:[%s406 + $0x18] sm:$0xff] %v409
                  %v411 = vld [vmem:[%s405 + $0x10] sm:$0xff]
                  %412 = vst [vmem:[%s406 + $0x30] sm:$0xff] %v411
                  %v413 = vld [vmem:[%s405 + $0x18] sm:$0xff]
                  %414 = vst [vmem:[%s406 + $0x48] sm:$0xff] %v413
                $region102: #{block_forward.14} parent=96 // loop_footer
                  %s404 = sadd.s32 1, %s400
                $region103: #{block_forward.14} parent=96 // loop_footer_branch
                  %399 = sbr.rel target = $region99
                $region104: #{block_forward.14} parent=96 // loop_exit
                  _
              $region97: #{block_forward.14} parent=81 // pred_fallthru
                _
              // Predicated region
              $region105: #{block_forward.14} parent=81 // pred_check
                _
              $region106: #{block_forward.14} parent=81 // pred_check_branch
                %416 = sbr.rel target = $region108
              $region107: #{block_forward.14} parent=81 // pred_region
                _
              $region108: #{block_forward.14} parent=81 // pred_fallthru
                _
            $region82: #{block_forward.14} parent=77 // pred_fallthru
              _
            // Predicated region
            $region83: #{block_forward.14} parent=77 // pred_check
              _
            $region84: #{block_forward.14} parent=77 // pred_check_branch
              %379 = sbr.rel target = $region86
            $region85: #{block_forward.14} parent=77 // pred_region
              loop: start=0, step=1, limit=1
              $region87: #{block_forward.14} parent=85 // loop_pre_header
                _
              $region88: #{block_forward.14} parent=85 // loop_header
                %s382 = sphi 0, %s386
                %p383 = scmp.ge.s32.totalorder %s382, 1
                %s387 = sphi %s368, %s368
                %s388 = sphi %s373, %s373
              $region89: #{block_forward.14} parent=85 // loop_header_branch
                %385 = sbr.rel (%p383) target = $region93
              $region90: #{block_forward.14} parent=85 // loop_body
                %v389 = vld [vmem:[%s387] sm:$0xff]
                %390 = vst [vmem:[%s388] sm:$0xff] %v389
                %v391 = vld [vmem:[%s387 + $0x8] sm:$0xff]
                %392 = vst [vmem:[%s388 + $0x18] sm:$0xff] %v391
                %v393 = vld [vmem:[%s387 + $0x10] sm:$0xff]
                %394 = vst [vmem:[%s388 + $0x30] sm:$0xff] %v393
                %v395 = vld [vmem:[%s387 + $0x18] sm:$0xff]
                %396 = vst [vmem:[%s388 + $0x48] sm:$0xff] %v395
              $region91: #{block_forward.14} parent=85 // loop_footer
                %s386 = sadd.s32 1, %s382
              $region92: #{block_forward.14} parent=85 // loop_footer_branch
                %381 = sbr.rel target = $region88
              $region93: #{block_forward.14} parent=85 // loop_exit
                _
            $region86: #{block_forward.14} parent=77 // pred_fallthru
              _
          $region78: #{block_forward.14} parent=73 // pred_fallthru
            _
          %417 = vnop
        $region74: #{block_forward.14} parent=65 // pred_fallthru
          _
      $region66: #{block_forward.14} parent=5 // pred_fallthru
        _
      %p418 = scmp.le.s32.totalorder 2, %s9
      // Predicated region
      $region109: #{block_forward.14} parent=5 // pred_check
        %p419 = pneg %p418
      $region110: #{block_forward.14} parent=5 // pred_check_branch
        %421 = sbr.rel (%p419) target = $region112
      $region111: #{block_forward.14} parent=5 // pred_region
        %s422 = ssub.s32 %s9, 2
        // Predicated region
        $region113: #{block_forward.14} parent=111 // pred_check
          %p423 = pneg %p106
        $region114: #{block_forward.14} parent=111 // pred_check_branch
          %425 = sbr.rel (%p423) target = $region116
        $region115: #{block_forward.14} parent=111 // pred_region
          %s426 = sand.u32 %s91, 1
          %s427 = sand.u32 %s91, 1
          %s428 = smul.addr %s427, 32
          %s429 = scalar_lea.vmem [#allocation3], %s428
        $region116: #{block_forward.14} parent=111 // pred_fallthru
          _
      $region112: #{block_forward.14} parent=5 // pred_fallthru
        _
    $region6: #{block_forward.14} parent=1 // loop_footer
      %s13 = sadd.s32 1, %s9
    $region7: #{block_forward.14} parent=1 // loop_footer_branch
      %8 = sbr.rel target = $region3
    $region8: #{block_forward.14} parent=1 // loop_exit
      _

// kernel: block_forward.15
$region0: #{block_forward.15}
  #allocation0 [shape = 'u32[]', space=smem, size = 0x4, offset = 0x4, fixed_abs, tag = 'smem constant byte address 0x4 - core index']
  #allocation1 [shape = 'u32[144,128]{1,0:T(1,128)}', space=vmem, size = 0x12000, scoped, tag = 'internal scratch']
  %s0 = inlined_call_operand.vmem [shape: f32[8,200], index: 0, kind: input, shape index: {}]
  %s1 = inlined_call_operand.vmem [shape: f32[200,1536], index: 1, kind: input, shape index: {}]
  %s2 = inlined_call_operand.vmem [shape: f32[8,1], index: 2, kind: input, shape index: {}]
  %s3 = inlined_call_operand.vmem [shape: f32[8,1536], index: 3, kind: output, shape index: {}]
  %s4 = sld [smem:[#allocation0]]
  $region68: #{block_forward.15} parent=0
    _
  %s6 = ssub.s32 1, %s4
  %s7 = scalar_select 0, %s6, %s4
  $region1: #{block_forward.15} parent=0
    #allocation2 [shape = 'u8[819200]{0}', space=vmem, size = 0xc8000, scoped, tag = 'input window, operand 1']
    loop: start=0, step=1, limit=5
    $region2: #{block_forward.15} parent=1 // loop_pre_header
      _
    $region3: #{block_forward.15} parent=1 // loop_header
      %s9 = sphi 0, %s13
      %p10 = scmp.ge.s32.totalorder %s9, 5
      %s17 = sphi 0, %s17
      %s19 = sphi 0, %s17
      %s20 = sphi 0, %s19
      %s34 = sphi 0, %s20
      %s40 = sphi 0, %s42
      %s43 = sphi 0, %s40
      %s44 = sphi 0, %s43
      %s60 = sphi 0, %s44
      %s64 = sphi 0, %s64
      %s66 = sphi 0, %s64
      %s67 = sphi 0, %s66
      %s81 = sphi 0, %s67
      %s87 = sphi 0, %s89
      %s90 = sphi 0, %s87
      %s91 = sphi 0, %s90
      %s107 = sphi 0, %s91
    $region4: #{block_forward.15} parent=1 // loop_header_branch
      %12 = sbr.rel (%p10) target = $region8
    $region5: #{block_forward.15} parent=1 // loop_body
      %s14 = ssub.s32 %s9, 1
      %s15 = ssub.s32 %s9, 2
      %s16 = sadd.s32 %s9, 1
      %s18 = sadd.s32 %s17, 1
      %p21 = scmp.eq.s32.totalorder %s9, 2
      %p22 = scmp.ne.s32.totalorder %s17, %s19
      %p23 = scmp.eq.s32.totalorder %s9, 0
      %p24 = por %p22, %p23
      %p25 = scmp.ne.s32.totalorder %s17, %s19
      %p26 = scmp.eq.s32.totalorder %s14, 2
      %p27 = por %p25, %p26
      %p28 = scmp.ne.s32.totalorder %s19, %s20
      %p29 = scmp.eq.s32.totalorder %s14, 0
      %p30 = por %p28, %p29
      %p31 = scmp.ne.s32.totalorder %s19, %s20
      %p32 = scmp.eq.s32.totalorder %s15, 2
      %p33 = por %p31, %p32
      %p35 = scmp.ne.s32.totalorder %s20, %s34
      %p36 = scmp.eq.s32.totalorder %s15, 0
      %p37 = por %p35, %p36
      %s38 = ssub.s32 %s9, %s16
      %p39 = scmp.eq.s32.totalorder %s38, 0
      %s41 = sadd.s32 %s40, 1
      %s42 = scalar_select %p39, %s40, %s41
      %p45 = pneg %p39
      %p46 = scmp.eq.s32.totalorder %s9, 2
      %p47 = por %p45, %p46
      %p48 = scmp.ne.s32.totalorder %s40, %s43
      %p49 = scmp.eq.s32.totalorder %s9, 0
      %p50 = por %p48, %p49
      %p51 = scmp.ne.s32.totalorder %s40, %s43
      %p52 = scmp.eq.s32.totalorder %s14, 2
      %p53 = por %p51, %p52
      %p54 = scmp.ne.s32.totalorder %s43, %s44
      %p55 = scmp.eq.s32.totalorder %s14, 0
      %p56 = por %p54, %p55
      %p57 = scmp.ne.s32.totalorder %s43, %s44
      %p58 = scmp.eq.s32.totalorder %s15, 2
      %p59 = por %p57, %p58
      %p61 = scmp.ne.s32.totalorder %s44, %s60
      %p62 = scmp.eq.s32.totalorder %s15, 0
      %p63 = por %p61, %p62
      %s65 = sadd.s32 %s64, 1
      %p68 = scmp.eq.s32.totalorder %s9, 2
      %p69 = scmp.ne.s32.totalorder %s64, %s66
      %p70 = scmp.eq.s32.totalorder %s9, 0
      %p71 = por %p69, %p70
      %p72 = scmp.ne.s32.totalorder %s64, %s66
      %p73 = scmp.eq.s32.totalorder %s14, 2
      %p74 = por %p72, %p73
      %p75 = scmp.ne.s32.totalorder %s66, %s67
      %p76 = scmp.eq.s32.totalorder %s14, 0
      %p77 = por %p75, %p76
      %p78 = scmp.ne.s32.totalorder %s66, %s67
      %p79 = scmp.eq.s32.totalorder %s15, 2
      %p80 = por %p78, %p79
      %p82 = scmp.ne.s32.totalorder %s67, %s81
      %p83 = scmp.eq.s32.totalorder %s15, 0
      %p84 = por %p82, %p83
      %s85 = ssub.s32 %s9, %s16
      %p86 = scmp.eq.s32.totalorder %s85, 0
      %s88 = sadd.s32 %s87, 1
      %s89 = scalar_select %p86, %s87, %s88
      %p92 = pneg %p86
      %p93 = scmp.eq.s32.totalorder %s9, 2
      %p94 = por %p92, %p93
      %p95 = scmp.ne.s32.totalorder %s87, %s90
      %p96 = scmp.eq.s32.totalorder %s9, 0
      %p97 = por %p95, %p96
      %p98 = scmp.ne.s32.totalorder %s87, %s90
      %p99 = scmp.eq.s32.totalorder %s14, 2
      %p100 = por %p98, %p99
      %p101 = scmp.ne.s32.totalorder %s90, %s91
      %p102 = scmp.eq.s32.totalorder %s14, 0
      %p103 = por %p101, %p102
      %p104 = scmp.ne.s32.totalorder %s90, %s91
      %p105 = scmp.eq.s32.totalorder %s15, 2
      %p106 = por %p104, %p105
      %p108 = scmp.ne.s32.totalorder %s91, %s107
      %p109 = scmp.eq.s32.totalorder %s15, 0
      %p110 = por %p108, %p109
      %p111 = scmp.le.s32.totalorder 1, %s9
      %p112 = scmp.lt.s32.totalorder %s9, 4
      %p113 = pnand %p111, %p112
      %p114 = pneg %p113
      // Predicated region
      $region9: #{block_forward.15} parent=5 // pred_check
        _
      $region10: #{block_forward.15} parent=5 // pred_check_branch
        %116 = sbr.rel (%p113) target = $region12
      $region11: #{block_forward.15} parent=5 // pred_region
        %s117 = ssub.s32 %s9, 1
        // Predicated region
        $region13: #{block_forward.15} parent=11 // pred_check
          %p118 = pneg %p30
        $region14: #{block_forward.15} parent=11 // pred_check_branch
          %120 = sbr.rel (%p118) target = $region16
        $region15: #{block_forward.15} parent=11 // pred_region
          _
        $region16: #{block_forward.15} parent=11 // pred_fallthru
          _
        // Predicated region
        $region17: #{block_forward.15} parent=11 // pred_check
          %p121 = pneg %p77
        $region18: #{block_forward.15} parent=11 // pred_check_branch
          %123 = sbr.rel (%p121) target = $region20
        $region19: #{block_forward.15} parent=11 // pred_region
          _
        $region20: #{block_forward.15} parent=11 // pred_fallthru
          _
      $region12: #{block_forward.15} parent=5 // pred_fallthru
        _
      %p124 = scmp.lt.s32.totalorder %s9, 3
      // Predicated region
      $region21: #{block_forward.15} parent=5 // pred_check
        %p125 = pneg %p124
      $region22: #{block_forward.15} parent=5 // pred_check_branch
        %127 = sbr.rel (%p125) target = $region24
      $region23: #{block_forward.15} parent=5 // pred_region
        // Predicated region
        $region25: #{block_forward.15} parent=23 // pred_check
          %p128 = pneg %p50
        $region26: #{block_forward.15} parent=23 // pred_check_branch
          %130 = sbr.rel (%p128) target = $region28
        $region27: #{block_forward.15} parent=23 // pred_region
          %s131 = sand.u32 %s40, 1
          %s132 = sand.u32 %s40, 1
          %s133 = smul.addr %s132, 800
          %s134 = scalar_lea.vmem [#allocation2], %s133
          %s135 = smul.u32 4, %s9
          %s136 = smul.addr %s135, 8
          %s137 = scalar_lea.vmem %s1, %s136
          // Predicated region
          $region29: #{block_forward.15} parent=27 // pred_check
            _
          $region30: #{block_forward.15} parent=27 // pred_check_branch
            %139 = sbr.rel (0) target = $region32
          $region31: #{block_forward.15} parent=27 // pred_region
            // Predicated region
            $region33: #{block_forward.15} parent=31 // pred_check
              _
            $region34: #{block_forward.15} parent=31 // pred_check_branch
              %141 = sbr.rel (0) target = $region36
            $region35: #{block_forward.15} parent=31 // pred_region
              loop: start=0, step=1, limit=1
              $region37: #{block_forward.15} parent=35 // loop_pre_header
                _
              $region38: #{block_forward.15} parent=35 // loop_header
                %s143 = sphi 0, %s147
                %p144 = scmp.ge.s32.totalorder %s143, 1
                %s148 = sphi %s137, %s137
                %s149 = sphi %s134, %s134
              $region39: #{block_forward.15} parent=35 // loop_header_branch
                %146 = sbr.rel (%p144) target = $region43
              $region40: #{block_forward.15} parent=35 // loop_body
                %v150 = vld [vmem:[%s148] sm:$0xff]
                %151 = vst [vmem:[%s149] sm:$0xff] %v150
                %v152 = vld [vmem:[%s148 + $0x8] sm:$0xff]
                %153 = vst [vmem:[%s149 + $0x8] sm:$0xff] %v152
                %v154 = vld [vmem:[%s148 + $0x10] sm:$0xff]
                %155 = vst [vmem:[%s149 + $0x10] sm:$0xff] %v154
                %v156 = vld [vmem:[%s148 + $0x18] sm:$0xff]
                %157 = vst [vmem:[%s149 + $0x18] sm:$0xff] %v156
                %v158 = vld [vmem:[%s148 + $0x60] sm:$0xff]
                %159 = vst [vmem:[%s149 + $0x20] sm:$0xff] %v158
                %v160 = vld [vmem:[%s148 + $0x68] sm:$0xff]
                %161 = vst [vmem:[%s149 + $0x28] sm:$0xff] %v160
                %v162 = vld [vmem:[%s148 + $0x70] sm:$0xff]
                %163 = vst [vmem:[%s149 + $0x30] sm:$0xff] %v162
                %v164 = vld [vmem:[%s148 + $0x78] sm:$0xff]
                %165 = vst [vmem:[%s149 + $0x38] sm:$0xff] %v164
                %v166 = vld [vmem:[%s148 + $0xc0] sm:$0xff]
                %167 = vst [vmem:[%s149 + $0x40] sm:$0xff] %v166
                %v168 = vld [vmem:[%s148 + $0xc8] sm:$0xff]
                %169 = vst [vmem:[%s149 + $0x48] sm:$0xff] %v168
                %v170 = vld [vmem:[%s148 + $0xd0] sm:$0xff]
                %171 = vst [vmem:[%s149 + $0x50] sm:$0xff] %v170
                %v172 = vld [vmem:[%s148 + $0xd8] sm:$0xff]
                %173 = vst [vmem:[%s149 + $0x58] sm:$0xff] %v172
                %v174 = vld [vmem:[%s148 + $0x120] sm:$0xff]
                %175 = vst [vmem:[%s149 + $0x60] sm:$0xff] %v174
                %v176 = vld [vmem:[%s148 + $0x128] sm:$0xff]
                %177 = vst [vmem:[%s149 + $0x68] sm:$0xff] %v176
                %v178 = vld [vmem:[%s148 + $0x130] sm:$0xff]
                %179 = vst [vmem:[%s149 + $0x70] sm:$0xff] %v178
                %v180 = vld [vmem:[%s148 + $0x138] sm:$0xff]
                %181 = vst [vmem:[%s149 + $0x78] sm:$0xff] %v180
                %v182 = vld [vmem:[%s148 + $0x180] sm:$0xff]
                %183 = vst [vmem:[%s149 + $0x80] sm:$0xff] %v182
                %v184 = vld [vmem:[%s148 + $0x188] sm:$0xff]
                %185 = vst [vmem:[%s149 + $0x88] sm:$0xff] %v184
                %v186 = vld [vmem:[%s148 + $0x190] sm:$0xff]
                %187 = vst [vmem:[%s149 + $0x90] sm:$0xff] %v186
                %v188 = vld [vmem:[%s148 + $0x198] sm:$0xff]
                %189 = vst [vmem:[%s149 + $0x98] sm:$0xff] %v188
                %v190 = vld [vmem:[%s148 + $0x1e0] sm:$0xff]
                %191 = vst [vmem:[%s149 + $0xa0] sm:$0xff] %v190
                %v192 = vld [vmem:[%s148 + $0x1e8] sm:$0xff]
                %193 = vst [vmem:[%s149 + $0xa8] sm:$0xff] %v192
                %v194 = vld [vmem:[%s148 + $0x1f0] sm:$0xff]
                %195 = vst [vmem:[%s149 + $0xb0] sm:$0xff] %v194
                %v196 = vld [vmem:[%s148 + $0x1f8] sm:$0xff]
                %197 = vst [vmem:[%s149 + $0xb8] sm:$0xff] %v196
                %v198 = vld [vmem:[%s148 + $0x240] sm:$0xff]
                %199 = vst [vmem:[%s149 + $0xc0] sm:$0xff] %v198
                %v200 = vld [vmem:[%s148 + $0x248] sm:$0xff]
                %201 = vst [vmem:[%s149 + $0xc8] sm:$0xff] %v200
                %v202 = vld [vmem:[%s148 + $0x250] sm:$0xff]
                %203 = vst [vmem:[%s149 + $0xd0] sm:$0xff] %v202
                %v204 = vld [vmem:[%s148 + $0x258] sm:$0xff]
                %205 = vst [vmem:[%s149 + $0xd8] sm:$0xff] %v204
                %v206 = vld [vmem:[%s148 + $0x2a0] sm:$0xff]
                %207 = vst [vmem:[%s149 + $0xe0] sm:$0xff] %v206
                %v208 = vld [vmem:[%s148 + $0x2a8] sm:$0xff]
                %209 = vst [vmem:[%s149 + $0xe8] sm:$0xff] %v208
                %v210 = vld [vmem:[%s148 + $0x2b0] sm:$0xff]
                %211 = vst [vmem:[%s149 + $0xf0] sm:$0xff] %v210
                %v212 = vld [vmem:[%s148 + $0x2b8] sm:$0xff]
                %213 = vst [vmem:[%s149 + $0xf8] sm:$0xff] %v212
                %v214 = vld [vmem:[%s148 + $0x300] sm:$0xff]
                %215 = vst [vmem:[%s149 + $0x100] sm:$0xff] %v214
                %v216 = vld [vmem:[%s148 + $0x308] sm:$0xff]
                %217 = vst [vmem:[%s149 + $0x108] sm:$0xff] %v216
                %v218 = vld [vmem:[%s148 + $0x310] sm:$0xff]
                %219 = vst [vmem:[%s149 + $0x110] sm:$0xff] %v218
                %v220 = vld [vmem:[%s148 + $0x318] sm:$0xff]
                %221 = vst [vmem:[%s149 + $0x118] sm:$0xff] %v220
                %v222 = vld [vmem:[%s148 + $0x360] sm:$0xff]
                %223 = vst [vmem:[%s149 + $0x120] sm:$0xff] %v222
                %v224 = vld [vmem:[%s148 + $0x368] sm:$0xff]
                %225 = vst [vmem:[%s149 + $0x128] sm:$0xff] %v224
                %v226 = vld [vmem:[%s148 + $0x370] sm:$0xff]
                %227 = vst [vmem:[%s149 + $0x130] sm:$0xff] %v226
                %v228 = vld [vmem:[%s148 + $0x378] sm:$0xff]
                %229 = vst [vmem:[%s149 + $0x138] sm:$0xff] %v228
                %v230 = vld [vmem:[%s148 + $0x3c0] sm:$0xff]
                %231 = vst [vmem:[%s149 + $0x140] sm:$0xff] %v230
                %v232 = vld [vmem:[%s148 + $0x3c8] sm:$0xff]
                %233 = vst [vmem:[%s149 + $0x148] sm:$0xff] %v232
                %v234 = vld [vmem:[%s148 + $0x3d0] sm:$0xff]
                %235 = vst [vmem:[%s149 + $0x150] sm:$0xff] %v234
                %v236 = vld [vmem:[%s148 + $0x3d8] sm:$0xff]
                %237 = vst [vmem:[%s149 + $0x158] sm:$0xff] %v236
                %v238 = vld [vmem:[%s148 + $0x420] sm:$0xff]
                %239 = vst [vmem:[%s149 + $0x160] sm:$0xff] %v238
                %v240 = vld [vmem:[%s148 + $0x428] sm:$0xff]
                %241 = vst [vmem:[%s149 + $0x168] sm:$0xff] %v240
                %v242 = vld [vmem:[%s148 + $0x430] sm:$0xff]
                %243 = vst [vmem:[%s149 + $0x170] sm:$0xff] %v242
                %v244 = vld [vmem:[%s148 + $0x438] sm:$0xff]
                %245 = vst [vmem:[%s149 + $0x178] sm:$0xff] %v244
                %v246 = vld [vmem:[%s148 + $0x480] sm:$0xff]
                %247 = vst [vmem:[%s149 + $0x180] sm:$0xff] %v246
                %v248 = vld [vmem:[%s148 + $0x488] sm:$0xff]
                %249 = vst [vmem:[%s149 + $0x188] sm:$0xff] %v248
                %v250 = vld [vmem:[%s148 + $0x490] sm:$0xff]
                %251 = vst [vmem:[%s149 + $0x190] sm:$0xff] %v250
                %v252 = vld [vmem:[%s148 + $0x498] sm:$0xff]
                %253 = vst [vmem:[%s149 + $0x198] sm:$0xff] %v252
                %v254 = vld [vmem:[%s148 + $0x4e0] sm:$0xff]
                %255 = vst [vmem:[%s149 + $0x1a0] sm:$0xff] %v254
                %v256 = vld [vmem:[%s148 + $0x4e8] sm:$0xff]
                %257 = vst [vmem:[%s149 + $0x1a8] sm:$0xff] %v256
                %v258 = vld [vmem:[%s148 + $0x4f0] sm:$0xff]
                %259 = vst [vmem:[%s149 + $0x1b0] sm:$0xff] %v258
                %v260 = vld [vmem:[%s148 + $0x4f8] sm:$0xff]
                %261 = vst [vmem:[%s149 + $0x1b8] sm:$0xff] %v260
                %v262 = vld [vmem:[%s148 + $0x540] sm:$0xff]
                %263 = vst [vmem:[%s149 + $0x1c0] sm:$0xff] %v262
                %v264 = vld [vmem:[%s148 + $0x548] sm:$0xff]
                %265 = vst [vmem:[%s149 + $0x1c8] sm:$0xff] %v264
                %v266 = vld [vmem:[%s148 + $0x550] sm:$0xff]
                %267 = vst [vmem:[%s149 + $0x1d0] sm:$0xff] %v266
                %v268 = vld [vmem:[%s148 + $0x558] sm:$0xff]
                %269 = vst [vmem:[%s149 + $0x1d8] sm:$0xff] %v268
                %v270 = vld [vmem:[%s148 + $0x5a0] sm:$0xff]
                %271 = vst [vmem:[%s149 + $0x1e0] sm:$0xff] %v270
                %v272 = vld [vmem:[%s148 + $0x5a8] sm:$0xff]
                %273 = vst [vmem:[%s149 + $0x1e8] sm:$0xff] %v272
                %v274 = vld [vmem:[%s148 + $0x5b0] sm:$0xff]
                %275 = vst [vmem:[%s149 + $0x1f0] sm:$0xff] %v274
                %v276 = vld [vmem:[%s148 + $0x5b8] sm:$0xff]
                %277 = vst [vmem:[%s149 + $0x1f8] sm:$0xff] %v276
                %v278 = vld [vmem:[%s148 + $0x600] sm:$0xff]
                %279 = vst [vmem:[%s149 + $0x200] sm:$0xff] %v278
                %v280 = vld [vmem:[%s148 + $0x608] sm:$0xff]
                %281 = vst [vmem:[%s149 + $0x208] sm:$0xff] %v280
                %v282 = vld [vmem:[%s148 + $0x610] sm:$0xff]
                %283 = vst [vmem:[%s149 + $0x210] sm:$0xff] %v282
                %v284 = vld [vmem:[%s148 + $0x618] sm:$0xff]
                %285 = vst [vmem:[%s149 + $0x218] sm:$0xff] %v284
                %v286 = vld [vmem:[%s148 + $0x660] sm:$0xff]
                %287 = vst [vmem:[%s149 + $0x220] sm:$0xff] %v286
                %v288 = vld [vmem:[%s148 + $0x668] sm:$0xff]
                %289 = vst [vmem:[%s149 + $0x228] sm:$0xff] %v288
                %v290 = vld [vmem:[%s148 + $0x670] sm:$0xff]
                %291 = vst [vmem:[%s149 + $0x230] sm:$0xff] %v290
                %v292 = vld [vmem:[%s148 + $0x678] sm:$0xff]
                %293 = vst [vmem:[%s149 + $0x238] sm:$0xff] %v292
                %v294 = vld [vmem:[%s148 + $0x6c0] sm:$0xff]
                %295 = vst [vmem:[%s149 + $0x240] sm:$0xff] %v294
                %v296 = vld [vmem:[%s148 + $0x6c8] sm:$0xff]
                %297 = vst [vmem:[%s149 + $0x248] sm:$0xff] %v296
                %v298 = vld [vmem:[%s148 + $0x6d0] sm:$0xff]
                %299 = vst [vmem:[%s149 + $0x250] sm:$0xff] %v298
                %v300 = vld [vmem:[%s148 + $0x6d8] sm:$0xff]
                %301 = vst [vmem:[%s149 + $0x258] sm:$0xff] %v300
                %v302 = vld [vmem:[%s148 + $0x720] sm:$0xff]
                %303 = vst [vmem:[%s149 + $0x260] sm:$0xff] %v302
                %v304 = vld [vmem:[%s148 + $0x728] sm:$0xff]
                %305 = vst [vmem:[%s149 + $0x268] sm:$0xff] %v304
                %v306 = vld [vmem:[%s148 + $0x730] sm:$0xff]
                %307 = vst [vmem:[%s149 + $0x270] sm:$0xff] %v306
                %v308 = vld [vmem:[%s148 + $0x738] sm:$0xff]
                %309 = vst [vmem:[%s149 + $0x278] sm:$0xff] %v308
                %v310 = vld [vmem:[%s148 + $0x780] sm:$0xff]
                %311 = vst [vmem:[%s149 + $0x280] sm:$0xff] %v310
                %v312 = vld [vmem:[%s148 + $0x788] sm:$0xff]
                %313 = vst [vmem:[%s149 + $0x288] sm:$0xff] %v312
                %v314 = vld [vmem:[%s148 + $0x790] sm:$0xff]
                %315 = vst [vmem:[%s149 + $0x290] sm:$0xff] %v314
                %v316 = vld [vmem:[%s148 + $0x798] sm:$0xff]
                %317 = vst [vmem:[%s149 + $0x298] sm:$0xff] %v316
                %v318 = vld [vmem:[%s148 + $0x7e0] sm:$0xff]
                %319 = vst [vmem:[%s149 + $0x2a0] sm:$0xff] %v318
                %v320 = vld [vmem:[%s148 + $0x7e8] sm:$0xff]
                %321 = vst [vmem:[%s149 + $0x2a8] sm:$0xff] %v320
                %v322 = vld [vmem:[%s148 + $0x7f0] sm:$0xff]
                %323 = vst [vmem:[%s149 + $0x2b0] sm:$0xff] %v322
                %v324 = vld [vmem:[%s148 + $0x7f8] sm:$0xff]
                %325 = vst [vmem:[%s149 + $0x2b8] sm:$0xff] %v324
                %v326 = vld [vmem:[%s148 + $0x840] sm:$0xff]
                %327 = vst [vmem:[%s149 + $0x2c0] sm:$0xff] %v326
                %v328 = vld [vmem:[%s148 + $0x848] sm:$0xff]
                %329 = vst [vmem:[%s149 + $0x2c8] sm:$0xff] %v328
                %v330 = vld [vmem:[%s148 + $0x850] sm:$0xff]
                %331 = vst [vmem:[%s149 + $0x2d0] sm:$0xff] %v330
                %v332 = vld [vmem:[%s148 + $0x858] sm:$0xff]
                %333 = vst [vmem:[%s149 + $0x2d8] sm:$0xff] %v332
                %v334 = vld [vmem:[%s148 + $0x8a0] sm:$0xff]
                %335 = vst [vmem:[%s149 + $0x2e0] sm:$0xff] %v334
                %v336 = vld [vmem:[%s148 + $0x8a8] sm:$0xff]
                %337 = vst [vmem:[%s149 + $0x2e8] sm:$0xff] %v336
                %v338 = vld [vmem:[%s148 + $0x8b0] sm:$0xff]
                %339 = vst [vmem:[%s149 + $0x2f0] sm:$0xff] %v338
                %v340 = vld [vmem:[%s148 + $0x8b8] sm:$0xff]
                %341 = vst [vmem:[%s149 + $0x2f8] sm:$0xff] %v340
                %v342 = vld [vmem:[%s148 + $0x900] sm:$0xff]
                %343 = vst [vmem:[%s149 + $0x300] sm:$0xff] %v342
                %v344 = vld [vmem:[%s148 + $0x908] sm:$0xff]
                %345 = vst [vmem:[%s149 + $0x308] sm:$0xff] %v344
                %v346 = vld [vmem:[%s148 + $0x910] sm:$0xff]
                %347 = vst [vmem:[%s149 + $0x310] sm:$0xff] %v346
                %v348 = vld [vmem:[%s148 + $0x918] sm:$0xff]
                %349 = vst [vmem:[%s149 + $0x318] sm:$0xff] %v348
              $region41: #{block_forward.15} parent=35 // loop_footer
                %s147 = sadd.s32 1, %s143
              $region42: #{block_forward.15} parent=35 // loop_footer_branch
                %142 = sbr.rel target = $region38
              $region43: #{block_forward.15} parent=35 // loop_exit
                _
            $region36: #{block_forward.15} parent=31 // pred_fallthru
              _
            // Predicated region
            $region44: #{block_forward.15} parent=31 // pred_check
              _
            $region45: #{block_forward.15} parent=31 // pred_check_branch
              %351 = sbr.rel target = $region47
            $region46: #{block_forward.15} parent=31 // pred_region
              _
            $region47: #{block_forward.15} parent=31 // pred_fallthru
              _
          $region32: #{block_forward.15} parent=27 // pred_fallthru
            _
          %352 = vnop
        $region28: #{block_forward.15} parent=23 // pred_fallthru
          _
      $region24: #{block_forward.15} parent=5 // pred_fallthru
        _
      %p353 = scmp.le.s32.totalorder 1, %s9
      %p354 = scmp.lt.s32.totalorder %s9, 4
      %p355 = pnand %p353, %p354
      %p356 = pneg %p355
      // Predicated region
      $region48: #{block_forward.15} parent=5 // pred_check
        _
      $region49: #{block_forward.15} parent=5 // pred_check_branch
        %358 = sbr.rel (%p355) target = $region51
      $region50: #{block_forward.15} parent=5 // pred_region
        %s359 = ssub.s32 %s9, 1
        %s360 = sand.u32 %s43, 1
        %s361 = sand.u32 %s43, 1
        %s362 = smul.addr %s361, 800
        %s363 = scalar_lea.vmem [#allocation2], %s362
        // Predicated region
        $region52: #{block_forward.15} parent=50 // pred_check
          %p364 = pneg %p56
        $region53: #{block_forward.15} parent=50 // pred_check_branch
          %366 = sbr.rel (%p364) target = $region55
        $region54: #{block_forward.15} parent=50 // pred_region
          _
        $region55: #{block_forward.15} parent=50 // pred_fallthru
          _
        %p367 = pneg %p30
        %p368 = pneg %p27
        %s369 = sand.u32 %s43, 1
        %s370 = sand.u32 %s43, 1
        %s371 = smul.addr %s370, 800
        %s372 = scalar_lea.vmem [#allocation2], %s371
        %p373 = pneg %p56
        %p374 = pneg %p53
        %p375 = pneg %p77
        %p376 = pneg %p74
        %p377 = pneg %p103
        %p378 = pneg %p100
        %s379 = smul.u32 4, %s14
        %p380 = scmp.lt.s32.totalorder %s379, 11
        %s381 = scalar_select %p380, %s379, 11
        %s382 = smul.addr %s381, 8
        %s383 = scalar_lea.vmem %s3, %s382
        %s384 = smul.u32 4, %s14
        %s385 = smul.u32 4, %s14
        %p386 = scmp.lt.s32.totalorder %s385, 11
        %s387 = scalar_select %p386, %s385, 11
        %s388 = smul.addr %s387, 8
        %s389 = scalar_lea.vmem %s3, %s388
        %s390 = smul.u32 4, %s14
        %v391 = vld [vmem:[%s0] sm:$0xff]
        %v392 = vld [vmem:[%s0 + $0x8] sm:$0xff]
        %v393 = vld [vmem:[%s363] sm:$0xff]
        %v394 = vld [vmem:[%s363 + $0x8] sm:$0xff]
        %v395 = vld [vmem:[%s363 + $0x10] sm:$0xff]
        %v396 = vld [vmem:[%s363 + $0x18] sm:$0xff]
        %v397 = vld [vmem:[%s363 + $0x20] sm:$0xff]
        %v398 = vld [vmem:[%s363 + $0x28] sm:$0xff]
        %v399 = vld [vmem:[%s363 + $0x30] sm:$0xff]
        %v400 = vld [vmem:[%s363 + $0x38] sm:$0xff]
        %v401 = vld [vmem:[%s363 + $0x40] sm:$0xff]
        %v402 = vld [vmem:[%s363 + $0x48] sm:$0xff]
        %v403 = vld [vmem:[%s363 + $0x50] sm:$0xff]
        %v404 = vld [vmem:[%s363 + $0x58] sm:$0xff]
        %v405 = vld [vmem:[%s363 + $0x60] sm:$0xff]
        %v406 = vld [vmem:[%s363 + $0x68] sm:$0xff]
        %v407 = vld [vmem:[%s363 + $0x70] sm:$0xff]
        %v408 = vld [vmem:[%s363 + $0x78] sm:$0xff]
        %v409 = vld [vmem:[%s363 + $0x80] sm:$0xff]
        %v410 = vld [vmem:[%s363 + $0x88] sm:$0xff]
        %v411 = vld [vmem:[%s363 + $0x90] sm:$0xff]
        %v412 = vld [vmem:[%s363 + $0x98] sm:$0xff]
        %v413 = vld [vmem:[%s363 + $0xa0] sm:$0xff]
        %v414 = vld [vmem:[%s363 + $0xa8] sm:$0xff]
        %v415 = vld [vmem:[%s363 + $0xb0] sm:$0xff]
        %v416 = vld [vmem:[%s363 + $0xb8] sm:$0xff]
        %v417 = vld [vmem:[%s363 + $0xc0] sm:$0xff]
        %v418 = vld [vmem:[%s363 + $0xc8] sm:$0xff]
        %v419 = vld [vmem:[%s363 + $0xd0] sm:$0xff]
        %v420 = vld [vmem:[%s363 + $0xd8] sm:$0xff]
        %v421 = vld [vmem:[%s363 + $0xe0] sm:$0xff]
        %v422 = vld [vmem:[%s363 + $0xe8] sm:$0xff]
        %v423 = vld [vmem:[%s363 + $0xf0] sm:$0xff]
        %v424 = vld [vmem:[%s363 + $0xf8] sm:$0xff]
        %v425 = vld [vmem:[%s363 + $0x100] sm:$0xff]
        %v426 = vld [vmem:[%s363 + $0x108] sm:$0xff]
        %v427 = vld [vmem:[%s363 + $0x110] sm:$0xff]
        %v428 = vld [vmem:[%s363 + $0x118] sm:$0xff]
        %v429 = vld [vmem:[%s363 + $0x120] sm:$0xff]
        %v430 = vld [vmem:[%s363 + $0x128] sm:$0xff]
        %v431 = vld [vmem:[%s363 + $0x130] sm:$0xff]
        %v432 = vld [vmem:[%s363 + $0x138] sm:$0xff]
        %v433 = vld [vmem:[%s363 + $0x140] sm:$0xff]
        %v434 = vld [vmem:[%s363 + $0x148] sm:$0xff]
        %v435 = vld [vmem:[%s363 + $0x150] sm:$0xff]
        %v436 = vld [vmem:[%s363 + $0x158] sm:$0xff]
        %v437 = vld [vmem:[%s363 + $0x160] sm:$0xff]
        %v438 = vld [vmem:[%s363 + $0x168] sm:$0xff]
        %v439 = vld [vmem:[%s363 + $0x170] sm:$0xff]
        %v440 = vld [vmem:[%s363 + $0x178] sm:$0xff]
        %v441 = vld [vmem:[%s363 + $0x180] sm:$0xff]
        %v442 = vld [vmem:[%s363 + $0x188] sm:$0xff]
        %v443 = vld [vmem:[%s363 + $0x190] sm:$0xff]
        %v444 = vld [vmem:[%s363 + $0x198] sm:$0xff]
        %v445 = vld [vmem:[%s363 + $0x1a0] sm:$0xff]
        %v446 = vld [vmem:[%s363 + $0x1a8] sm:$0xff]
        %v447 = vld [vmem:[%s363 + $0x1b0] sm:$0xff]
        %v448 = vld [vmem:[%s363 + $0x1b8] sm:$0xff]
        %v449 = vld [vmem:[%s363 + $0x1c0] sm:$0xff]
        %v450 = vld [vmem:[%s363 + $0x1c8] sm:$0xff]
        %v451 = vld [vmem:[%s363 + $0x1d0] sm:$0xff]
        %v452 = vld [vmem:[%s363 + $0x1d8] sm:$0xff]
        %v453 = vld [vmem:[%s363 + $0x1e0] sm:$0xff]
        %v454 = vld [vmem:[%s363 + $0x1e8] sm:$0xff]
        %v455 = vld [vmem:[%s363 + $0x1f0] sm:$0xff]
        %v456 = vld [vmem:[%s363 + $0x1f8] sm:$0xff]
        %v457 = vld [vmem:[%s363 + $0x200] sm:$0xff]
        %v458 = vld [vmem:[%s363 + $0x208] sm:$0xff]
        %v459 = vld [vmem:[%s363 + $0x210] sm:$0xff]
        %v460 = vld [vmem:[%s363 + $0x218] sm:$0xff]
        %v461 = vld [vmem:[%s363 + $0x220] sm:$0xff]
        %v462 = vld [vmem:[%s363 + $0x228] sm:$0xff]
        %v463 = vld [vmem:[%s363 + $0x230] sm:$0xff]
        %v464 = vld [vmem:[%s363 + $0x238] sm:$0xff]
        %v465 = vld [vmem:[%s363 + $0x240] sm:$0xff]
        %v466 = vld [vmem:[%s363 + $0x248] sm:$0xff]
        %v467 = vld [vmem:[%s363 + $0x250] sm:$0xff]
        %v468 = vld [vmem:[%s363 + $0x258] sm:$0xff]
        %v469 = vld [vmem:[%s363 + $0x260] sm:$0xff]
        %v470 = vld [vmem:[%s363 + $0x268] sm:$0xff]
        %v471 = vld [vmem:[%s363 + $0x270] sm:$0xff]
        %v472 = vld [vmem:[%s363 + $0x278] sm:$0xff]
        %v473 = vld [vmem:[%s363 + $0x280] sm:$0xff]
        %v474 = vld [vmem:[%s363 + $0x288] sm:$0xff]
        %v475 = vld [vmem:[%s363 + $0x290] sm:$0xff]
        %v476 = vld [vmem:[%s363 + $0x298] sm:$0xff]
        %v477 = vld [vmem:[%s363 + $0x2a0] sm:$0xff]
        %v478 = vld [vmem:[%s363 + $0x2a8] sm:$0xff]
        %v479 = vld [vmem:[%s363 + $0x2b0] sm:$0xff]
        %v480 = vld [vmem:[%s363 + $0x2b8] sm:$0xff]
        %v481 = vld [vmem:[%s363 + $0x2c0] sm:$0xff]
        %v482 = vld [vmem:[%s363 + $0x2c8] sm:$0xff]
        %v483 = vld [vmem:[%s363 + $0x2d0] sm:$0xff]
        %v484 = vld [vmem:[%s363 + $0x2d8] sm:$0xff]
        %v485 = vld [vmem:[%s363 + $0x2e0] sm:$0xff]
        %v486 = vld [vmem:[%s363 + $0x2e8] sm:$0xff]
        %v487 = vld [vmem:[%s363 + $0x2f0] sm:$0xff]
        %v488 = vld [vmem:[%s363 + $0x2f8] sm:$0xff]
        %v489 = vld [vmem:[%s363 + $0x300] sm:$0xff]
        %v490 = vld [vmem:[%s363 + $0x308] sm:$0xff]
        %v491 = vld [vmem:[%s363 + $0x310] sm:$0xff]
        %v492 = vld [vmem:[%s363 + $0x318] sm:$0xff]
        %v493 = vld [vmem:[%s2] sm:$0xff]
        %495 = vset.pattern.permute.xlu0 0
        %496 = vperm.xlu0 %495, %v493
        %v497 = vpop.permute.xlu0 %496
        %vm499 = vcmask 588800
        %v501 = vsel %vm499, %v392, 0
        %503 = vmatprep.subr.mxu0 %v394
        %504 = vmatpush1.msra.mxu0 %v393
        %505 = vmatprep.subr.mxu0 %v398
        %506 = vmatpush1.msra.mxu0 %v397
        %507 = vmatprep.subr.mxu0 %v402
        %508 = vmatpush1.msra.mxu0 %v401
        %509 = vmatprep.subr.mxu0 %v406
        %510 = vmatpush1.msra.mxu0 %v405
        %511 = vmatprep.subr.mxu0 %v410
        %512 = vmatpush1.msra.mxu0 %v409
        %513 = vmatprep.subr.mxu0 %v414
        %514 = vmatpush1.msra.mxu0 %v413
        %515 = vmatprep.subr.mxu0 %v418
        %516 = vmatpush1.msra.mxu0 %v417
        %517 = vmatprep.subr.mxu0 %v422
        %518 = vmatpush1.msra.mxu0 %v421
        %519 = vmatprep.subr.mxu0 %v426
        %520 = vmatpush1.msra.mxu0 %v425
        %521 = vmatprep.subr.mxu0 %v430
        %522 = vmatpush1.msra.mxu0 %v429
        %523 = vmatprep.subr.mxu0 %v434
        %524 = vmatpush1.msra.mxu0 %v433
        %525 = vmatprep.subr.mxu0 %v438
        %526 = vmatpush1.msra.mxu0 %v437
        %527 = vmatprep.subr.mxu0 %v442
        %528 = vmatpush1.msra.mxu0 %v441
        %529 = vmatprep.subr.mxu0 %v446
        %530 = vmatpush1.msra.mxu0 %v445
        %531 = vmatprep.subr.mxu0 %v450
        %532 = vmatpush1.msra.mxu0 %v449
        %533 = vmatprep.subr.mxu0 %v454
        %534 = vmatpush1.msra.mxu0 %v453
        %535 = vmatprep.subr.mxu0 %v458
        %536 = vmatpush1.msra.mxu0 %v457
        %537 = vmatprep.subr.mxu0 %v462
        %538 = vmatpush1.msra.mxu0 %v461
        %539 = vmatprep.subr.mxu0 %v466
        %540 = vmatpush1.msra.mxu0 %v465
        %541 = vmatprep.subr.mxu0 %v470
        %542 = vmatpush1.msra.mxu0 %v469
        %543 = vmatprep.subr.mxu0 %v474
        %544 = vmatpush1.msra.mxu0 %v473
        %545 = vmatprep.subr.mxu0 %v478
        %546 = vmatpush1.msra.mxu0 %v477
        %547 = vmatprep.subr.mxu0 %v482
        %548 = vmatpush1.msra.mxu0 %v481
        %549 = vmatprep.subr.mxu0 %v486
        %550 = vmatpush1.msra.mxu0 %v485
        %551 = vmatprep.subr.mxu0 %v490
        %552 = vmatpush1.msra.mxu0 %v489
        %553 = vmatprep.subr.mxu0 0.0
        %554 = vmatpush1.msra.mxu0 0.0
        %555 = vmatprep.subr.mxu0 0.0
        %556 = vmatpush1.msra.mxu0 0.0
        %557 = vmatprep.subr.mxu0 0.0
        %558 = vmatpush1.msra.mxu0 0.0
        %559 = vmatprep.subr.mxu0 0.0
        %560 = vmatpush1.msra.mxu0 0.0
        %561 = vmatprep.subr.mxu0 0.0
        %562 = vmatpush1.msra.mxu0 0.0
        %563 = vmatprep.subr.mxu0 0.0
        %564 = vmatpush1.msra.mxu0 0.0
        %565 = vmatprep.subr.mxu0 0.0
        %566 = vmatpush1.msra.mxu0 0.0
        %567 = vmatprep.mubr.f32.mxu0 %v501
        %568 = vmatmul.mubr.f32.gmra.mrb[0].mxu0 %v391
        %v569 = vpop.f32.mrb[0].mxu0
        %v570 = vadd.f32 %v497, %v569
        %v571 = vpop.f32.mrb[0].mxu0
        %v572 = vadd.f32 %v497, %v571
        %573 = vdwg.mxu0
        %574 = vmatprep.subr.mxu0 %v396
        %575 = vmatpush1.msra.mxu0 %v395
        %576 = vmatprep.subr.mxu0 %v400
        %577 = vmatpush1.msra.mxu0 %v399
        %578 = vmatprep.subr.mxu0 %v404
        %579 = vmatpush1.msra.mxu0 %v403
        %580 = vmatprep.subr.mxu0 %v408
        %581 = vmatpush1.msra.mxu0 %v407
        %582 = vmatprep.subr.mxu0 %v412
        %583 = vmatpush1.msra.mxu0 %v411
        %584 = vmatprep.subr.mxu0 %v416
        %585 = vmatpush1.msra.mxu0 %v415
        %586 = vmatprep.subr.mxu0 %v420
        %587 = vmatpush1.msra.mxu0 %v419
        %588 = vmatprep.subr.mxu0 %v424
        %589 = vmatpush1.msra.mxu0 %v423
        %590 = vmatprep.subr.mxu0 %v428
        %591 = vmatpush1.msra.mxu0 %v427
        %592 = vmatprep.subr.mxu0 %v432
        %593 = vmatpush1.msra.mxu0 %v431
        %594 = vmatprep.subr.mxu0 %v436
        %595 = vmatpush1.msra.mxu0 %v435
        %596 = vmatprep.subr.mxu0 %v440
        %597 = vmatpush1.msra.mxu0 %v439
        %598 = vmatprep.subr.mxu0 %v444
        %599 = vmatpush1.msra.mxu0 %v443
        %600 = vmatprep.subr.mxu0 %v448
        %601 = vmatpush1.msra.mxu0 %v447
        %602 = vmatprep.subr.mxu0 %v452
        %603 = vmatpush1.msra.mxu0 %v451
        %604 = vmatprep.subr.mxu0 %v456
        %605 = vmatpush1.msra.mxu0 %v455
        %606 = vmatprep.subr.mxu0 %v460
        %607 = vmatpush1.msra.mxu0 %v459
        %608 = vmatprep.subr.mxu0 %v464
        %609 = vmatpush1.msra.mxu0 %v463
        %610 = vmatprep.subr.mxu0 %v468
        %611 = vmatpush1.msra.mxu0 %v467
        %612 = vmatprep.subr.mxu0 %v472
        %613 = vmatpush1.msra.mxu0 %v471
        %614 = vmatprep.subr.mxu0 %v476
        %615 = vmatpush1.msra.mxu0 %v475
        %616 = vmatprep.subr.mxu0 %v480
        %617 = vmatpush1.msra.mxu0 %v479
        %618 = vmatprep.subr.mxu0 %v484
        %619 = vmatpush1.msra.mxu0 %v483
        %620 = vmatprep.subr.mxu0 %v488
        %621 = vmatpush1.msra.mxu0 %v487
        %622 = vmatprep.subr.mxu0 %v492
        %623 = vmatpush1.msra.mxu0 %v491
        %624 = vmatprep.subr.mxu0 0.0
        %625 = vmatpush1.msra.mxu0 0.0
        %626 = vmatprep.subr.mxu0 0.0
        %627 = vmatpush1.msra.mxu0 0.0
        %628 = vmatprep.subr.mxu0 0.0
        %629 = vmatpush1.msra.mxu0 0.0
        %630 = vmatprep.subr.mxu0 0.0
        %631 = vmatpush1.msra.mxu0 0.0
        %632 = vmatprep.subr.mxu0 0.0
        %633 = vmatpush1.msra.mxu0 0.0
        %634 = vmatprep.subr.mxu0 0.0
        %635 = vmatpush1.msra.mxu0 0.0
        %636 = vmatprep.subr.mxu0 0.0
        %637 = vmatpush1.msra.mxu0 0.0
        %638 = vmatprep.mubr.f32.mxu0 %v501
        %639 = vmatmul.mubr.f32.gmra.mrb[0].mxu0 %v391
        %v640 = vpop.f32.mrb[0].mxu0
        %v641 = vadd.f32 %v497, %v640
        %v642 = vpop.f32.mrb[0].mxu0
        %v643 = vadd.f32 %v497, %v642
        %644 = vdwg.mxu0
        %645 = vst [vmem:[%s389] sm:$0xff] %v570
        %646 = vst [vmem:[%s389 + $0x8] sm:$0xff] %v572
        %647 = vst [vmem:[%s389 + $0x10] sm:$0xff] %v641
        %648 = vst [vmem:[%s389 + $0x18] sm:$0xff] %v643
        %s649 = smul.u32 4, %s14
        %p650 = scmp.lt.s32.totalorder %s649, 11
        %s651 = scalar_select %p650, %s649, 11
        %s652 = smul.addr %s651, 8
        %s653 = scalar_lea.vmem %s3, %s652
        // Predicated region
        $region56: #{block_forward.15} parent=50 // pred_check
          %p654 = pneg %p100
        $region57: #{block_forward.15} parent=50 // pred_check_branch
          %656 = sbr.rel (%p654) target = $region59
        $region58: #{block_forward.15} parent=50 // pred_region
          %s657 = smul.u32 4, %s14
        $region59: #{block_forward.15} parent=50 // pred_fallthru
          _
      $region51: #{block_forward.15} parent=5 // pred_fallthru
        _
      %p658 = scmp.le.s32.totalorder 2, %s9
      // Predicated region
      $region60: #{block_forward.15} parent=5 // pred_check
        %p659 = pneg %p658
      $region61: #{block_forward.15} parent=5 // pred_check_branch
        %661 = sbr.rel (%p659) target = $region63
      $region62: #{block_forward.15} parent=5 // pred_region
        %s662 = ssub.s32 %s9, 2
        // Predicated region
        $region64: #{block_forward.15} parent=62 // pred_check
          %p663 = pneg %p106
        $region65: #{block_forward.15} parent=62 // pred_check_branch
          %665 = sbr.rel (%p663) target = $region67
        $region66: #{block_forward.15} parent=62 // pred_region
          %s666 = smul.u32 4, %s15
          %p667 = scmp.lt.s32.totalorder %s666, 11
          %s668 = scalar_select %p667, %s666, 11
          %s669 = smul.addr %s668, 8
          %s670 = scalar_lea.vmem %s3, %s669
        $region67: #{block_forward.15} parent=62 // pred_fallthru
          _
      $region63: #{block_forward.15} parent=5 // pred_fallthru
        _
    $region6: #{block_forward.15} parent=1 // loop_footer
      %s13 = sadd.s32 1, %s9
    $region7: #{block_forward.15} parent=1 // loop_footer_branch
      %8 = sbr.rel target = $region3
    $region8: #{block_forward.15} parent=1 // loop_exit
      _

</llo_original>
